<compile_context>
chip_gen: v6e
topology: v6e:2x2x1
jax: 0.10.0
libtpu: 0.0.40
codegen_flags: <defaults>
</compile_context>

<pallas_src>
import functools

import numpy as np
import jax
import jax.numpy as jnp
from jax import lax
from jax.experimental import pallas as pl
from jax.experimental.pallas import tpu as pltpu


# ----------------------- fused conv + bias + relu + 2x2 maxpool ----------------------- #

def _conv_pool_kernel(xa_ref, xb_ref, wq_ref, b4_ref, o_ref, *, tph, pw, cout):
    """One grid step = one batch element x `tph` pooled output rows.

    xa_ref: (1, tph, PW+1, 16*Cin)  space-to-depth rows [i*tph, i*tph + tph)
    xb_ref: (1, 1,   PW+1, 16*Cin)  space-to-depth row   i*tph + tph   (overlap row)
    wq_ref: (2, 2, 16*Cin, 4*Cout)  rearranged conv weights (row/col tap A,B; 4 pool groups)
    b4_ref: (1, 4*Cout)             bias tiled over the 4 pool groups
    o_ref : (1, tph, PW, Cout)
    """
    w00 = wq_ref[0, 0]
    w01 = wq_ref[0, 1]
    w10 = wq_ref[1, 0]
    w11 = wq_ref[1, 1]
    bias = b4_ref[...]
    for j in range(tph):                                            # static unroll
        ra = xa_ref[0, j]                                           # (PW+1, 16*Cin)
        rb = xa_ref[0, j + 1] if j + 1 < tph else xb_ref[0, 0]      # (PW+1, 16*Cin)
        acc = jnp.dot(ra[:pw, :], w00, preferred_element_type=jnp.float32)
        acc = acc + jnp.dot(ra[1:pw + 1, :], w01, preferred_element_type=jnp.float32)
        acc = acc + jnp.dot(rb[:pw, :], w10, preferred_element_type=jnp.float32)
        acc = acc + jnp.dot(rb[1:pw + 1, :], w11, preferred_element_type=jnp.float32)
        acc = jnp.maximum(acc + bias, 0.0)                          # (PW, 4*Cout), f32 relu
        # 2x2 max-pool == elementwise max over the 4 (dh, dw) groups
        y = jnp.maximum(jnp.maximum(acc[:, 0 * cout:1 * cout], acc[:, 1 * cout:2 * cout]),
                        jnp.maximum(acc[:, 2 * cout:3 * cout], acc[:, 3 * cout:4 * cout]))
        o_ref[0, j] = y


def _rearrange_conv_weight(w, cin, cout, kh, kw):
    """w (KH,KW,Cin,Cout) HWIO -> Wq (2,2,16*Cin,4*Cout).

    Over a 4x4 space-to-depth input, the stride-2 conv output feeding pool tap (dh,dw)
    (group q = 2*dh+dw) at pooled pixel (ph,pw) reads X4[ph+A, pw+B] channels (r*4+s)*Cin+ci
    where 2*dh+kh = 4*A+r and 2*dw+kw = 4*B+s.  Unused (A,B,r,s,q) entries stay zero
    (structured zero padding of K, MXU-friendly)."""
    wq = jnp.zeros((2, 2, 16 * cin, 4 * cout), w.dtype)
    for dh in range(2):
        for dw in range(2):
            q = 2 * dh + dw
            for ih in range(kh):
                a, r = divmod(2 * dh + ih, 4)
                for iw in range(kw):
                    bcol, s = divmod(2 * dw + iw, 4)
                    c0 = (r * 4 + s) * cin
                    wq = wq.at[a, bcol, c0:c0 + cin,
                               q * cout:(q + 1) * cout].set(w[ih, iw])
    return wq


def conv_relu_pool(x, w, b, *, kh, kw, row_tile=8):
    """Fused Conv2d(stride=2, VALID) + bias + relu + MaxPool2d(2,2) (floor), NHWC in/out."""
    B, H, W, Cin = x.shape
    Cout = w.shape[-1]
    OH = (H - kh) // 2 + 1
    OW = (W - kw) // 2 + 1
    PH, PW = OH // 2, OW // 2
    tph = min(PH, row_tile)
    nblk = pl.cdiv(PH, tph)
    PHp = nblk * tph
    Hp, Wp = 4 * (PHp + 1), 4 * (PW + 1)
    K16 = 16 * Cin

    # One cheap XLA pass: crop/zero-pad so the 4x4 space-to-depth covers every needed tap
    # (padded rows/cols are only ever multiplied by zero weight entries).
    x = x[:, :min(H, Hp), :min(W, Wp), :]
    x = jnp.pad(x, ((0, 0), (0, Hp - x.shape[1]), (0, Wp - x.shape[2]), (0, 0)))
    x4 = x.reshape(B, PHp + 1, 4, PW + 1, 4, Cin)
    x4 = x4.transpose(0, 1, 3, 2, 4, 5).reshape(B, PHp + 1, PW + 1, K16)

    wq = _rearrange_conv_weight(w, Cin, Cout, kh, kw)
    b4 = jnp.tile(b.reshape(1, Cout), (1, 4))

    kern = functools.partial(_conv_pool_kernel, tph=tph, pw=PW, cout=Cout)
    out = pl.pallas_call(
        kern,
        grid=(B, nblk),
        out_shape=jax.ShapeDtypeStruct((B, PHp, PW, Cout), jnp.float32),
        in_specs=[
            pl.BlockSpec((1, tph, PW + 1, K16), lambda bb, i: (bb, i, 0, 0)),
            pl.BlockSpec((1, 1, PW + 1, K16),
                         lambda bb, i: (bb, (i + 1) * tph, 0, 0)),       # overlap row
            pl.BlockSpec((2, 2, K16, 4 * Cout), lambda bb, i: (0, 0, 0, 0)),  # resident
            pl.BlockSpec((1, 4 * Cout), lambda bb, i: (0, 0)),                # resident
        ],
        out_specs=pl.BlockSpec((1, tph, PW, Cout), lambda bb, i: (bb, i, 0, 0)),
        compiler_params=pltpu.CompilerParams(
            dimension_semantics=("parallel", "parallel"),     # v7x dual-TC sharding
            vmem_limit_bytes=48 * 1024 * 1024),
    )(x4, x4, wq, b4)
    return out[:, :PH]


# ---------------- fused MLP tail: fc1 -> relu -> fc2 -> relu -> out -> log_softmax ---------------- #

def _mlp_kernel(x_ref, w1_ref, b1_ref, w2_ref, b2_ref, wo_ref, bo_ref, o_ref, acc_ref):
    k = pl.program_id(0)

    @pl.when(k == 0)
    def _init():
        acc_ref[...] = jnp.zeros_like(acc_ref)

    # fc1 partial product for this K tile (bf16 operands, f32 accumulate)
    xt = x_ref[...].astype(jnp.bfloat16)
    acc_ref[...] += jnp.dot(xt, w1_ref[...], preferred_element_type=jnp.float32)

    @pl.when(k == pl.num_programs(0) - 1)
    def _epilogue():
        h1 = jnp.maximum(acc_ref[...] + b1_ref[...], 0.0)                          # (1, 256) f32
        h2 = jnp.dot(h1, w2_ref[...], preferred_element_type=jnp.float32) + b2_ref[...]
        h2 = jnp.maximum(h2, 0.0)                                                  # (1, 128)
        logits = jnp.dot(h2, wo_ref[...], preferred_element_type=jnp.float32) + bo_ref[...]
        m = jnp.max(logits, axis=-1, keepdims=True)
        e = jnp.exp(logits - m)
        o_ref[...] = logits - m - jnp.log(jnp.sum(e, axis=-1, keepdims=True))      # log_softmax


def mlp_head(xflat, w1, b1, w2, b2, wo, bo, *, tk_max=8192):
    """Fused fc1(K-tiled, bf16 weights) -> relu -> fc2 -> relu -> out -> log_softmax."""
    K = xflat.shape[1]
    N1, N2, NO = w1.shape[1], w2.shape[1], wo.shape[1]
    tk = min(tk_max, max(128, int(pl.next_power_of_2(K))))   # <=8192: fits v7x 64 MiB VMEM budget
    ksteps = pl.cdiv(K, tk)
    Kp = ksteps * tk
    x = jnp.pad(xflat, ((0, 0), (0, Kp - K)))
    w1p = jnp.pad(w1, ((0, Kp - K), (0, 0)))

    if ksteps >= 3:   # deeper weight pipelining only pays off with several K steps
        w1_spec = pl.BlockSpec((tk, N1), lambda k: (k, 0), pipeline_mode=pl.Buffered(3))
    else:
        w1_spec = pl.BlockSpec((tk, N1), lambda k: (k, 0))

    return pl.pallas_call(
        _mlp_kernel,
        grid=(ksteps,),
        out_shape=jax.ShapeDtypeStruct((1, NO), jnp.float32),
        in_specs=[
            pl.BlockSpec((1, tk), lambda k: (0, k)),      # activation K tile
            w1_spec,                                      # fc1 weight K tile (bf16)
            pl.BlockSpec((1, N1), lambda k: (0, 0)),      # resident small operands:
            pl.BlockSpec((N1, N2), lambda k: (0, 0)),
            pl.BlockSpec((1, N2), lambda k: (0, 0)),
            pl.BlockSpec((N2, NO), lambda k: (0, 0)),
            pl.BlockSpec((1, NO), lambda k: (0, 0)),
        ],
        out_specs=pl.BlockSpec((1, NO), lambda k: (0, 0)),
        scratch_shapes=[pltpu.VMEM((1, N1), jnp.float32)],
        compiler_params=pltpu.CompilerParams(
            dimension_semantics=("arbitrary",),           # K reduction axis
            vmem_limit_bytes=48 * 1024 * 1024),
    )(x, w1p, b1.reshape(1, N1), w2, b2.reshape(1, N2), wo, bo.reshape(1, NO))


# ----------------------------------- ICModel forward ----------------------------------- #

def ic_model_forward(params, x_nchw):
    x = jnp.transpose(x_nchw, (0, 2, 3, 1)).astype(jnp.float32)       # NCHW -> NHWC
    x = conv_relu_pool(x, params['w1'], params['b1'], kh=6, kw=6)     # conv1+relu+pool (fused)
    x = conv_relu_pool(x, params['w2'], params['b2'], kh=4, kw=4)     # conv2+relu+pool (fused)
    x = jnp.transpose(x, (0, 3, 1, 2)).reshape(1, -1)                 # NCHW flatten == torch .view
    return mlp_head(x, params['wf1'], params['bf1'], params['wf2'],
                    params['bf2'], params['wo'], params['bo'])


# --------------------------------- pure-JAX reference ---------------------------------- #

def reference_forward(params, x_nchw):
    x = jnp.transpose(x_nchw, (0, 2, 3, 1)).astype(jnp.float32)
    y = lax.conv_general_dilated(x, params['w1'], (2, 2), 'VALID',
                                 dimension_numbers=('NHWC', 'HWIO', 'NHWC'))
    y = jax.nn.relu(y + params['b1'])
    y = lax.reduce_window(y, -jnp.inf, lax.max, (1, 2, 2, 1), (1, 2, 2, 1), 'VALID')
    y = lax.conv_general_dilated(y, params['w2'], (2, 2), 'VALID',
                                 dimension_numbers=('NHWC', 'HWIO', 'NHWC'))
    y = jax.nn.relu(y + params['b2'])
    y = lax.reduce_window(y, -jnp.inf, lax.max, (1, 2, 2, 1), (1, 2, 2, 1), 'VALID')
    y = jnp.transpose(y, (0, 3, 1, 2)).reshape(1, -1)
    y = jax.nn.relu(y @ params['wf1'].astype(jnp.float32) + params['bf1'])
    y = jax.nn.relu(y @ params['wf2'] + params['bf2'])
    y = y @ params['wo'] + params['bo']
    return jax.nn.log_softmax(y, axis=1)


# ------------------------------------- params init ------------------------------------- #

def init_params(key, flat_features):
    def u(k, shape, fan_in):
        bound = 1.0 / np.sqrt(fan_in)
        return jax.random.uniform(k, shape, jnp.float32, -bound, bound)
    ks = jax.random.split(key, 10)
    return {
        # conv weights stored HWIO (synthetic init, layout-consistent with the reference)
        'w1': u(ks[0], (6, 6, 1, 8), 6 * 6 * 1),   'b1': u(ks[1], (8,), 6 * 6 * 1),
        'w2': u(ks[2], (4, 4, 8, 24), 4 * 4 * 8),  'b2': u(ks[3], (24,), 4 * 4 * 8),
        # fc weights stored (in, out); fc1 weight kept in bf16 (bandwidth-bound GEMV)
        'wf1': u(ks[4], (flat_features, 256), flat_features).astype(jnp.bfloat16),
        'bf1': u(ks[5], (256,), flat_features),
        'wf2': u(ks[6], (256, 128), 256),          'bf2': u(ks[7], (128,), 256),
        'wo':  u(ks[8], (128, 3), 128),            'bo':  u(ks[9], (3,), 128),
    }


if __name__ == "__main__":
    B, H, W = 2, 64, 64   # small synthetic shapes (original model expects 1x1250x1206)

    # flattened feature size implied by the forward pass (whole batch flattened, as in the module)
    oh1, ow1 = (H - 6) // 2 + 1, (W - 6) // 2 + 1
    ph1, pw1 = oh1 // 2, ow1 // 2
    oh2, ow2 = (ph1 - 4) // 2 + 1, (pw1 - 4) // 2 + 1
    ph2, pw2 = oh2 // 2, ow2 // 2
    flat_features = B * 24 * ph2 * pw2

    key = jax.random.PRNGKey(0)
    kx, kp = jax.random.split(key)
    x = jax.random.normal(kx, (B, 1, H, W), jnp.float32)
    params = init_params(kp, flat_features)

    fwd = jax.jit(ic_model_forward)
    out = jax.block_until_ready(fwd(params, x))
    ref = jax.block_until_ready(reference_forward(params, x))

    assert out.shape == (1, 3) and out.dtype == jnp.float32
    np.testing.assert_allclose(np.asarray(out), np.asarray(ref), rtol=2e-3, atol=5e-3)
    print("KERNEL_OK")
</pallas_src>

<mosaic_0001>
module attributes {stable_mosaic.version = 11 : i64} {
  func.func @_conv_pool_kernel(%arg0: i32, %arg1: i32, %arg2: memref<1x8x16x16xf32, #tpu.memory_space<vmem>>, %arg3: memref<1x1x16x16xf32, #tpu.memory_space<vmem>>, %arg4: memref<2x2x16x32xf32, #tpu.memory_space<vmem>>, %arg5: memref<1x32xf32, #tpu.memory_space<vmem>>, %arg6: memref<1x8x15x8xf32, #tpu.memory_space<vmem>>) attributes {dimension_semantics = [#tpu.dimension_semantics<parallel>, #tpu.dimension_semantics<parallel>], iteration_bounds = array<i64: 2, 2>, scalar_prefetch = 0 : i64, scratch_operands = 0 : i64, tpu.core_type = #tpu.core_type<tc>, window_params = [{transform_indices = @transform_0, window_bounds = array<i64: 1, 8, 16, 16>}, {transform_indices = @transform_1, window_bounds = array<i64: 1, 1, 16, 16>}, {pipeline_mode = #tpu.pipeline_mode<synchronous>, transform_indices = @transform_2, window_bounds = array<i64: 2, 2, 16, 32>}, {pipeline_mode = #tpu.pipeline_mode<synchronous>, transform_indices = @transform_3, window_bounds = array<i64: 1, 32>}, {transform_indices = @transform_4, window_bounds = array<i64: 1, 8, 15, 8>}]} {
    %c0 = arith.constant 0 : index
    %c0_0 = arith.constant 0 : index
    %c0_1 = arith.constant 0 : index
    %c0_2 = arith.constant 0 : index
    %0 = vector.load %arg4[%c0, %c0_0, %c0_1, %c0_2] : memref<2x2x16x32xf32, #tpu.memory_space<vmem>>, vector<1x1x16x32xf32>
    %1 = vector.shape_cast %0 : vector<1x1x16x32xf32> to vector<16x32xf32>
    %c0_3 = arith.constant 0 : index
    %c1 = arith.constant 1 : index
    %c0_4 = arith.constant 0 : index
    %c0_5 = arith.constant 0 : index
    %2 = vector.load %arg4[%c0_3, %c1, %c0_4, %c0_5] : memref<2x2x16x32xf32, #tpu.memory_space<vmem>>, vector<1x1x16x32xf32>
    %3 = vector.shape_cast %2 : vector<1x1x16x32xf32> to vector<16x32xf32>
    %c1_6 = arith.constant 1 : index
    %c0_7 = arith.constant 0 : index
    %c0_8 = arith.constant 0 : index
    %c0_9 = arith.constant 0 : index
    %4 = vector.load %arg4[%c1_6, %c0_7, %c0_8, %c0_9] : memref<2x2x16x32xf32, #tpu.memory_space<vmem>>, vector<1x1x16x32xf32>
    %5 = vector.shape_cast %4 : vector<1x1x16x32xf32> to vector<16x32xf32>
    %c1_10 = arith.constant 1 : index
    %c1_11 = arith.constant 1 : index
    %c0_12 = arith.constant 0 : index
    %c0_13 = arith.constant 0 : index
    %6 = vector.load %arg4[%c1_10, %c1_11, %c0_12, %c0_13] : memref<2x2x16x32xf32, #tpu.memory_space<vmem>>, vector<1x1x16x32xf32>
    %7 = vector.shape_cast %6 : vector<1x1x16x32xf32> to vector<16x32xf32>
    %c0_14 = arith.constant 0 : index
    %c0_15 = arith.constant 0 : index
    %8 = vector.load %arg5[%c0_14, %c0_15] : memref<1x32xf32, #tpu.memory_space<vmem>>, vector<1x32xf32>
    %c0_16 = arith.constant 0 : index
    %c0_17 = arith.constant 0 : index
    %c0_18 = arith.constant 0 : index
    %c0_19 = arith.constant 0 : index
    %9 = vector.load %arg2[%c0_16, %c0_17, %c0_18, %c0_19] : memref<1x8x16x16xf32, #tpu.memory_space<vmem>>, vector<1x1x16x16xf32>
    %10 = vector.shape_cast %9 : vector<1x1x16x16xf32> to vector<16x16xf32>
    %c0_20 = arith.constant 0 : index
    %c1_21 = arith.constant 1 : index
    %c0_22 = arith.constant 0 : index
    %c0_23 = arith.constant 0 : index
    %11 = vector.load %arg2[%c0_20, %c1_21, %c0_22, %c0_23] : memref<1x8x16x16xf32, #tpu.memory_space<vmem>>, vector<1x1x16x16xf32>
    %12 = vector.shape_cast %11 : vector<1x1x16x16xf32> to vector<16x16xf32>
    %13 = vector.extract_strided_slice %10 {offsets = [0, 0], sizes = [15, 16], strides = [1, 1]} : vector<16x16xf32> to vector<15x16xf32>
    %cst = arith.constant dense<0.000000e+00> : vector<15x32xf32>
    %14 = tpu.matmul %13, %1, %cst {dimension_numbers = #tpu.dot_dimension_numbers<[1], [0], [0], [1], [0, 0, 1, 1], [], []>} : vector<15x16xf32>, vector<16x32xf32>, vector<15x32xf32> -> vector<15x32xf32>
    %15 = vector.extract_strided_slice %10 {offsets = [1, 0], sizes = [15, 16], strides = [1, 1]} : vector<16x16xf32> to vector<15x16xf32>
    %cst_24 = arith.constant dense<0.000000e+00> : vector<15x32xf32>
    %16 = tpu.matmul %15, %3, %cst_24 {dimension_numbers = #tpu.dot_dimension_numbers<[1], [0], [0], [1], [0, 0, 1, 1], [], []>} : vector<15x16xf32>, vector<16x32xf32>, vector<15x32xf32> -> vector<15x32xf32>
    %17 = arith.addf %14, %16 : vector<15x32xf32>
    %18 = vector.extract_strided_slice %12 {offsets = [0, 0], sizes = [15, 16], strides = [1, 1]} : vector<16x16xf32> to vector<15x16xf32>
    %cst_25 = arith.constant dense<0.000000e+00> : vector<15x32xf32>
    %19 = tpu.matmul %18, %5, %cst_25 {dimension_numbers = #tpu.dot_dimension_numbers<[1], [0], [0], [1], [0, 0, 1, 1], [], []>} : vector<15x16xf32>, vector<16x32xf32>, vector<15x32xf32> -> vector<15x32xf32>
    %20 = arith.addf %17, %19 : vector<15x32xf32>
    %21 = vector.extract_strided_slice %12 {offsets = [1, 0], sizes = [15, 16], strides = [1, 1]} : vector<16x16xf32> to vector<15x16xf32>
    %cst_26 = arith.constant dense<0.000000e+00> : vector<15x32xf32>
    %22 = tpu.matmul %21, %7, %cst_26 {dimension_numbers = #tpu.dot_dimension_numbers<[1], [0], [0], [1], [0, 0, 1, 1], [], []>} : vector<15x16xf32>, vector<16x32xf32>, vector<15x32xf32> -> vector<15x32xf32>
    %23 = arith.addf %20, %22 : vector<15x32xf32>
    %24 = vector.broadcast %8 : vector<1x32xf32> to vector<15x32xf32>
    %25 = arith.addf %23, %24 : vector<15x32xf32>
    %cst_27 = arith.constant 0.000000e+00 : f32
    %26 = vector.broadcast %cst_27 : f32 to vector<15x32xf32>
    %27 = arith.maximumf %25, %26 : vector<15x32xf32>
    %28 = vector.extract_strided_slice %27 {offsets = [0, 0], sizes = [15, 8], strides = [1, 1]} : vector<15x32xf32> to vector<15x8xf32>
    %29 = vector.extract_strided_slice %27 {offsets = [0, 8], sizes = [15, 8], strides = [1, 1]} : vector<15x32xf32> to vector<15x8xf32>
    %30 = arith.maximumf %28, %29 : vector<15x8xf32>
    %31 = vector.extract_strided_slice %27 {offsets = [0, 16], sizes = [15, 8], strides = [1, 1]} : vector<15x32xf32> to vector<15x8xf32>
    %32 = vector.extract_strided_slice %27 {offsets = [0, 24], sizes = [15, 8], strides = [1, 1]} : vector<15x32xf32> to vector<15x8xf32>
    %33 = arith.maximumf %31, %32 : vector<15x8xf32>
    %34 = arith.maximumf %30, %33 : vector<15x8xf32>
    %c0_28 = arith.constant 0 : index
    %c0_29 = arith.constant 0 : index
    %c0_30 = arith.constant 0 : index
    %c0_31 = arith.constant 0 : index
    %35 = vector.load %arg6[%c0_28, %c0_29, %c0_30, %c0_31] : memref<1x8x15x8xf32, #tpu.memory_space<vmem>>, vector<1x1x15x8xf32>
    %36 = vector.shape_cast %35 : vector<1x1x15x8xf32> to vector<15x8xf32>
    %37 = vector.shape_cast %34 : vector<15x8xf32> to vector<1x1x15x8xf32>
    tpu.vector_store %arg6[%c0_28, %c0_29, %c0_30, %c0_31], %37 {strides = array<i32>} : memref<1x8x15x8xf32, #tpu.memory_space<vmem>>, vector<1x1x15x8xf32>,
    %c0_32 = arith.constant 0 : index
    %c1_33 = arith.constant 1 : index
    %c0_34 = arith.constant 0 : index
    %c0_35 = arith.constant 0 : index
    %38 = vector.load %arg2[%c0_32, %c1_33, %c0_34, %c0_35] : memref<1x8x16x16xf32, #tpu.memory_space<vmem>>, vector<1x1x16x16xf32>
    %39 = vector.shape_cast %38 : vector<1x1x16x16xf32> to vector<16x16xf32>
    %c0_36 = arith.constant 0 : index
    %c2 = arith.constant 2 : index
    %c0_37 = arith.constant 0 : index
    %c0_38 = arith.constant 0 : index
    %40 = vector.load %arg2[%c0_36, %c2, %c0_37, %c0_38] : memref<1x8x16x16xf32, #tpu.memory_space<vmem>>, vector<1x1x16x16xf32>
    %41 = vector.shape_cast %40 : vector<1x1x16x16xf32> to vector<16x16xf32>
    %42 = vector.extract_strided_slice %39 {offsets = [0, 0], sizes = [15, 16], strides = [1, 1]} : vector<16x16xf32> to vector<15x16xf32>
    %cst_39 = arith.constant dense<0.000000e+00> : vector<15x32xf32>
    %43 = tpu.matmul %42, %1, %cst_39 {dimension_numbers = #tpu.dot_dimension_numbers<[1], [0], [0], [1], [0, 0, 1, 1], [], []>} : vector<15x16xf32>, vector<16x32xf32>, vector<15x32xf32> -> vector<15x32xf32>
    %44 = vector.extract_strided_slice %39 {offsets = [1, 0], sizes = [15, 16], strides = [1, 1]} : vector<16x16xf32> to vector<15x16xf32>
    %cst_40 = arith.constant dense<0.000000e+00> : vector<15x32xf32>
    %45 = tpu.matmul %44, %3, %cst_40 {dimension_numbers = #tpu.dot_dimension_numbers<[1], [0], [0], [1], [0, 0, 1, 1], [], []>} : vector<15x16xf32>, vector<16x32xf32>, vector<15x32xf32> -> vector<15x32xf32>
    %46 = arith.addf %43, %45 : vector<15x32xf32>
    %47 = vector.extract_strided_slice %41 {offsets = [0, 0], sizes = [15, 16], strides = [1, 1]} : vector<16x16xf32> to vector<15x16xf32>
    %cst_41 = arith.constant dense<0.000000e+00> : vector<15x32xf32>
    %48 = tpu.matmul %47, %5, %cst_41 {dimension_numbers = #tpu.dot_dimension_numbers<[1], [0], [0], [1], [0, 0, 1, 1], [], []>} : vector<15x16xf32>, vector<16x32xf32>, vector<15x32xf32> -> vector<15x32xf32>
    %49 = arith.addf %46, %48 : vector<15x32xf32>
    %50 = vector.extract_strided_slice %41 {offsets = [1, 0], sizes = [15, 16], strides = [1, 1]} : vector<16x16xf32> to vector<15x16xf32>
    %cst_42 = arith.constant dense<0.000000e+00> : vector<15x32xf32>
    %51 = tpu.matmul %50, %7, %cst_42 {dimension_numbers = #tpu.dot_dimension_numbers<[1], [0], [0], [1], [0, 0, 1, 1], [], []>} : vector<15x16xf32>, vector<16x32xf32>, vector<15x32xf32> -> vector<15x32xf32>
    %52 = arith.addf %49, %51 : vector<15x32xf32>
    %53 = vector.broadcast %8 : vector<1x32xf32> to vector<15x32xf32>
    %54 = arith.addf %52, %53 : vector<15x32xf32>
    %cst_43 = arith.constant 0.000000e+00 : f32
    %55 = vector.broadcast %cst_43 : f32 to vector<15x32xf32>
    %56 = arith.maximumf %54, %55 : vector<15x32xf32>
    %57 = vector.extract_strided_slice %56 {offsets = [0, 0], sizes = [15, 8], strides = [1, 1]} : vector<15x32xf32> to vector<15x8xf32>
    %58 = vector.extract_strided_slice %56 {offsets = [0, 8], sizes = [15, 8], strides = [1, 1]} : vector<15x32xf32> to vector<15x8xf32>
    %59 = arith.maximumf %57, %58 : vector<15x8xf32>
    %60 = vector.extract_strided_slice %56 {offsets = [0, 16], sizes = [15, 8], strides = [1, 1]} : vector<15x32xf32> to vector<15x8xf32>
    %61 = vector.extract_strided_slice %56 {offsets = [0, 24], sizes = [15, 8], strides = [1, 1]} : vector<15x32xf32> to vector<15x8xf32>
    %62 = arith.maximumf %60, %61 : vector<15x8xf32>
    %63 = arith.maximumf %59, %62 : vector<15x8xf32>
    %c0_44 = arith.constant 0 : index
    %c1_45 = arith.constant 1 : index
    %c0_46 = arith.constant 0 : index
    %c0_47 = arith.constant 0 : index
    %64 = vector.load %arg6[%c0_44, %c1_45, %c0_46, %c0_47] : memref<1x8x15x8xf32, #tpu.memory_space<vmem>>, vector<1x1x15x8xf32>
    %65 = vector.shape_cast %64 : vector<1x1x15x8xf32> to vector<15x8xf32>
    %66 = vector.shape_cast %63 : vector<15x8xf32> to vector<1x1x15x8xf32>
    tpu.vector_store %arg6[%c0_44, %c1_45, %c0_46, %c0_47], %66 {strides = array<i32>} : memref<1x8x15x8xf32, #tpu.memory_space<vmem>>, vector<1x1x15x8xf32>,
    %c0_48 = arith.constant 0 : index
    %c2_49 = arith.constant 2 : index
    %c0_50 = arith.constant 0 : index
    %c0_51 = arith.constant 0 : index
    %67 = vector.load %arg2[%c0_48, %c2_49, %c0_50, %c0_51] : memref<1x8x16x16xf32, #tpu.memory_space<vmem>>, vector<1x1x16x16xf32>
    %68 = vector.shape_cast %67 : vector<1x1x16x16xf32> to vector<16x16xf32>
    %c0_52 = arith.constant 0 : index
    %c3 = arith.constant 3 : index
    %c0_53 = arith.constant 0 : index
    %c0_54 = arith.constant 0 : index
    %69 = vector.load %arg2[%c0_52, %c3, %c0_53, %c0_54] : memref<1x8x16x16xf32, #tpu.memory_space<vmem>>, vector<1x1x16x16xf32>
    %70 = vector.shape_cast %69 : vector<1x1x16x16xf32> to vector<16x16xf32>
    %71 = vector.extract_strided_slice %68 {offsets = [0, 0], sizes = [15, 16], strides = [1, 1]} : vector<16x16xf32> to vector<15x16xf32>
    %cst_55 = arith.constant dense<0.000000e+00> : vector<15x32xf32>
    %72 = tpu.matmul %71, %1, %cst_55 {dimension_numbers = #tpu.dot_dimension_numbers<[1], [0], [0], [1], [0, 0, 1, 1], [], []>} : vector<15x16xf32>, vector<16x32xf32>, vector<15x32xf32> -> vector<15x32xf32>
    %73 = vector.extract_strided_slice %68 {offsets = [1, 0], sizes = [15, 16], strides = [1, 1]} : vector<16x16xf32> to vector<15x16xf32>
    %cst_56 = arith.constant dense<0.000000e+00> : vector<15x32xf32>
    %74 = tpu.matmul %73, %3, %cst_56 {dimension_numbers = #tpu.dot_dimension_numbers<[1], [0], [0], [1], [0, 0, 1, 1], [], []>} : vector<15x16xf32>, vector<16x32xf32>, vector<15x32xf32> -> vector<15x32xf32>
    %75 = arith.addf %72, %74 : vector<15x32xf32>
    %76 = vector.extract_strided_slice %70 {offsets = [0, 0], sizes = [15, 16], strides = [1, 1]} : vector<16x16xf32> to vector<15x16xf32>
    %cst_57 = arith.constant dense<0.000000e+00> : vector<15x32xf32>
    %77 = tpu.matmul %76, %5, %cst_57 {dimension_numbers = #tpu.dot_dimension_numbers<[1], [0], [0], [1], [0, 0, 1, 1], [], []>} : vector<15x16xf32>, vector<16x32xf32>, vector<15x32xf32> -> vector<15x32xf32>
    %78 = arith.addf %75, %77 : vector<15x32xf32>
    %79 = vector.extract_strided_slice %70 {offsets = [1, 0], sizes = [15, 16], strides = [1, 1]} : vector<16x16xf32> to vector<15x16xf32>
    %cst_58 = arith.constant dense<0.000000e+00> : vector<15x32xf32>
    %80 = tpu.matmul %79, %7, %cst_58 {dimension_numbers = #tpu.dot_dimension_numbers<[1], [0], [0], [1], [0, 0, 1, 1], [], []>} : vector<15x16xf32>, vector<16x32xf32>, vector<15x32xf32> -> vector<15x32xf32>
    %81 = arith.addf %78, %80 : vector<15x32xf32>
    %82 = vector.broadcast %8 : vector<1x32xf32> to vector<15x32xf32>
    %83 = arith.addf %81, %82 : vector<15x32xf32>
    %cst_59 = arith.constant 0.000000e+00 : f32
    %84 = vector.broadcast %cst_59 : f32 to vector<15x32xf32>
    %85 = arith.maximumf %83, %84 : vector<15x32xf32>
    %86 = vector.extract_strided_slice %85 {offsets = [0, 0], sizes = [15, 8], strides = [1, 1]} : vector<15x32xf32> to vector<15x8xf32>
    %87 = vector.extract_strided_slice %85 {offsets = [0, 8], sizes = [15, 8], strides = [1, 1]} : vector<15x32xf32> to vector<15x8xf32>
    %88 = arith.maximumf %86, %87 : vector<15x8xf32>
    %89 = vector.extract_strided_slice %85 {offsets = [0, 16], sizes = [15, 8], strides = [1, 1]} : vector<15x32xf32> to vector<15x8xf32>
    %90 = vector.extract_strided_slice %85 {offsets = [0, 24], sizes = [15, 8], strides = [1, 1]} : vector<15x32xf32> to vector<15x8xf32>
    %91 = arith.maximumf %89, %90 : vector<15x8xf32>
    %92 = arith.maximumf %88, %91 : vector<15x8xf32>
    %c0_60 = arith.constant 0 : index
    %c2_61 = arith.constant 2 : index
    %c0_62 = arith.constant 0 : index
    %c0_63 = arith.constant 0 : index
    %93 = vector.load %arg6[%c0_60, %c2_61, %c0_62, %c0_63] : memref<1x8x15x8xf32, #tpu.memory_space<vmem>>, vector<1x1x15x8xf32>
    %94 = vector.shape_cast %93 : vector<1x1x15x8xf32> to vector<15x8xf32>
    %95 = vector.shape_cast %92 : vector<15x8xf32> to vector<1x1x15x8xf32>
    tpu.vector_store %arg6[%c0_60, %c2_61, %c0_62, %c0_63], %95 {strides = array<i32>} : memref<1x8x15x8xf32, #tpu.memory_space<vmem>>, vector<1x1x15x8xf32>,
    %c0_64 = arith.constant 0 : index
    %c3_65 = arith.constant 3 : index
    %c0_66 = arith.constant 0 : index
    %c0_67 = arith.constant 0 : index
    %96 = vector.load %arg2[%c0_64, %c3_65, %c0_66, %c0_67] : memref<1x8x16x16xf32, #tpu.memory_space<vmem>>, vector<1x1x16x16xf32>
    %97 = vector.shape_cast %96 : vector<1x1x16x16xf32> to vector<16x16xf32>
    %c0_68 = arith.constant 0 : index
    %c4 = arith.constant 4 : index
    %c0_69 = arith.constant 0 : index
    %c0_70 = arith.constant 0 : index
    %98 = vector.load %arg2[%c0_68, %c4, %c0_69, %c0_70] : memref<1x8x16x16xf32, #tpu.memory_space<vmem>>, vector<1x1x16x16xf32>
    %99 = vector.shape_cast %98 : vector<1x1x16x16xf32> to vector<16x16xf32>
    %100 = vector.extract_strided_slice %97 {offsets = [0, 0], sizes = [15, 16], strides = [1, 1]} : vector<16x16xf32> to vector<15x16xf32>
    %cst_71 = arith.constant dense<0.000000e+00> : vector<15x32xf32>
    %101 = tpu.matmul %100, %1, %cst_71 {dimension_numbers = #tpu.dot_dimension_numbers<[1], [0], [0], [1], [0, 0, 1, 1], [], []>} : vector<15x16xf32>, vector<16x32xf32>, vector<15x32xf32> -> vector<15x32xf32>
    %102 = vector.extract_strided_slice %97 {offsets = [1, 0], sizes = [15, 16], strides = [1, 1]} : vector<16x16xf32> to vector<15x16xf32>
    %cst_72 = arith.constant dense<0.000000e+00> : vector<15x32xf32>
    %103 = tpu.matmul %102, %3, %cst_72 {dimension_numbers = #tpu.dot_dimension_numbers<[1], [0], [0], [1], [0, 0, 1, 1], [], []>} : vector<15x16xf32>, vector<16x32xf32>, vector<15x32xf32> -> vector<15x32xf32>
    %104 = arith.addf %101, %103 : vector<15x32xf32>
    %105 = vector.extract_strided_slice %99 {offsets = [0, 0], sizes = [15, 16], strides = [1, 1]} : vector<16x16xf32> to vector<15x16xf32>
    %cst_73 = arith.constant dense<0.000000e+00> : vector<15x32xf32>
    %106 = tpu.matmul %105, %5, %cst_73 {dimension_numbers = #tpu.dot_dimension_numbers<[1], [0], [0], [1], [0, 0, 1, 1], [], []>} : vector<15x16xf32>, vector<16x32xf32>, vector<15x32xf32> -> vector<15x32xf32>
    %107 = arith.addf %104, %106 : vector<15x32xf32>
    %108 = vector.extract_strided_slice %99 {offsets = [1, 0], sizes = [15, 16], strides = [1, 1]} : vector<16x16xf32> to vector<15x16xf32>
    %cst_74 = arith.constant dense<0.000000e+00> : vector<15x32xf32>
    %109 = tpu.matmul %108, %7, %cst_74 {dimension_numbers = #tpu.dot_dimension_numbers<[1], [0], [0], [1], [0, 0, 1, 1], [], []>} : vector<15x16xf32>, vector<16x32xf32>, vector<15x32xf32> -> vector<15x32xf32>
    %110 = arith.addf %107, %109 : vector<15x32xf32>
    %111 = vector.broadcast %8 : vector<1x32xf32> to vector<15x32xf32>
    %112 = arith.addf %110, %111 : vector<15x32xf32>
    %cst_75 = arith.constant 0.000000e+00 : f32
    %113 = vector.broadcast %cst_75 : f32 to vector<15x32xf32>
    %114 = arith.maximumf %112, %113 : vector<15x32xf32>
    %115 = vector.extract_strided_slice %114 {offsets = [0, 0], sizes = [15, 8], strides = [1, 1]} : vector<15x32xf32> to vector<15x8xf32>
    %116 = vector.extract_strided_slice %114 {offsets = [0, 8], sizes = [15, 8], strides = [1, 1]} : vector<15x32xf32> to vector<15x8xf32>
    %117 = arith.maximumf %115, %116 : vector<15x8xf32>
    %118 = vector.extract_strided_slice %114 {offsets = [0, 16], sizes = [15, 8], strides = [1, 1]} : vector<15x32xf32> to vector<15x8xf32>
    %119 = vector.extract_strided_slice %114 {offsets = [0, 24], sizes = [15, 8], strides = [1, 1]} : vector<15x32xf32> to vector<15x8xf32>
    %120 = arith.maximumf %118, %119 : vector<15x8xf32>
    %121 = arith.maximumf %117, %120 : vector<15x8xf32>
    %c0_76 = arith.constant 0 : index
    %c3_77 = arith.constant 3 : index
    %c0_78 = arith.constant 0 : index
    %c0_79 = arith.constant 0 : index
    %122 = vector.load %arg6[%c0_76, %c3_77, %c0_78, %c0_79] : memref<1x8x15x8xf32, #tpu.memory_space<vmem>>, vector<1x1x15x8xf32>
    %123 = vector.shape_cast %122 : vector<1x1x15x8xf32> to vector<15x8xf32>
    %124 = vector.shape_cast %121 : vector<15x8xf32> to vector<1x1x15x8xf32>
    tpu.vector_store %arg6[%c0_76, %c3_77, %c0_78, %c0_79], %124 {strides = array<i32>} : memref<1x8x15x8xf32, #tpu.memory_space<vmem>>, vector<1x1x15x8xf32>,
    %c0_80 = arith.constant 0 : index
    %c4_81 = arith.constant 4 : index
    %c0_82 = arith.constant 0 : index
    %c0_83 = arith.constant 0 : index
    %125 = vector.load %arg2[%c0_80, %c4_81, %c0_82, %c0_83] : memref<1x8x16x16xf32, #tpu.memory_space<vmem>>, vector<1x1x16x16xf32>
    %126 = vector.shape_cast %125 : vector<1x1x16x16xf32> to vector<16x16xf32>
    %c0_84 = arith.constant 0 : index
    %c5 = arith.constant 5 : index
    %c0_85 = arith.constant 0 : index
    %c0_86 = arith.constant 0 : index
    %127 = vector.load %arg2[%c0_84, %c5, %c0_85, %c0_86] : memref<1x8x16x16xf32, #tpu.memory_space<vmem>>, vector<1x1x16x16xf32>
    %128 = vector.shape_cast %127 : vector<1x1x16x16xf32> to vector<16x16xf32>
    %129 = vector.extract_strided_slice %126 {offsets = [0, 0], sizes = [15, 16], strides = [1, 1]} : vector<16x16xf32> to vector<15x16xf32>
    %cst_87 = arith.constant dense<0.000000e+00> : vector<15x32xf32>
    %130 = tpu.matmul %129, %1, %cst_87 {dimension_numbers = #tpu.dot_dimension_numbers<[1], [0], [0], [1], [0, 0, 1, 1], [], []>} : vector<15x16xf32>, vector<16x32xf32>, vector<15x32xf32> -> vector<15x32xf32>
    %131 = vector.extract_strided_slice %126 {offsets = [1, 0], sizes = [15, 16], strides = [1, 1]} : vector<16x16xf32> to vector<15x16xf32>
    %cst_88 = arith.constant dense<0.000000e+00> : vector<15x32xf32>
    %132 = tpu.matmul %131, %3, %cst_88 {dimension_numbers = #tpu.dot_dimension_numbers<[1], [0], [0], [1], [0, 0, 1, 1], [], []>} : vector<15x16xf32>, vector<16x32xf32>, vector<15x32xf32> -> vector<15x32xf32>
    %133 = arith.addf %130, %132 : vector<15x32xf32>
    %134 = vector.extract_strided_slice %128 {offsets = [0, 0], sizes = [15, 16], strides = [1, 1]} : vector<16x16xf32> to vector<15x16xf32>
    %cst_89 = arith.constant dense<0.000000e+00> : vector<15x32xf32>
    %135 = tpu.matmul %134, %5, %cst_89 {dimension_numbers = #tpu.dot_dimension_numbers<[1], [0], [0], [1], [0, 0, 1, 1], [], []>} : vector<15x16xf32>, vector<16x32xf32>, vector<15x32xf32> -> vector<15x32xf32>
    %136 = arith.addf %133, %135 : vector<15x32xf32>
    %137 = vector.extract_strided_slice %128 {offsets = [1, 0], sizes = [15, 16], strides = [1, 1]} : vector<16x16xf32> to vector<15x16xf32>
    %cst_90 = arith.constant dense<0.000000e+00> : vector<15x32xf32>
    %138 = tpu.matmul %137, %7, %cst_90 {dimension_numbers = #tpu.dot_dimension_numbers<[1], [0], [0], [1], [0, 0, 1, 1], [], []>} : vector<15x16xf32>, vector<16x32xf32>, vector<15x32xf32> -> vector<15x32xf32>
    %139 = arith.addf %136, %138 : vector<15x32xf32>
    %140 = vector.broadcast %8 : vector<1x32xf32> to vector<15x32xf32>
    %141 = arith.addf %139, %140 : vector<15x32xf32>
    %cst_91 = arith.constant 0.000000e+00 : f32
    %142 = vector.broadcast %cst_91 : f32 to vector<15x32xf32>
    %143 = arith.maximumf %141, %142 : vector<15x32xf32>
    %144 = vector.extract_strided_slice %143 {offsets = [0, 0], sizes = [15, 8], strides = [1, 1]} : vector<15x32xf32> to vector<15x8xf32>
    %145 = vector.extract_strided_slice %143 {offsets = [0, 8], sizes = [15, 8], strides = [1, 1]} : vector<15x32xf32> to vector<15x8xf32>
    %146 = arith.maximumf %144, %145 : vector<15x8xf32>
    %147 = vector.extract_strided_slice %143 {offsets = [0, 16], sizes = [15, 8], strides = [1, 1]} : vector<15x32xf32> to vector<15x8xf32>
    %148 = vector.extract_strided_slice %143 {offsets = [0, 24], sizes = [15, 8], strides = [1, 1]} : vector<15x32xf32> to vector<15x8xf32>
    %149 = arith.maximumf %147, %148 : vector<15x8xf32>
    %150 = arith.maximumf %146, %149 : vector<15x8xf32>
    %c0_92 = arith.constant 0 : index
    %c4_93 = arith.constant 4 : index
    %c0_94 = arith.constant 0 : index
    %c0_95 = arith.constant 0 : index
    %151 = vector.load %arg6[%c0_92, %c4_93, %c0_94, %c0_95] : memref<1x8x15x8xf32, #tpu.memory_space<vmem>>, vector<1x1x15x8xf32>
    %152 = vector.shape_cast %151 : vector<1x1x15x8xf32> to vector<15x8xf32>
    %153 = vector.shape_cast %150 : vector<15x8xf32> to vector<1x1x15x8xf32>
    tpu.vector_store %arg6[%c0_92, %c4_93, %c0_94, %c0_95], %153 {strides = array<i32>} : memref<1x8x15x8xf32, #tpu.memory_space<vmem>>, vector<1x1x15x8xf32>,
    %c0_96 = arith.constant 0 : index
    %c5_97 = arith.constant 5 : index
    %c0_98 = arith.constant 0 : index
    %c0_99 = arith.constant 0 : index
    %154 = vector.load %arg2[%c0_96, %c5_97, %c0_98, %c0_99] : memref<1x8x16x16xf32, #tpu.memory_space<vmem>>, vector<1x1x16x16xf32>
    %155 = vector.shape_cast %154 : vector<1x1x16x16xf32> to vector<16x16xf32>
    %c0_100 = arith.constant 0 : index
    %c6 = arith.constant 6 : index
    %c0_101 = arith.constant 0 : index
    %c0_102 = arith.constant 0 : index
    %156 = vector.load %arg2[%c0_100, %c6, %c0_101, %c0_102] : memref<1x8x16x16xf32, #tpu.memory_space<vmem>>, vector<1x1x16x16xf32>
    %157 = vector.shape_cast %156 : vector<1x1x16x16xf32> to vector<16x16xf32>
    %158 = vector.extract_strided_slice %155 {offsets = [0, 0], sizes = [15, 16], strides = [1, 1]} : vector<16x16xf32> to vector<15x16xf32>
    %cst_103 = arith.constant dense<0.000000e+00> : vector<15x32xf32>
    %159 = tpu.matmul %158, %1, %cst_103 {dimension_numbers = #tpu.dot_dimension_numbers<[1], [0], [0], [1], [0, 0, 1, 1], [], []>} : vector<15x16xf32>, vector<16x32xf32>, vector<15x32xf32> -> vector<15x32xf32>
    %160 = vector.extract_strided_slice %155 {offsets = [1, 0], sizes = [15, 16], strides = [1, 1]} : vector<16x16xf32> to vector<15x16xf32>
    %cst_104 = arith.constant dense<0.000000e+00> : vector<15x32xf32>
    %161 = tpu.matmul %160, %3, %cst_104 {dimension_numbers = #tpu.dot_dimension_numbers<[1], [0], [0], [1], [0, 0, 1, 1], [], []>} : vector<15x16xf32>, vector<16x32xf32>, vector<15x32xf32> -> vector<15x32xf32>
    %162 = arith.addf %159, %161 : vector<15x32xf32>
    %163 = vector.extract_strided_slice %157 {offsets = [0, 0], sizes = [15, 16], strides = [1, 1]} : vector<16x16xf32> to vector<15x16xf32>
    %cst_105 = arith.constant dense<0.000000e+00> : vector<15x32xf32>
    %164 = tpu.matmul %163, %5, %cst_105 {dimension_numbers = #tpu.dot_dimension_numbers<[1], [0], [0], [1], [0, 0, 1, 1], [], []>} : vector<15x16xf32>, vector<16x32xf32>, vector<15x32xf32> -> vector<15x32xf32>
    %165 = arith.addf %162, %164 : vector<15x32xf32>
    %166 = vector.extract_strided_slice %157 {offsets = [1, 0], sizes = [15, 16], strides = [1, 1]} : vector<16x16xf32> to vector<15x16xf32>
    %cst_106 = arith.constant dense<0.000000e+00> : vector<15x32xf32>
    %167 = tpu.matmul %166, %7, %cst_106 {dimension_numbers = #tpu.dot_dimension_numbers<[1], [0], [0], [1], [0, 0, 1, 1], [], []>} : vector<15x16xf32>, vector<16x32xf32>, vector<15x32xf32> -> vector<15x32xf32>
    %168 = arith.addf %165, %167 : vector<15x32xf32>
    %169 = vector.broadcast %8 : vector<1x32xf32> to vector<15x32xf32>
    %170 = arith.addf %168, %169 : vector<15x32xf32>
    %cst_107 = arith.constant 0.000000e+00 : f32
    %171 = vector.broadcast %cst_107 : f32 to vector<15x32xf32>
    %172 = arith.maximumf %170, %171 : vector<15x32xf32>
    %173 = vector.extract_strided_slice %172 {offsets = [0, 0], sizes = [15, 8], strides = [1, 1]} : vector<15x32xf32> to vector<15x8xf32>
    %174 = vector.extract_strided_slice %172 {offsets = [0, 8], sizes = [15, 8], strides = [1, 1]} : vector<15x32xf32> to vector<15x8xf32>
    %175 = arith.maximumf %173, %174 : vector<15x8xf32>
    %176 = vector.extract_strided_slice %172 {offsets = [0, 16], sizes = [15, 8], strides = [1, 1]} : vector<15x32xf32> to vector<15x8xf32>
    %177 = vector.extract_strided_slice %172 {offsets = [0, 24], sizes = [15, 8], strides = [1, 1]} : vector<15x32xf32> to vector<15x8xf32>
    %178 = arith.maximumf %176, %177 : vector<15x8xf32>
    %179 = arith.maximumf %175, %178 : vector<15x8xf32>
    %c0_108 = arith.constant 0 : index
    %c5_109 = arith.constant 5 : index
    %c0_110 = arith.constant 0 : index
    %c0_111 = arith.constant 0 : index
    %180 = vector.load %arg6[%c0_108, %c5_109, %c0_110, %c0_111] : memref<1x8x15x8xf32, #tpu.memory_space<vmem>>, vector<1x1x15x8xf32>
    %181 = vector.shape_cast %180 : vector<1x1x15x8xf32> to vector<15x8xf32>
    %182 = vector.shape_cast %179 : vector<15x8xf32> to vector<1x1x15x8xf32>
    tpu.vector_store %arg6[%c0_108, %c5_109, %c0_110, %c0_111], %182 {strides = array<i32>} : memref<1x8x15x8xf32, #tpu.memory_space<vmem>>, vector<1x1x15x8xf32>,
    %c0_112 = arith.constant 0 : index
    %c6_113 = arith.constant 6 : index
    %c0_114 = arith.constant 0 : index
    %c0_115 = arith.constant 0 : index
    %183 = vector.load %arg2[%c0_112, %c6_113, %c0_114, %c0_115] : memref<1x8x16x16xf32, #tpu.memory_space<vmem>>, vector<1x1x16x16xf32>
    %184 = vector.shape_cast %183 : vector<1x1x16x16xf32> to vector<16x16xf32>
    %c0_116 = arith.constant 0 : index
    %c7 = arith.constant 7 : index
    %c0_117 = arith.constant 0 : index
    %c0_118 = arith.constant 0 : index
    %185 = vector.load %arg2[%c0_116, %c7, %c0_117, %c0_118] : memref<1x8x16x16xf32, #tpu.memory_space<vmem>>, vector<1x1x16x16xf32>
    %186 = vector.shape_cast %185 : vector<1x1x16x16xf32> to vector<16x16xf32>
    %187 = vector.extract_strided_slice %184 {offsets = [0, 0], sizes = [15, 16], strides = [1, 1]} : vector<16x16xf32> to vector<15x16xf32>
    %cst_119 = arith.constant dense<0.000000e+00> : vector<15x32xf32>
    %188 = tpu.matmul %187, %1, %cst_119 {dimension_numbers = #tpu.dot_dimension_numbers<[1], [0], [0], [1], [0, 0, 1, 1], [], []>} : vector<15x16xf32>, vector<16x32xf32>, vector<15x32xf32> -> vector<15x32xf32>
    %189 = vector.extract_strided_slice %184 {offsets = [1, 0], sizes = [15, 16], strides = [1, 1]} : vector<16x16xf32> to vector<15x16xf32>
    %cst_120 = arith.constant dense<0.000000e+00> : vector<15x32xf32>
    %190 = tpu.matmul %189, %3, %cst_120 {dimension_numbers = #tpu.dot_dimension_numbers<[1], [0], [0], [1], [0, 0, 1, 1], [], []>} : vector<15x16xf32>, vector<16x32xf32>, vector<15x32xf32> -> vector<15x32xf32>
    %191 = arith.addf %188, %190 : vector<15x32xf32>
    %192 = vector.extract_strided_slice %186 {offsets = [0, 0], sizes = [15, 16], strides = [1, 1]} : vector<16x16xf32> to vector<15x16xf32>
    %cst_121 = arith.constant dense<0.000000e+00> : vector<15x32xf32>
    %193 = tpu.matmul %192, %5, %cst_121 {dimension_numbers = #tpu.dot_dimension_numbers<[1], [0], [0], [1], [0, 0, 1, 1], [], []>} : vector<15x16xf32>, vector<16x32xf32>, vector<15x32xf32> -> vector<15x32xf32>
    %194 = arith.addf %191, %193 : vector<15x32xf32>
    %195 = vector.extract_strided_slice %186 {offsets = [1, 0], sizes = [15, 16], strides = [1, 1]} : vector<16x16xf32> to vector<15x16xf32>
    %cst_122 = arith.constant dense<0.000000e+00> : vector<15x32xf32>
    %196 = tpu.matmul %195, %7, %cst_122 {dimension_numbers = #tpu.dot_dimension_numbers<[1], [0], [0], [1], [0, 0, 1, 1], [], []>} : vector<15x16xf32>, vector<16x32xf32>, vector<15x32xf32> -> vector<15x32xf32>
    %197 = arith.addf %194, %196 : vector<15x32xf32>
    %198 = vector.broadcast %8 : vector<1x32xf32> to vector<15x32xf32>
    %199 = arith.addf %197, %198 : vector<15x32xf32>
    %cst_123 = arith.constant 0.000000e+00 : f32
    %200 = vector.broadcast %cst_123 : f32 to vector<15x32xf32>
    %201 = arith.maximumf %199, %200 : vector<15x32xf32>
    %202 = vector.extract_strided_slice %201 {offsets = [0, 0], sizes = [15, 8], strides = [1, 1]} : vector<15x32xf32> to vector<15x8xf32>
    %203 = vector.extract_strided_slice %201 {offsets = [0, 8], sizes = [15, 8], strides = [1, 1]} : vector<15x32xf32> to vector<15x8xf32>
    %204 = arith.maximumf %202, %203 : vector<15x8xf32>
    %205 = vector.extract_strided_slice %201 {offsets = [0, 16], sizes = [15, 8], strides = [1, 1]} : vector<15x32xf32> to vector<15x8xf32>
    %206 = vector.extract_strided_slice %201 {offsets = [0, 24], sizes = [15, 8], strides = [1, 1]} : vector<15x32xf32> to vector<15x8xf32>
    %207 = arith.maximumf %205, %206 : vector<15x8xf32>
    %208 = arith.maximumf %204, %207 : vector<15x8xf32>
    %c0_124 = arith.constant 0 : index
    %c6_125 = arith.constant 6 : index
    %c0_126 = arith.constant 0 : index
    %c0_127 = arith.constant 0 : index
    %209 = vector.load %arg6[%c0_124, %c6_125, %c0_126, %c0_127] : memref<1x8x15x8xf32, #tpu.memory_space<vmem>>, vector<1x1x15x8xf32>
    %210 = vector.shape_cast %209 : vector<1x1x15x8xf32> to vector<15x8xf32>
    %211 = vector.shape_cast %208 : vector<15x8xf32> to vector<1x1x15x8xf32>
    tpu.vector_store %arg6[%c0_124, %c6_125, %c0_126, %c0_127], %211 {strides = array<i32>} : memref<1x8x15x8xf32, #tpu.memory_space<vmem>>, vector<1x1x15x8xf32>,
    %c0_128 = arith.constant 0 : index
    %c7_129 = arith.constant 7 : index
    %c0_130 = arith.constant 0 : index
    %c0_131 = arith.constant 0 : index
    %212 = vector.load %arg2[%c0_128, %c7_129, %c0_130, %c0_131] : memref<1x8x16x16xf32, #tpu.memory_space<vmem>>, vector<1x1x16x16xf32>
    %213 = vector.shape_cast %212 : vector<1x1x16x16xf32> to vector<16x16xf32>
    %c0_132 = arith.constant 0 : index
    %c0_133 = arith.constant 0 : index
    %c0_134 = arith.constant 0 : index
    %c0_135 = arith.constant 0 : index
    %214 = vector.load %arg3[%c0_132, %c0_133, %c0_134, %c0_135] : memref<1x1x16x16xf32, #tpu.memory_space<vmem>>, vector<1x1x16x16xf32>
    %215 = vector.shape_cast %214 : vector<1x1x16x16xf32> to vector<16x16xf32>
    %216 = vector.extract_strided_slice %213 {offsets = [0, 0], sizes = [15, 16], strides = [1, 1]} : vector<16x16xf32> to vector<15x16xf32>
    %cst_136 = arith.constant dense<0.000000e+00> : vector<15x32xf32>
    %217 = tpu.matmul %216, %1, %cst_136 {dimension_numbers = #tpu.dot_dimension_numbers<[1], [0], [0], [1], [0, 0, 1, 1], [], []>} : vector<15x16xf32>, vector<16x32xf32>, vector<15x32xf32> -> vector<15x32xf32>
    %218 = vector.extract_strided_slice %213 {offsets = [1, 0], sizes = [15, 16], strides = [1, 1]} : vector<16x16xf32> to vector<15x16xf32>
    %cst_137 = arith.constant dense<0.000000e+00> : vector<15x32xf32>
    %219 = tpu.matmul %218, %3, %cst_137 {dimension_numbers = #tpu.dot_dimension_numbers<[1], [0], [0], [1], [0, 0, 1, 1], [], []>} : vector<15x16xf32>, vector<16x32xf32>, vector<15x32xf32> -> vector<15x32xf32>
    %220 = arith.addf %217, %219 : vector<15x32xf32>
    %221 = vector.extract_strided_slice %215 {offsets = [0, 0], sizes = [15, 16], strides = [1, 1]} : vector<16x16xf32> to vector<15x16xf32>
    %cst_138 = arith.constant dense<0.000000e+00> : vector<15x32xf32>
    %222 = tpu.matmul %221, %5, %cst_138 {dimension_numbers = #tpu.dot_dimension_numbers<[1], [0], [0], [1], [0, 0, 1, 1], [], []>} : vector<15x16xf32>, vector<16x32xf32>, vector<15x32xf32> -> vector<15x32xf32>
    %223 = arith.addf %220, %222 : vector<15x32xf32>
    %224 = vector.extract_strided_slice %215 {offsets = [1, 0], sizes = [15, 16], strides = [1, 1]} : vector<16x16xf32> to vector<15x16xf32>
    %cst_139 = arith.constant dense<0.000000e+00> : vector<15x32xf32>
    %225 = tpu.matmul %224, %7, %cst_139 {dimension_numbers = #tpu.dot_dimension_numbers<[1], [0], [0], [1], [0, 0, 1, 1], [], []>} : vector<15x16xf32>, vector<16x32xf32>, vector<15x32xf32> -> vector<15x32xf32>
    %226 = arith.addf %223, %225 : vector<15x32xf32>
    %227 = vector.broadcast %8 : vector<1x32xf32> to vector<15x32xf32>
    %228 = arith.addf %226, %227 : vector<15x32xf32>
    %cst_140 = arith.constant 0.000000e+00 : f32
    %229 = vector.broadcast %cst_140 : f32 to vector<15x32xf32>
    %230 = arith.maximumf %228, %229 : vector<15x32xf32>
    %231 = vector.extract_strided_slice %230 {offsets = [0, 0], sizes = [15, 8], strides = [1, 1]} : vector<15x32xf32> to vector<15x8xf32>
    %232 = vector.extract_strided_slice %230 {offsets = [0, 8], sizes = [15, 8], strides = [1, 1]} : vector<15x32xf32> to vector<15x8xf32>
    %233 = arith.maximumf %231, %232 : vector<15x8xf32>
    %234 = vector.extract_strided_slice %230 {offsets = [0, 16], sizes = [15, 8], strides = [1, 1]} : vector<15x32xf32> to vector<15x8xf32>
    %235 = vector.extract_strided_slice %230 {offsets = [0, 24], sizes = [15, 8], strides = [1, 1]} : vector<15x32xf32> to vector<15x8xf32>
    %236 = arith.maximumf %234, %235 : vector<15x8xf32>
    %237 = arith.maximumf %233, %236 : vector<15x8xf32>
    %c0_141 = arith.constant 0 : index
    %c7_142 = arith.constant 7 : index
    %c0_143 = arith.constant 0 : index
    %c0_144 = arith.constant 0 : index
    %238 = vector.load %arg6[%c0_141, %c7_142, %c0_143, %c0_144] : memref<1x8x15x8xf32, #tpu.memory_space<vmem>>, vector<1x1x15x8xf32>
    %239 = vector.shape_cast %238 : vector<1x1x15x8xf32> to vector<15x8xf32>
    %240 = vector.shape_cast %237 : vector<15x8xf32> to vector<1x1x15x8xf32>
    tpu.vector_store %arg6[%c0_141, %c7_142, %c0_143, %c0_144], %240 {strides = array<i32>} : memref<1x8x15x8xf32, #tpu.memory_space<vmem>>, vector<1x1x15x8xf32>,
    return
  }
  func.func @transform_0(%arg0: i32, %arg1: i32) -> (i32, i32, i32, i32) {
    %c0_i32 = arith.constant 0 : i32
    %c0_i32_0 = arith.constant 0 : i32
    %c0_i32_1 = arith.constant 0 : i32
    return %arg0, %arg1, %c0_i32, %c0_i32_0 : i32, i32, i32, i32
  }
  func.func @transform_1(%arg0: i32, %arg1: i32) -> (i32, i32, i32, i32) {
    %c1_i32 = arith.constant 1 : i32
    %0 = arith.addi %arg1, %c1_i32 : i32
    %c8_i32 = arith.constant 8 : i32
    %1 = arith.muli %0, %c8_i32 : i32
    %c0_i32 = arith.constant 0 : i32
    %c0_i32_0 = arith.constant 0 : i32
    %c0_i32_1 = arith.constant 0 : i32
    return %arg0, %1, %c0_i32, %c0_i32_0 : i32, i32, i32, i32
  }
  func.func @transform_2(%arg0: i32, %arg1: i32) -> (i32, i32, i32, i32) {
    %c0_i32 = arith.constant 0 : i32
    %c0_i32_0 = arith.constant 0 : i32
    %c0_i32_1 = arith.constant 0 : i32
    %c0_i32_2 = arith.constant 0 : i32
    %c0_i32_3 = arith.constant 0 : i32
    return %c0_i32, %c0_i32_0, %c0_i32_1, %c0_i32_2 : i32, i32, i32, i32
  }
  func.func @transform_3(%arg0: i32, %arg1: i32) -> (i32, i32) {
    %c0_i32 = arith.constant 0 : i32
    %c0_i32_0 = arith.constant 0 : i32
    %c0_i32_1 = arith.constant 0 : i32
    return %c0_i32, %c0_i32_0 : i32, i32
  }
  func.func @transform_4(%arg0: i32, %arg1: i32) -> (i32, i32, i32, i32) {
    %c0_i32 = arith.constant 0 : i32
    %c0_i32_0 = arith.constant 0 : i32
    %c0_i32_1 = arith.constant 0 : i32
    return %arg0, %arg1, %c0_i32, %c0_i32_0 : i32, i32, i32, i32
  }
}

module attributes {stable_mosaic.version = 11 : i64} {
  func.func @_conv_pool_kernel(%arg0: i32, %arg1: i32, %arg2: memref<1x3x4x128xf32, #tpu.memory_space<vmem>>, %arg3: memref<1x1x4x128xf32, #tpu.memory_space<vmem>>, %arg4: memref<2x2x128x96xf32, #tpu.memory_space<vmem>>, %arg5: memref<1x96xf32, #tpu.memory_space<vmem>>, %arg6: memref<1x3x3x24xf32, #tpu.memory_space<vmem>>) attributes {dimension_semantics = [#tpu.dimension_semantics<parallel>, #tpu.dimension_semantics<parallel>], iteration_bounds = array<i64: 2, 1>, scalar_prefetch = 0 : i64, scratch_operands = 0 : i64, tpu.core_type = #tpu.core_type<tc>, window_params = [{transform_indices = @transform_0, window_bounds = array<i64: 1, 3, 4, 128>}, {transform_indices = @transform_1, window_bounds = array<i64: 1, 1, 4, 128>}, {pipeline_mode = #tpu.pipeline_mode<synchronous>, transform_indices = @transform_2, window_bounds = array<i64: 2, 2, 128, 96>}, {pipeline_mode = #tpu.pipeline_mode<synchronous>, transform_indices = @transform_3, window_bounds = array<i64: 1, 96>}, {transform_indices = @transform_4, window_bounds = array<i64: 1, 3, 3, 24>}]} {
    %c0 = arith.constant 0 : index
    %c0_0 = arith.constant 0 : index
    %c0_1 = arith.constant 0 : index
    %c0_2 = arith.constant 0 : index
    %0 = vector.load %arg4[%c0, %c0_0, %c0_1, %c0_2] : memref<2x2x128x96xf32, #tpu.memory_space<vmem>>, vector<1x1x128x96xf32>
    %1 = vector.shape_cast %0 : vector<1x1x128x96xf32> to vector<128x96xf32>
    %c0_3 = arith.constant 0 : index
    %c1 = arith.constant 1 : index
    %c0_4 = arith.constant 0 : index
    %c0_5 = arith.constant 0 : index
    %2 = vector.load %arg4[%c0_3, %c1, %c0_4, %c0_5] : memref<2x2x128x96xf32, #tpu.memory_space<vmem>>, vector<1x1x128x96xf32>
    %3 = vector.shape_cast %2 : vector<1x1x128x96xf32> to vector<128x96xf32>
    %c1_6 = arith.constant 1 : index
    %c0_7 = arith.constant 0 : index
    %c0_8 = arith.constant 0 : index
    %c0_9 = arith.constant 0 : index
    %4 = vector.load %arg4[%c1_6, %c0_7, %c0_8, %c0_9] : memref<2x2x128x96xf32, #tpu.memory_space<vmem>>, vector<1x1x128x96xf32>
    %5 = vector.shape_cast %4 : vector<1x1x128x96xf32> to vector<128x96xf32>
    %c1_10 = arith.constant 1 : index
    %c1_11 = arith.constant 1 : index
    %c0_12 = arith.constant 0 : index
    %c0_13 = arith.constant 0 : index
    %6 = vector.load %arg4[%c1_10, %c1_11, %c0_12, %c0_13] : memref<2x2x128x96xf32, #tpu.memory_space<vmem>>, vector<1x1x128x96xf32>
    %7 = vector.shape_cast %6 : vector<1x1x128x96xf32> to vector<128x96xf32>
    %c0_14 = arith.constant 0 : index
    %c0_15 = arith.constant 0 : index
    %8 = vector.load %arg5[%c0_14, %c0_15] : memref<1x96xf32, #tpu.memory_space<vmem>>, vector<1x96xf32>
    %c0_16 = arith.constant 0 : index
    %c0_17 = arith.constant 0 : index
    %c0_18 = arith.constant 0 : index
    %c0_19 = arith.constant 0 : index
    %9 = vector.load %arg2[%c0_16, %c0_17, %c0_18, %c0_19] : memref<1x3x4x128xf32, #tpu.memory_space<vmem>>, vector<1x1x4x128xf32>
    %10 = vector.shape_cast %9 : vector<1x1x4x128xf32> to vector<4x128xf32>
    %c0_20 = arith.constant 0 : index
    %c1_21 = arith.constant 1 : index
    %c0_22 = arith.constant 0 : index
    %c0_23 = arith.constant 0 : index
    %11 = vector.load %arg2[%c0_20, %c1_21, %c0_22, %c0_23] : memref<1x3x4x128xf32, #tpu.memory_space<vmem>>, vector<1x1x4x128xf32>
    %12 = vector.shape_cast %11 : vector<1x1x4x128xf32> to vector<4x128xf32>
    %13 = vector.extract_strided_slice %10 {offsets = [0, 0], sizes = [3, 128], strides = [1, 1]} : vector<4x128xf32> to vector<3x128xf32>
    %cst = arith.constant dense<0.000000e+00> : vector<3x96xf32>
    %14 = tpu.matmul %13, %1, %cst {dimension_numbers = #tpu.dot_dimension_numbers<[1], [0], [0], [1], [0, 0, 1, 1], [], []>} : vector<3x128xf32>, vector<128x96xf32>, vector<3x96xf32> -> vector<3x96xf32>
    %15 = vector.extract_strided_slice %10 {offsets = [1, 0], sizes = [3, 128], strides = [1, 1]} : vector<4x128xf32> to vector<3x128xf32>
    %cst_24 = arith.constant dense<0.000000e+00> : vector<3x96xf32>
    %16 = tpu.matmul %15, %3, %cst_24 {dimension_numbers = #tpu.dot_dimension_numbers<[1], [0], [0], [1], [0, 0, 1, 1], [], []>} : vector<3x128xf32>, vector<128x96xf32>, vector<3x96xf32> -> vector<3x96xf32>
    %17 = arith.addf %14, %16 : vector<3x96xf32>
    %18 = vector.extract_strided_slice %12 {offsets = [0, 0], sizes = [3, 128], strides = [1, 1]} : vector<4x128xf32> to vector<3x128xf32>
    %cst_25 = arith.constant dense<0.000000e+00> : vector<3x96xf32>
    %19 = tpu.matmul %18, %5, %cst_25 {dimension_numbers = #tpu.dot_dimension_numbers<[1], [0], [0], [1], [0, 0, 1, 1], [], []>} : vector<3x128xf32>, vector<128x96xf32>, vector<3x96xf32> -> vector<3x96xf32>
    %20 = arith.addf %17, %19 : vector<3x96xf32>
    %21 = vector.extract_strided_slice %12 {offsets = [1, 0], sizes = [3, 128], strides = [1, 1]} : vector<4x128xf32> to vector<3x128xf32>
    %cst_26 = arith.constant dense<0.000000e+00> : vector<3x96xf32>
    %22 = tpu.matmul %21, %7, %cst_26 {dimension_numbers = #tpu.dot_dimension_numbers<[1], [0], [0], [1], [0, 0, 1, 1], [], []>} : vector<3x128xf32>, vector<128x96xf32>, vector<3x96xf32> -> vector<3x96xf32>
    %23 = arith.addf %20, %22 : vector<3x96xf32>
    %24 = vector.broadcast %8 : vector<1x96xf32> to vector<3x96xf32>
    %25 = arith.addf %23, %24 : vector<3x96xf32>
    %cst_27 = arith.constant 0.000000e+00 : f32
    %26 = vector.broadcast %cst_27 : f32 to vector<3x96xf32>
    %27 = arith.maximumf %25, %26 : vector<3x96xf32>
    %28 = vector.extract_strided_slice %27 {offsets = [0, 0], sizes = [3, 24], strides = [1, 1]} : vector<3x96xf32> to vector<3x24xf32>
    %29 = vector.extract_strided_slice %27 {offsets = [0, 24], sizes = [3, 24], strides = [1, 1]} : vector<3x96xf32> to vector<3x24xf32>
    %30 = arith.maximumf %28, %29 : vector<3x24xf32>
    %31 = vector.extract_strided_slice %27 {offsets = [0, 48], sizes = [3, 24], strides = [1, 1]} : vector<3x96xf32> to vector<3x24xf32>
    %32 = vector.extract_strided_slice %27 {offsets = [0, 72], sizes = [3, 24], strides = [1, 1]} : vector<3x96xf32> to vector<3x24xf32>
    %33 = arith.maximumf %31, %32 : vector<3x24xf32>
    %34 = arith.maximumf %30, %33 : vector<3x24xf32>
    %c0_28 = arith.constant 0 : index
    %c0_29 = arith.constant 0 : index
    %c0_30 = arith.constant 0 : index
    %c0_31 = arith.constant 0 : index
    %35 = vector.load %arg6[%c0_28, %c0_29, %c0_30, %c0_31] : memref<1x3x3x24xf32, #tpu.memory_space<vmem>>, vector<1x1x3x24xf32>
    %36 = vector.shape_cast %35 : vector<1x1x3x24xf32> to vector<3x24xf32>
    %37 = vector.shape_cast %34 : vector<3x24xf32> to vector<1x1x3x24xf32>
    tpu.vector_store %arg6[%c0_28, %c0_29, %c0_30, %c0_31], %37 {strides = array<i32>} : memref<1x3x3x24xf32, #tpu.memory_space<vmem>>, vector<1x1x3x24xf32>,
    %c0_32 = arith.constant 0 : index
    %c1_33 = arith.constant 1 : index
    %c0_34 = arith.constant 0 : index
    %c0_35 = arith.constant 0 : index
    %38 = vector.load %arg2[%c0_32, %c1_33, %c0_34, %c0_35] : memref<1x3x4x128xf32, #tpu.memory_space<vmem>>, vector<1x1x4x128xf32>
    %39 = vector.shape_cast %38 : vector<1x1x4x128xf32> to vector<4x128xf32>
    %c0_36 = arith.constant 0 : index
    %c2 = arith.constant 2 : index
    %c0_37 = arith.constant 0 : index
    %c0_38 = arith.constant 0 : index
    %40 = vector.load %arg2[%c0_36, %c2, %c0_37, %c0_38] : memref<1x3x4x128xf32, #tpu.memory_space<vmem>>, vector<1x1x4x128xf32>
    %41 = vector.shape_cast %40 : vector<1x1x4x128xf32> to vector<4x128xf32>
    %42 = vector.extract_strided_slice %39 {offsets = [0, 0], sizes = [3, 128], strides = [1, 1]} : vector<4x128xf32> to vector<3x128xf32>
    %cst_39 = arith.constant dense<0.000000e+00> : vector<3x96xf32>
    %43 = tpu.matmul %42, %1, %cst_39 {dimension_numbers = #tpu.dot_dimension_numbers<[1], [0], [0], [1], [0, 0, 1, 1], [], []>} : vector<3x128xf32>, vector<128x96xf32>, vector<3x96xf32> -> vector<3x96xf32>
    %44 = vector.extract_strided_slice %39 {offsets = [1, 0], sizes = [3, 128], strides = [1, 1]} : vector<4x128xf32> to vector<3x128xf32>
    %cst_40 = arith.constant dense<0.000000e+00> : vector<3x96xf32>
    %45 = tpu.matmul %44, %3, %cst_40 {dimension_numbers = #tpu.dot_dimension_numbers<[1], [0], [0], [1], [0, 0, 1, 1], [], []>} : vector<3x128xf32>, vector<128x96xf32>, vector<3x96xf32> -> vector<3x96xf32>
    %46 = arith.addf %43, %45 : vector<3x96xf32>
    %47 = vector.extract_strided_slice %41 {offsets = [0, 0], sizes = [3, 128], strides = [1, 1]} : vector<4x128xf32> to vector<3x128xf32>
    %cst_41 = arith.constant dense<0.000000e+00> : vector<3x96xf32>
    %48 = tpu.matmul %47, %5, %cst_41 {dimension_numbers = #tpu.dot_dimension_numbers<[1], [0], [0], [1], [0, 0, 1, 1], [], []>} : vector<3x128xf32>, vector<128x96xf32>, vector<3x96xf32> -> vector<3x96xf32>
    %49 = arith.addf %46, %48 : vector<3x96xf32>
    %50 = vector.extract_strided_slice %41 {offsets = [1, 0], sizes = [3, 128], strides = [1, 1]} : vector<4x128xf32> to vector<3x128xf32>
    %cst_42 = arith.constant dense<0.000000e+00> : vector<3x96xf32>
    %51 = tpu.matmul %50, %7, %cst_42 {dimension_numbers = #tpu.dot_dimension_numbers<[1], [0], [0], [1], [0, 0, 1, 1], [], []>} : vector<3x128xf32>, vector<128x96xf32>, vector<3x96xf32> -> vector<3x96xf32>
    %52 = arith.addf %49, %51 : vector<3x96xf32>
    %53 = vector.broadcast %8 : vector<1x96xf32> to vector<3x96xf32>
    %54 = arith.addf %52, %53 : vector<3x96xf32>
    %cst_43 = arith.constant 0.000000e+00 : f32
    %55 = vector.broadcast %cst_43 : f32 to vector<3x96xf32>
    %56 = arith.maximumf %54, %55 : vector<3x96xf32>
    %57 = vector.extract_strided_slice %56 {offsets = [0, 0], sizes = [3, 24], strides = [1, 1]} : vector<3x96xf32> to vector<3x24xf32>
    %58 = vector.extract_strided_slice %56 {offsets = [0, 24], sizes = [3, 24], strides = [1, 1]} : vector<3x96xf32> to vector<3x24xf32>
    %59 = arith.maximumf %57, %58 : vector<3x24xf32>
    %60 = vector.extract_strided_slice %56 {offsets = [0, 48], sizes = [3, 24], strides = [1, 1]} : vector<3x96xf32> to vector<3x24xf32>
    %61 = vector.extract_strided_slice %56 {offsets = [0, 72], sizes = [3, 24], strides = [1, 1]} : vector<3x96xf32> to vector<3x24xf32>
    %62 = arith.maximumf %60, %61 : vector<3x24xf32>
    %63 = arith.maximumf %59, %62 : vector<3x24xf32>
    %c0_44 = arith.constant 0 : index
    %c1_45 = arith.constant 1 : index
    %c0_46 = arith.constant 0 : index
    %c0_47 = arith.constant 0 : index
    %64 = vector.load %arg6[%c0_44, %c1_45, %c0_46, %c0_47] : memref<1x3x3x24xf32, #tpu.memory_space<vmem>>, vector<1x1x3x24xf32>
    %65 = vector.shape_cast %64 : vector<1x1x3x24xf32> to vector<3x24xf32>
    %66 = vector.shape_cast %63 : vector<3x24xf32> to vector<1x1x3x24xf32>
    tpu.vector_store %arg6[%c0_44, %c1_45, %c0_46, %c0_47], %66 {strides = array<i32>} : memref<1x3x3x24xf32, #tpu.memory_space<vmem>>, vector<1x1x3x24xf32>,
    %c0_48 = arith.constant 0 : index
    %c2_49 = arith.constant 2 : index
    %c0_50 = arith.constant 0 : index
    %c0_51 = arith.constant 0 : index
    %67 = vector.load %arg2[%c0_48, %c2_49, %c0_50, %c0_51] : memref<1x3x4x128xf32, #tpu.memory_space<vmem>>, vector<1x1x4x128xf32>
    %68 = vector.shape_cast %67 : vector<1x1x4x128xf32> to vector<4x128xf32>
    %c0_52 = arith.constant 0 : index
    %c0_53 = arith.constant 0 : index
    %c0_54 = arith.constant 0 : index
    %c0_55 = arith.constant 0 : index
    %69 = vector.load %arg3[%c0_52, %c0_53, %c0_54, %c0_55] : memref<1x1x4x128xf32, #tpu.memory_space<vmem>>, vector<1x1x4x128xf32>
    %70 = vector.shape_cast %69 : vector<1x1x4x128xf32> to vector<4x128xf32>
    %71 = vector.extract_strided_slice %68 {offsets = [0, 0], sizes = [3, 128], strides = [1, 1]} : vector<4x128xf32> to vector<3x128xf32>
    %cst_56 = arith.constant dense<0.000000e+00> : vector<3x96xf32>
    %72 = tpu.matmul %71, %1, %cst_56 {dimension_numbers = #tpu.dot_dimension_numbers<[1], [0], [0], [1], [0, 0, 1, 1], [], []>} : vector<3x128xf32>, vector<128x96xf32>, vector<3x96xf32> -> vector<3x96xf32>
    %73 = vector.extract_strided_slice %68 {offsets = [1, 0], sizes = [3, 128], strides = [1, 1]} : vector<4x128xf32> to vector<3x128xf32>
    %cst_57 = arith.constant dense<0.000000e+00> : vector<3x96xf32>
    %74 = tpu.matmul %73, %3, %cst_57 {dimension_numbers = #tpu.dot_dimension_numbers<[1], [0], [0], [1], [0, 0, 1, 1], [], []>} : vector<3x128xf32>, vector<128x96xf32>, vector<3x96xf32> -> vector<3x96xf32>
    %75 = arith.addf %72, %74 : vector<3x96xf32>
    %76 = vector.extract_strided_slice %70 {offsets = [0, 0], sizes = [3, 128], strides = [1, 1]} : vector<4x128xf32> to vector<3x128xf32>
    %cst_58 = arith.constant dense<0.000000e+00> : vector<3x96xf32>
    %77 = tpu.matmul %76, %5, %cst_58 {dimension_numbers = #tpu.dot_dimension_numbers<[1], [0], [0], [1], [0, 0, 1, 1], [], []>} : vector<3x128xf32>, vector<128x96xf32>, vector<3x96xf32> -> vector<3x96xf32>
    %78 = arith.addf %75, %77 : vector<3x96xf32>
    %79 = vector.extract_strided_slice %70 {offsets = [1, 0], sizes = [3, 128], strides = [1, 1]} : vector<4x128xf32> to vector<3x128xf32>
    %cst_59 = arith.constant dense<0.000000e+00> : vector<3x96xf32>
    %80 = tpu.matmul %79, %7, %cst_59 {dimension_numbers = #tpu.dot_dimension_numbers<[1], [0], [0], [1], [0, 0, 1, 1], [], []>} : vector<3x128xf32>, vector<128x96xf32>, vector<3x96xf32> -> vector<3x96xf32>
    %81 = arith.addf %78, %80 : vector<3x96xf32>
    %82 = vector.broadcast %8 : vector<1x96xf32> to vector<3x96xf32>
    %83 = arith.addf %81, %82 : vector<3x96xf32>
    %cst_60 = arith.constant 0.000000e+00 : f32
    %84 = vector.broadcast %cst_60 : f32 to vector<3x96xf32>
    %85 = arith.maximumf %83, %84 : vector<3x96xf32>
    %86 = vector.extract_strided_slice %85 {offsets = [0, 0], sizes = [3, 24], strides = [1, 1]} : vector<3x96xf32> to vector<3x24xf32>
    %87 = vector.extract_strided_slice %85 {offsets = [0, 24], sizes = [3, 24], strides = [1, 1]} : vector<3x96xf32> to vector<3x24xf32>
    %88 = arith.maximumf %86, %87 : vector<3x24xf32>
    %89 = vector.extract_strided_slice %85 {offsets = [0, 48], sizes = [3, 24], strides = [1, 1]} : vector<3x96xf32> to vector<3x24xf32>
    %90 = vector.extract_strided_slice %85 {offsets = [0, 72], sizes = [3, 24], strides = [1, 1]} : vector<3x96xf32> to vector<3x24xf32>
    %91 = arith.maximumf %89, %90 : vector<3x24xf32>
    %92 = arith.maximumf %88, %91 : vector<3x24xf32>
    %c0_61 = arith.constant 0 : index
    %c2_62 = arith.constant 2 : index
    %c0_63 = arith.constant 0 : index
    %c0_64 = arith.constant 0 : index
    %93 = vector.load %arg6[%c0_61, %c2_62, %c0_63, %c0_64] : memref<1x3x3x24xf32, #tpu.memory_space<vmem>>, vector<1x1x3x24xf32>
    %94 = vector.shape_cast %93 : vector<1x1x3x24xf32> to vector<3x24xf32>
    %95 = vector.shape_cast %92 : vector<3x24xf32> to vector<1x1x3x24xf32>
    tpu.vector_store %arg6[%c0_61, %c2_62, %c0_63, %c0_64], %95 {strides = array<i32>} : memref<1x3x3x24xf32, #tpu.memory_space<vmem>>, vector<1x1x3x24xf32>,
    return
  }
  func.func @transform_0(%arg0: i32, %arg1: i32) -> (i32, i32, i32, i32) {
    %c0_i32 = arith.constant 0 : i32
    %c0_i32_0 = arith.constant 0 : i32
    %c0_i32_1 = arith.constant 0 : i32
    return %arg0, %arg1, %c0_i32, %c0_i32_0 : i32, i32, i32, i32
  }
  func.func @transform_1(%arg0: i32, %arg1: i32) -> (i32, i32, i32, i32) {
    %c1_i32 = arith.constant 1 : i32
    %0 = arith.addi %arg1, %c1_i32 : i32
    %c3_i32 = arith.constant 3 : i32
    %1 = arith.muli %0, %c3_i32 : i32
    %c0_i32 = arith.constant 0 : i32
    %c0_i32_0 = arith.constant 0 : i32
    %c0_i32_1 = arith.constant 0 : i32
    return %arg0, %1, %c0_i32, %c0_i32_0 : i32, i32, i32, i32
  }
  func.func @transform_2(%arg0: i32, %arg1: i32) -> (i32, i32, i32, i32) {
    %c0_i32 = arith.constant 0 : i32
    %c0_i32_0 = arith.constant 0 : i32
    %c0_i32_1 = arith.constant 0 : i32
    %c0_i32_2 = arith.constant 0 : i32
    %c0_i32_3 = arith.constant 0 : i32
    return %c0_i32, %c0_i32_0, %c0_i32_1, %c0_i32_2 : i32, i32, i32, i32
  }
  func.func @transform_3(%arg0: i32, %arg1: i32) -> (i32, i32) {
    %c0_i32 = arith.constant 0 : i32
    %c0_i32_0 = arith.constant 0 : i32
    %c0_i32_1 = arith.constant 0 : i32
    return %c0_i32, %c0_i32_0 : i32, i32
  }
  func.func @transform_4(%arg0: i32, %arg1: i32) -> (i32, i32, i32, i32) {
    %c0_i32 = arith.constant 0 : i32
    %c0_i32_0 = arith.constant 0 : i32
    %c0_i32_1 = arith.constant 0 : i32
    return %arg0, %arg1, %c0_i32, %c0_i32_0 : i32, i32, i32, i32
  }
}

module attributes {stable_mosaic.version = 11 : i64} {
  func.func @_mlp_kernel(%arg0: i32, %arg1: memref<1x512xf32, #tpu.memory_space<vmem>>, %arg2: memref<512x256xbf16, #tpu.memory_space<vmem>>, %arg3: memref<1x256xf32, #tpu.memory_space<vmem>>, %arg4: memref<256x128xf32, #tpu.memory_space<vmem>>, %arg5: memref<1x128xf32, #tpu.memory_space<vmem>>, %arg6: memref<128x3xf32, #tpu.memory_space<vmem>>, %arg7: memref<1x3xf32, #tpu.memory_space<vmem>>, %arg8: memref<1x3xf32, #tpu.memory_space<vmem>>, %arg9: memref<1x256xf32, #tpu.memory_space<vmem>>) attributes {dimension_semantics = [#tpu.dimension_semantics<arbitrary>], iteration_bounds = array<i64: 1>, scalar_prefetch = 0 : i64, scratch_operands = 1 : i64, tpu.core_type = #tpu.core_type<tc>, window_params = [{transform_indices = @transform_0, window_bounds = array<i64: 1, 512>}, {transform_indices = @transform_1, window_bounds = array<i64: 512, 256>}, {pipeline_mode = #tpu.pipeline_mode<synchronous>, transform_indices = @transform_2, window_bounds = array<i64: 1, 256>}, {pipeline_mode = #tpu.pipeline_mode<synchronous>, transform_indices = @transform_3, window_bounds = array<i64: 256, 128>}, {pipeline_mode = #tpu.pipeline_mode<synchronous>, transform_indices = @transform_4, window_bounds = array<i64: 1, 128>}, {pipeline_mode = #tpu.pipeline_mode<synchronous>, transform_indices = @transform_5, window_bounds = array<i64: 128, 3>}, {pipeline_mode = #tpu.pipeline_mode<synchronous>, transform_indices = @transform_6, window_bounds = array<i64: 1, 3>}, {pipeline_mode = #tpu.pipeline_mode<synchronous>, transform_indices = @transform_7, window_bounds = array<i64: 1, 3>}]} {
    %c0_i32 = arith.constant 0 : i32
    %0 = arith.cmpi eq, %arg0, %c0_i32 : i32
    %1 = arith.extui %0 : i1 to i32
    %c0_i32_0 = arith.constant 0 : i32
    %2 = arith.cmpi ne, %1, %c0_i32_0 : i32
    scf.if %2 {
      %cst_10 = arith.constant 0.000000e+00 : f32
      %13 = vector.broadcast %cst_10 : f32 to vector<1x256xf32>
      %c0_11 = arith.constant 0 : index
      %c0_12 = arith.constant 0 : index
      %14 = vector.load %arg9[%c0_11, %c0_12] : memref<1x256xf32, #tpu.memory_space<vmem>>, vector<1x256xf32>
      tpu.vector_store %arg9[%c0_11, %c0_12], %13 {strides = array<i32>} : memref<1x256xf32, #tpu.memory_space<vmem>>, vector<1x256xf32>,
    } else {
    }
    %c0 = arith.constant 0 : index
    %c0_1 = arith.constant 0 : index
    %3 = vector.load %arg1[%c0, %c0_1] : memref<1x512xf32, #tpu.memory_space<vmem>>, vector<1x512xf32>
    %4 = arith.truncf %3 : vector<1x512xf32> to vector<1x512xbf16>
    %c0_2 = arith.constant 0 : index
    %c0_3 = arith.constant 0 : index
    %5 = vector.load %arg9[%c0_2, %c0_3] : memref<1x256xf32, #tpu.memory_space<vmem>>, vector<1x256xf32>
    %c0_4 = arith.constant 0 : index
    %c0_5 = arith.constant 0 : index
    %6 = vector.load %arg2[%c0_4, %c0_5] : memref<512x256xbf16, #tpu.memory_space<vmem>>, vector<512x256xbf16>
    %cst = arith.constant dense<0.000000e+00> : vector<1x256xf32>
    %7 = tpu.matmul %4, %6, %cst {dimension_numbers = #tpu.dot_dimension_numbers<[1], [0], [0], [1], [0, 0, 1, 1], [], []>} : vector<1x512xbf16>, vector<512x256xbf16>, vector<1x256xf32> -> vector<1x256xf32>
    %8 = arith.addf %5, %7 : vector<1x256xf32>
    %c0_6 = arith.constant 0 : index
    %c0_7 = arith.constant 0 : index
    %9 = vector.load %arg9[%c0_6, %c0_7] : memref<1x256xf32, #tpu.memory_space<vmem>>, vector<1x256xf32>
    tpu.vector_store %arg9[%c0_6, %c0_7], %8 {strides = array<i32>} : memref<1x256xf32, #tpu.memory_space<vmem>>, vector<1x256xf32>,
    %c0_i32_8 = arith.constant 0 : i32
    %10 = arith.cmpi eq, %arg0, %c0_i32_8 : i32
    %11 = arith.extui %10 : i1 to i32
    %c0_i32_9 = arith.constant 0 : i32
    %12 = arith.cmpi ne, %11, %c0_i32_9 : i32
    scf.if %12 {
      %c0_10 = arith.constant 0 : index
      %c0_11 = arith.constant 0 : index
      %13 = vector.load %arg9[%c0_10, %c0_11] : memref<1x256xf32, #tpu.memory_space<vmem>>, vector<1x256xf32>
      %c0_12 = arith.constant 0 : index
      %c0_13 = arith.constant 0 : index
      %14 = vector.load %arg3[%c0_12, %c0_13] : memref<1x256xf32, #tpu.memory_space<vmem>>, vector<1x256xf32>
      %15 = arith.addf %13, %14 : vector<1x256xf32>
      %cst_14 = arith.constant 0.000000e+00 : f32
      %16 = vector.broadcast %cst_14 : f32 to vector<1x256xf32>
      %17 = arith.maximumf %15, %16 : vector<1x256xf32>
      %c0_15 = arith.constant 0 : index
      %c0_16 = arith.constant 0 : index
      %18 = vector.load %arg4[%c0_15, %c0_16] : memref<256x128xf32, #tpu.memory_space<vmem>>, vector<256x128xf32>
      %cst_17 = arith.constant dense<0.000000e+00> : vector<1x128xf32>
      %19 = tpu.matmul %17, %18, %cst_17 {dimension_numbers = #tpu.dot_dimension_numbers<[1], [0], [0], [1], [0, 0, 1, 1], [], []>} : vector<1x256xf32>, vector<256x128xf32>, vector<1x128xf32> -> vector<1x128xf32>
      %c0_18 = arith.constant 0 : index
      %c0_19 = arith.constant 0 : index
      %20 = vector.load %arg5[%c0_18, %c0_19] : memref<1x128xf32, #tpu.memory_space<vmem>>, vector<1x128xf32>
      %21 = arith.addf %19, %20 : vector<1x128xf32>
      %cst_20 = arith.constant 0.000000e+00 : f32
      %22 = vector.broadcast %cst_20 : f32 to vector<1x128xf32>
      %23 = arith.maximumf %21, %22 : vector<1x128xf32>
      %c0_21 = arith.constant 0 : index
      %c0_22 = arith.constant 0 : index
      %24 = vector.load %arg6[%c0_21, %c0_22] : memref<128x3xf32, #tpu.memory_space<vmem>>, vector<128x3xf32>
      %cst_23 = arith.constant dense<0.000000e+00> : vector<1x3xf32>
      %25 = tpu.matmul %23, %24, %cst_23 {dimension_numbers = #tpu.dot_dimension_numbers<[1], [0], [0], [1], [0, 0, 1, 1], [], []>} : vector<1x128xf32>, vector<128x3xf32>, vector<1x3xf32> -> vector<1x3xf32>
      %c0_24 = arith.constant 0 : index
      %c0_25 = arith.constant 0 : index
      %26 = vector.load %arg7[%c0_24, %c0_25] : memref<1x3xf32, #tpu.memory_space<vmem>>, vector<1x3xf32>
      %27 = arith.addf %25, %26 : vector<1x3xf32>
      %cst_26 = arith.constant dense<0xFF800000> : vector<1xf32>
      %28 = vector.multi_reduction <maximumf>, %27, %cst_26 [1] : vector<1x3xf32> to vector<1xf32>
      %29 = vector.shape_cast %28 : vector<1xf32> to vector<1x1xf32>
      %30 = vector.broadcast %29 : vector<1x1xf32> to vector<1x3xf32>
      %31 = arith.subf %27, %30 : vector<1x3xf32>
      %32 = math.exp %31 : vector<1x3xf32>
      %33 = vector.broadcast %29 : vector<1x1xf32> to vector<1x3xf32>
      %34 = arith.subf %27, %33 : vector<1x3xf32>
      %cst_27 = arith.constant dense<0.000000e+00> : vector<1xf32>
      %35 = vector.multi_reduction <add>, %32, %cst_27 [1] : vector<1x3xf32> to vector<1xf32>
      %36 = vector.shape_cast %35 : vector<1xf32> to vector<1x1xf32>
      %37 = math.log %36 : vector<1x1xf32>
      %38 = vector.broadcast %37 : vector<1x1xf32> to vector<1x3xf32>
      %39 = arith.subf %34, %38 : vector<1x3xf32>
      %c0_28 = arith.constant 0 : index
      %c0_29 = arith.constant 0 : index
      %40 = vector.load %arg8[%c0_28, %c0_29] : memref<1x3xf32, #tpu.memory_space<vmem>>, vector<1x3xf32>
      tpu.vector_store %arg8[%c0_28, %c0_29], %39 {strides = array<i32>} : memref<1x3xf32, #tpu.memory_space<vmem>>, vector<1x3xf32>,
    } else {
    }
    return
  }
  func.func @transform_0(%arg0: i32) -> (i32, i32) {
    %c0_i32 = arith.constant 0 : i32
    %c0_i32_0 = arith.constant 0 : i32
    return %c0_i32, %arg0 : i32, i32
  }
  func.func @transform_1(%arg0: i32) -> (i32, i32) {
    %c0_i32 = arith.constant 0 : i32
    %c0_i32_0 = arith.constant 0 : i32
    return %arg0, %c0_i32 : i32, i32
  }
  func.func @transform_2(%arg0: i32) -> (i32, i32) {
    %c0_i32 = arith.constant 0 : i32
    %c0_i32_0 = arith.constant 0 : i32
    %c0_i32_1 = arith.constant 0 : i32
    return %c0_i32, %c0_i32_0 : i32, i32
  }
  func.func @transform_3(%arg0: i32) -> (i32, i32) {
    %c0_i32 = arith.constant 0 : i32
    %c0_i32_0 = arith.constant 0 : i32
    %c0_i32_1 = arith.constant 0 : i32
    return %c0_i32, %c0_i32_0 : i32, i32
  }
  func.func @transform_4(%arg0: i32) -> (i32, i32) {
    %c0_i32 = arith.constant 0 : i32
    %c0_i32_0 = arith.constant 0 : i32
    %c0_i32_1 = arith.constant 0 : i32
    return %c0_i32, %c0_i32_0 : i32, i32
  }
  func.func @transform_5(%arg0: i32) -> (i32, i32) {
    %c0_i32 = arith.constant 0 : i32
    %c0_i32_0 = arith.constant 0 : i32
    %c0_i32_1 = arith.constant 0 : i32
    return %c0_i32, %c0_i32_0 : i32, i32
  }
  func.func @transform_6(%arg0: i32) -> (i32, i32) {
    %c0_i32 = arith.constant 0 : i32
    %c0_i32_0 = arith.constant 0 : i32
    %c0_i32_1 = arith.constant 0 : i32
    return %c0_i32, %c0_i32_0 : i32, i32
  }
  func.func @transform_7(%arg0: i32) -> (i32, i32) {
    %c0_i32 = arith.constant 0 : i32
    %c0_i32_0 = arith.constant 0 : i32
    %c0_i32_1 = arith.constant 0 : i32
    return %c0_i32, %c0_i32_0 : i32, i32
  }
}

</mosaic_0001>

<llo_original>
// kernel: ic_model_forward.3
$region0: #{ic_model_forward.3}
  #allocation0 [shape = 'u32[]', space=smem, size = 0x4, offset = 0x4, fixed_abs, tag = 'smem constant byte address 0x4 - core index']
  #allocation1 [shape = 'u32[144,128]{1,0:T(1,128)}', space=vmem, size = 0x12000, scoped, tag = 'internal scratch']
  %s0 = inlined_call_operand.vmem [shape: f32[2,17,16,16], index: 0, kind: input, shape index: {}, may-alias: {0,1}]
  %s1 = inlined_call_operand.vmem [shape: f32[2,17,16,16], index: 1, kind: input, shape index: {}, may-alias: {0,1}]
  %s2 = inlined_call_operand.vmem [shape: f32[2,2,16,32], index: 2, kind: input, shape index: {}]
  %s3 = inlined_call_operand.vmem [shape: f32[1,32], index: 3, kind: input, shape index: {}]
  %s4 = inlined_call_operand.vmem [shape: f32[2,16,15,8], index: 4, kind: output, shape index: {}]
  %s5 = sld [smem:[#allocation0]]
  $region49: #{ic_model_forward.3} parent=0
    _
  %s7 = ssub.s32 1, %s5
  %s8 = scalar_select 0, %s7, %s5
  loop: start=0, step=1, limit=6
  $region2: #{ic_model_forward.3} parent=0 // loop_pre_header
    _
  $region3: #{ic_model_forward.3} parent=0 // loop_header
    %s10 = sphi 0, %s14
    %p11 = scmp.ge.s32.totalorder %s10, 6
    %s17 = sphi 0, %s29
    %s18 = sphi 0, %s25
    %s19 = sphi 0, %s17
    %s20 = sphi 0, %s18
    %s21 = sphi 0, %s19
    %s22 = sphi 0, %s20
    %s34 = sphi 0, %s36
    %s37 = sphi 0, %s34
    %s38 = sphi 0, %s37
    %s54 = sphi 0, %s38
    %s66 = sphi 0, %s68
    %s69 = sphi 0, %s66
    %s70 = sphi 0, %s69
    %s86 = sphi 0, %s70
    %s90 = sphi 0, %s90
    %s92 = sphi 0, %s90
    %s93 = sphi 0, %s92
    %s107 = sphi 0, %s93
    %s111 = sphi 0, %s111
    %s113 = sphi 0, %s111
    %s114 = sphi 0, %s113
    %s128 = sphi 0, %s114
    %s136 = sphi 0, %s138
    %s139 = sphi 0, %s136
    %s140 = sphi 0, %s139
    %s156 = sphi 0, %s140
  $region4: #{ic_model_forward.3} parent=0 // loop_header_branch
    %13 = sbr.rel (%p11) target = $region8
  $region5: #{ic_model_forward.3} parent=0 // loop_body
    %s15 = ssub.s32 %s10, 1
    %s16 = ssub.s32 %s10, 2
    %s23 = sadd.s32 1, %s18
    %p24 = scmp.ge.s32.totalorder %s23, 2
    %s25 = scalar_select %p24, 0, %s23
    %s26 = sadd.s32 1, %s17
    %s27 = scalar_select %p24, %s26, %s17
    %p28 = scmp.ge.s32.totalorder %s27, 2
    %s29 = scalar_select %p28, 0, %s27
    %s30 = ssub.s32 %s17, %s29
    %s31 = ssub.s32 %s18, %s25
    %s32 = sor.u32 %s30, %s31
    %p33 = scmp.eq.s32.totalorder %s32, 0
    %s35 = sadd.s32 %s34, 1
    %s36 = scalar_select %p33, %s34, %s35
    %p39 = pneg %p33
    %p40 = scmp.eq.s32.totalorder %s10, 3
    %p41 = por %p39, %p40
    %p42 = scmp.ne.s32.totalorder %s34, %s37
    %p43 = scmp.eq.s32.totalorder %s10, 0
    %p44 = por %p42, %p43
    %p45 = scmp.ne.s32.totalorder %s34, %s37
    %p46 = scmp.eq.s32.totalorder %s15, 3
    %p47 = por %p45, %p46
    %p48 = scmp.ne.s32.totalorder %s37, %s38
    %p49 = scmp.eq.s32.totalorder %s15, 0
    %p50 = por %p48, %p49
    %p51 = scmp.ne.s32.totalorder %s37, %s38
    %p52 = scmp.eq.s32.totalorder %s16, 3
    %p53 = por %p51, %p52
    %p55 = scmp.ne.s32.totalorder %s38, %s54
    %p56 = scmp.eq.s32.totalorder %s16, 0
    %p57 = por %p55, %p56
    %s58 = sadd.s32 %s18, 1
    %s59 = smul.u32 %s58, 8
    %s60 = sadd.s32 %s25, 1
    %s61 = smul.u32 %s60, 8
    %s62 = ssub.s32 %s17, %s29
    %s63 = ssub.s32 %s59, %s61
    %s64 = sor.u32 %s62, %s63
    %p65 = scmp.eq.s32.totalorder %s64, 0
    %s67 = sadd.s32 %s66, 1
    %s68 = scalar_select %p65, %s66, %s67
    %p71 = pneg %p65
    %p72 = scmp.eq.s32.totalorder %s10, 3
    %p73 = por %p71, %p72
    %p74 = scmp.ne.s32.totalorder %s66, %s69
    %p75 = scmp.eq.s32.totalorder %s10, 0
    %p76 = por %p74, %p75
    %p77 = scmp.ne.s32.totalorder %s66, %s69
    %p78 = scmp.eq.s32.totalorder %s15, 3
    %p79 = por %p77, %p78
    %p80 = scmp.ne.s32.totalorder %s69, %s70
    %p81 = scmp.eq.s32.totalorder %s15, 0
    %p82 = por %p80, %p81
    %p83 = scmp.ne.s32.totalorder %s69, %s70
    %p84 = scmp.eq.s32.totalorder %s16, 3
    %p85 = por %p83, %p84
    %p87 = scmp.ne.s32.totalorder %s70, %s86
    %p88 = scmp.eq.s32.totalorder %s16, 0
    %p89 = por %p87, %p88
    %s91 = sadd.s32 %s90, 1
    %p94 = scmp.eq.s32.totalorder %s10, 3
    %p95 = scmp.ne.s32.totalorder %s90, %s92
    %p96 = scmp.eq.s32.totalorder %s10, 0
    %p97 = por %p95, %p96
    %p98 = scmp.ne.s32.totalorder %s90, %s92
    %p99 = scmp.eq.s32.totalorder %s15, 3
    %p100 = por %p98, %p99
    %p101 = scmp.ne.s32.totalorder %s92, %s93
    %p102 = scmp.eq.s32.totalorder %s15, 0
    %p103 = por %p101, %p102
    %p104 = scmp.ne.s32.totalorder %s92, %s93
    %p105 = scmp.eq.s32.totalorder %s16, 3
    %p106 = por %p104, %p105
    %p108 = scmp.ne.s32.totalorder %s93, %s107
    %p109 = scmp.eq.s32.totalorder %s16, 0
    %p110 = por %p108, %p109
    %s112 = sadd.s32 %s111, 1
    %p115 = scmp.eq.s32.totalorder %s10, 3
    %p116 = scmp.ne.s32.totalorder %s111, %s113
    %p117 = scmp.eq.s32.totalorder %s10, 0
    %p118 = por %p116, %p117
    %p119 = scmp.ne.s32.totalorder %s111, %s113
    %p120 = scmp.eq.s32.totalorder %s15, 3
    %p121 = por %p119, %p120
    %p122 = scmp.ne.s32.totalorder %s113, %s114
    %p123 = scmp.eq.s32.totalorder %s15, 0
    %p124 = por %p122, %p123
    %p125 = scmp.ne.s32.totalorder %s113, %s114
    %p126 = scmp.eq.s32.totalorder %s16, 3
    %p127 = por %p125, %p126
    %p129 = scmp.ne.s32.totalorder %s114, %s128
    %p130 = scmp.eq.s32.totalorder %s16, 0
    %p131 = por %p129, %p130
    %s132 = ssub.s32 %s17, %s29
    %s133 = ssub.s32 %s18, %s25
    %s134 = sor.u32 %s132, %s133
    %p135 = scmp.eq.s32.totalorder %s134, 0
    %s137 = sadd.s32 %s136, 1
    %s138 = scalar_select %p135, %s136, %s137
    %p141 = pneg %p135
    %p142 = scmp.eq.s32.totalorder %s10, 3
    %p143 = por %p141, %p142
    %p144 = scmp.ne.s32.totalorder %s136, %s139
    %p145 = scmp.eq.s32.totalorder %s10, 0
    %p146 = por %p144, %p145
    %p147 = scmp.ne.s32.totalorder %s136, %s139
    %p148 = scmp.eq.s32.totalorder %s15, 3
    %p149 = por %p147, %p148
    %p150 = scmp.ne.s32.totalorder %s139, %s140
    %p151 = scmp.eq.s32.totalorder %s15, 0
    %p152 = por %p150, %p151
    %p153 = scmp.ne.s32.totalorder %s139, %s140
    %p154 = scmp.eq.s32.totalorder %s16, 3
    %p155 = por %p153, %p154
    %p157 = scmp.ne.s32.totalorder %s140, %s156
    %p158 = scmp.eq.s32.totalorder %s16, 0
    %p159 = por %p157, %p158
    %p160 = scmp.le.s32.totalorder 1, %s10
    %p161 = scmp.lt.s32.totalorder %s10, 5
    %p162 = pnand %p160, %p161
    %p163 = pneg %p162
    // Predicated region
    $region9: #{ic_model_forward.3} parent=5 // pred_check
      _
    $region10: #{ic_model_forward.3} parent=5 // pred_check_branch
      %165 = sbr.rel (%p162) target = $region12
    $region11: #{ic_model_forward.3} parent=5 // pred_region
      %s166 = ssub.s32 %s10, 1
      // Predicated region
      $region13: #{ic_model_forward.3} parent=11 // pred_check
        %p167 = pneg %p103
      $region14: #{ic_model_forward.3} parent=11 // pred_check_branch
        %169 = sbr.rel (%p167) target = $region16
      $region15: #{ic_model_forward.3} parent=11 // pred_region
        _
      $region16: #{ic_model_forward.3} parent=11 // pred_fallthru
        _
      // Predicated region
      $region17: #{ic_model_forward.3} parent=11 // pred_check
        %p170 = pneg %p124
      $region18: #{ic_model_forward.3} parent=11 // pred_check_branch
        %172 = sbr.rel (%p170) target = $region20
      $region19: #{ic_model_forward.3} parent=11 // pred_region
        _
      $region20: #{ic_model_forward.3} parent=11 // pred_fallthru
        _
    $region12: #{ic_model_forward.3} parent=5 // pred_fallthru
      _
    %p173 = scmp.lt.s32.totalorder %s10, 4
    // Predicated region
    $region21: #{ic_model_forward.3} parent=5 // pred_check
      %p174 = pneg %p173
    $region22: #{ic_model_forward.3} parent=5 // pred_check_branch
      %176 = sbr.rel (%p174) target = $region24
    $region23: #{ic_model_forward.3} parent=5 // pred_region
      // Predicated region
      $region25: #{ic_model_forward.3} parent=23 // pred_check
        %p177 = pneg %p44
      $region26: #{ic_model_forward.3} parent=23 // pred_check_branch
        %179 = sbr.rel (%p177) target = $region28
      $region27: #{ic_model_forward.3} parent=23 // pred_region
        %s180 = smul.u32 8, %s18
        %s181 = ssub.s32 17, %s180
        %p182 = scmp.lt.s32.totalorder %s181, 8
        %s183 = scalar_select %p182, %s181, 8
        %s184 = smul.u32 128, %s183
        %s185 = smul.u32 %s184, 2
        %p186 = scmp.lt.s32.totalorder %s17, 1
        %s187 = scalar_select %p186, %s17, 1
        %p188 = scmp.lt.s32.totalorder %s180, 16
        %s189 = scalar_select %p188, %s180, 16
        %s190 = smul.addr %s189, 2
        %s191 = smul.addr %s187, 34
        %s192 = sadd.s32 %s190, %s191
        %s193 = smul.addr %s192, 8
        %s194 = scalar_lea.vmem %s0, %s193
        %s195 = smul.u32 8, %s18
        %s196 = ssub.s32 17, %s195
        %p197 = scmp.lt.s32.totalorder %s196, 8
        %s198 = scalar_select %p197, %s196, 8
        %s199 = smul.u32 128, %s198
        %s200 = smul.u32 %s199, 2
      $region28: #{ic_model_forward.3} parent=23 // pred_fallthru
        _
      // Predicated region
      $region29: #{ic_model_forward.3} parent=23 // pred_check
        %p201 = pneg %p76
      $region30: #{ic_model_forward.3} parent=23 // pred_check_branch
        %203 = sbr.rel (%p201) target = $region32
      $region31: #{ic_model_forward.3} parent=23 // pred_region
        %s204 = sadd.s32 %s18, 1
        %s205 = smul.u32 %s204, 8
        %p206 = scmp.lt.s32.totalorder %s17, 1
        %s207 = scalar_select %p206, %s17, 1
        %p208 = scmp.lt.s32.totalorder %s205, 16
        %s209 = scalar_select %p208, %s205, 16
        %s210 = smul.addr %s209, 2
        %s211 = smul.addr %s207, 34
        %s212 = sadd.s32 %s210, %s211
        %s213 = smul.addr %s212, 8
        %s214 = scalar_lea.vmem %s1, %s213
        %s215 = sadd.s32 %s18, 1
        %s216 = smul.u32 %s215, 8
      $region32: #{ic_model_forward.3} parent=23 // pred_fallthru
        _
    $region24: #{ic_model_forward.3} parent=5 // pred_fallthru
      _
    %p217 = scmp.le.s32.totalorder 1, %s10
    %p218 = scmp.lt.s32.totalorder %s10, 5
    %p219 = pnand %p217, %p218
    %p220 = pneg %p219
    // Predicated region
    $region33: #{ic_model_forward.3} parent=5 // pred_check
      _
    $region34: #{ic_model_forward.3} parent=5 // pred_check_branch
      %222 = sbr.rel (%p219) target = $region36
    $region35: #{ic_model_forward.3} parent=5 // pred_region
      %s223 = ssub.s32 %s10, 1
      %s224 = smul.u32 8, %s20
      %s225 = ssub.s32 17, %s224
      %p226 = scmp.lt.s32.totalorder %s225, 8
      %s227 = scalar_select %p226, %s225, 8
      %s228 = smul.u32 128, %s227
      %s229 = smul.u32 %s228, 2
      %p230 = scmp.lt.s32.totalorder %s19, 1
      %s231 = scalar_select %p230, %s19, 1
      %p232 = scmp.lt.s32.totalorder %s224, 16
      %s233 = scalar_select %p232, %s224, 16
      %s234 = smul.addr %s233, 2
      %s235 = smul.addr %s231, 34
      %s236 = sadd.s32 %s234, %s235
      %s237 = smul.addr %s236, 8
      %s238 = scalar_lea.vmem %s0, %s237
      %p239 = pneg %p50
      %p240 = pneg %p47
      %s241 = sadd.s32 %s20, 1
      %s242 = smul.u32 %s241, 8
      %p243 = scmp.lt.s32.totalorder %s19, 1
      %s244 = scalar_select %p243, %s19, 1
      %p245 = scmp.lt.s32.totalorder %s242, 16
      %s246 = scalar_select %p245, %s242, 16
      %s247 = smul.addr %s246, 2
      %s248 = smul.addr %s244, 34
      %s249 = sadd.s32 %s247, %s248
      %s250 = smul.addr %s249, 8
      %s251 = scalar_lea.vmem %s1, %s250
      %p252 = pneg %p82
      %p253 = pneg %p79
      %p254 = pneg %p103
      %p255 = pneg %p100
      %p256 = pneg %p124
      %p257 = pneg %p121
      %p258 = pneg %p152
      %p259 = pneg %p149
      %s260 = smul.u32 8, %s20
      %p261 = scmp.lt.s32.totalorder %s19, 1
      %s262 = scalar_select %p261, %s19, 1
      %p263 = scmp.lt.s32.totalorder %s260, 15
      %s264 = scalar_select %p263, %s260, 15
      %s265 = smul.addr %s264, 2
      %s266 = smul.addr %s262, 32
      %s267 = sadd.s32 %s265, %s266
      %s268 = smul.addr %s267, 8
      %s269 = scalar_lea.vmem %s4, %s268
      %s270 = smul.u32 8, %s20
      %s271 = ssub.s32 17, %s270
      %p272 = scmp.lt.s32.totalorder %s271, 8
      %s273 = scalar_select %p272, %s271, 8
      %s274 = smul.u32 128, %s273
      %s275 = smul.u32 %s274, 2
      %p276 = scmp.lt.s32.totalorder %s19, 1
      %s277 = scalar_select %p276, %s19, 1
      %p278 = scmp.lt.s32.totalorder %s270, 16
      %s279 = scalar_select %p278, %s270, 16
      %s280 = smul.addr %s279, 2
      %s281 = smul.addr %s277, 34
      %s282 = sadd.s32 %s280, %s281
      %s283 = smul.addr %s282, 8
      %s284 = scalar_lea.vmem %s0, %s283
      %s285 = smul.u32 8, %s20
      %s286 = ssub.s32 17, %s285
      %p287 = scmp.lt.s32.totalorder %s286, 8
      %s288 = scalar_select %p287, %s286, 8
      %s289 = smul.u32 128, %s288
      %s290 = smul.u32 %s289, 2
      %s291 = sadd.s32 %s20, 1
      %s292 = smul.u32 %s291, 8
      %p293 = scmp.lt.s32.totalorder %s19, 1
      %s294 = scalar_select %p293, %s19, 1
      %p295 = scmp.lt.s32.totalorder %s292, 16
      %s296 = scalar_select %p295, %s292, 16
      %s297 = smul.addr %s296, 2
      %s298 = smul.addr %s294, 34
      %s299 = sadd.s32 %s297, %s298
      %s300 = smul.addr %s299, 8
      %s301 = scalar_lea.vmem %s1, %s300
      %s302 = sadd.s32 %s20, 1
      %s303 = smul.u32 %s302, 8
      %s304 = smul.u32 8, %s20
      %p305 = scmp.lt.s32.totalorder %s19, 1
      %s306 = scalar_select %p305, %s19, 1
      %p307 = scmp.lt.s32.totalorder %s304, 15
      %s308 = scalar_select %p307, %s304, 15
      %s309 = smul.addr %s308, 2
      %s310 = smul.addr %s306, 32
      %s311 = sadd.s32 %s309, %s310
      %s312 = smul.addr %s311, 8
      %s313 = scalar_lea.vmem %s4, %s312
      %s314 = smul.u32 8, %s20
      %v315 = vld [vmem:[%s2] sm:$0xff]
      %v316 = vld [vmem:[%s2 + $0x8] sm:$0xff]
      %s317 = scalar_lea.vmem %s2, 16
      %v318 = vld [vmem:[%s317] sm:$0xff]
      %v319 = vld [vmem:[%s317 + $0x8] sm:$0xff]
      %s320 = scalar_lea.vmem %s2, 32
      %v321 = vld [vmem:[%s320] sm:$0xff]
      %v322 = vld [vmem:[%s320 + $0x8] sm:$0xff]
      %s323 = scalar_lea.vmem %s2, 48
      %v324 = vld [vmem:[%s323] sm:$0xff]
      %v325 = vld [vmem:[%s323 + $0x8] sm:$0xff]
      %v326 = vld [vmem:[%s3] sm:$0x1]
      %v327 = vld [vmem:[%s284] sm:$0xff]
      %v328 = vld [vmem:[%s284 + $0x8] sm:$0xff]
      %s329 = scalar_lea.vmem %s284, 16
      %v330 = vld [vmem:[%s329] sm:$0xff]
      %v331 = vld [vmem:[%s329 + $0x8] sm:$0xff]
      %vm334 = vcmask 1046528
      %v335 = vrot.slane %v327, 1
      %v336 = vrot.slane %v328, 1
      %v337 = vsel %vm334, %v335, %v336
      %vm338 = vcmask 130048
      %v339 = vsel %vm338, %v337, 0
      %v341 = vsel %vm338, %v336, 0
      %343 = vmatprep.subr.mxu0 0.0
      %344 = vmatpush1.msra.mxu0 0.0
      %345 = vmatprep.subr.mxu0 0.0
      %346 = vmatpush1.msra.mxu0 0.0
      %347 = vmatprep.subr.mxu0 0.0
      %348 = vmatpush1.msra.mxu0 0.0
      %349 = vmatprep.subr.mxu0 0.0
      %350 = vmatpush1.msra.mxu0 0.0
      %351 = vmatprep.subr.mxu0 0.0
      %352 = vmatpush1.msra.mxu0 0.0
      %353 = vmatprep.subr.mxu0 0.0
      %354 = vmatpush1.msra.mxu0 0.0
      %355 = vmatprep.subr.mxu0 0.0
      %356 = vmatpush1.msra.mxu0 0.0
      %357 = vmatprep.subr.mxu0 0.0
      %358 = vmatpush1.msra.mxu0 0.0
      %359 = vmatprep.subr.mxu0 0.0
      %360 = vmatpush1.msra.mxu0 0.0
      %361 = vmatprep.subr.mxu0 0.0
      %362 = vmatpush1.msra.mxu0 0.0
      %363 = vmatprep.subr.mxu0 0.0
      %364 = vmatpush1.msra.mxu0 0.0
      %365 = vmatprep.subr.mxu0 0.0
      %366 = vmatpush1.msra.mxu0 0.0
      %367 = vmatprep.subr.mxu0 0.0
      %368 = vmatpush1.msra.mxu0 0.0
      %369 = vmatprep.subr.mxu0 0.0
      %370 = vmatpush1.msra.mxu0 0.0
      %371 = vmatprep.subr.mxu0 0.0
      %372 = vmatpush1.msra.mxu0 %v319
      %373 = vmatprep.subr.mxu0 0.0
      %374 = vmatpush1.msra.mxu0 %v318
      %375 = vmatprep.subr.mxu0 0.0
      %376 = vmatpush2.msra.mxu0 0.0
      %377 = vmatprep.subr.mxu0 0.0
      %378 = vmatpush2.msra.mxu0 0.0
      %379 = vmatprep.subr.mxu0 0.0
      %380 = vmatpush2.msra.mxu0 0.0
      %381 = vmatprep.subr.mxu0 0.0
      %382 = vmatpush2.msra.mxu0 0.0
      %383 = vmatprep.subr.mxu0 0.0
      %384 = vmatpush2.msra.mxu0 0.0
      %385 = vmatprep.subr.mxu0 0.0
      %386 = vmatpush2.msra.mxu0 0.0
      %387 = vmatprep.subr.mxu0 0.0
      %388 = vmatpush2.msra.mxu0 0.0
      %389 = vmatprep.subr.mxu0 0.0
      %390 = vmatpush2.msra.mxu0 0.0
      %391 = vmatprep.subr.mxu0 0.0
      %392 = vmatpush2.msra.mxu0 0.0
      %393 = vmatprep.subr.mxu0 0.0
      %394 = vmatpush2.msra.mxu0 0.0
      %395 = vmatprep.subr.mxu0 0.0
      %396 = vmatpush2.msra.mxu0 0.0
      %397 = vmatprep.subr.mxu0 0.0
      %398 = vmatpush2.msra.mxu0 0.0
      %399 = vmatprep.subr.mxu0 0.0
      %400 = vmatpush2.msra.mxu0 0.0
      %401 = vmatprep.subr.mxu0 0.0
      %402 = vmatpush2.msra.mxu0 0.0
      %403 = vmatprep.subr.mxu0 0.0
      %404 = vmatpush2.msra.mxu0 0.0
      %405 = vmatprep.subr.mxu0 0.0
      %406 = vmatpush2.msra.mxu0 0.0
      %407 = vmatprep.mubr.f32.mxu0 0.0
      %408 = vmatmul.mubr.f32.gmra.mxu0 %v339
      %v409 = vpop.f32.mrf.mxu0
      %v410 = vadd.f32 0.0, %v409
      %v411 = vpop.f32.mrf.mxu0
      %412 = vmatprep.mubr.f32.mxu0 0.0
      %413 = vmatmul.mubr.f32.gmra.mxu0 %v341
      %v414 = vpop.f32.mrf.mxu0
      %v415 = vadd.f32 0.0, %v414
      %v416 = vpop.f32.mrf.mxu0
      %417 = vdwg.mxu0
      %v418 = vsel %vm338, %v327, 0
      %v420 = vsel %vm338, %v328, 0
      %422 = vmatprep.subr.mxu0 0.0
      %423 = vmatpush1.msra.mxu0 0.0
      %424 = vmatprep.subr.mxu0 0.0
      %425 = vmatpush1.msra.mxu0 0.0
      %426 = vmatprep.subr.mxu0 0.0
      %427 = vmatpush1.msra.mxu0 0.0
      %428 = vmatprep.subr.mxu0 0.0
      %429 = vmatpush1.msra.mxu0 0.0
      %430 = vmatprep.subr.mxu0 0.0
      %431 = vmatpush1.msra.mxu0 0.0
      %432 = vmatprep.subr.mxu0 0.0
      %433 = vmatpush1.msra.mxu0 0.0
      %434 = vmatprep.subr.mxu0 0.0
      %435 = vmatpush1.msra.mxu0 0.0
      %436 = vmatprep.subr.mxu0 0.0
      %437 = vmatpush1.msra.mxu0 0.0
      %438 = vmatprep.subr.mxu0 0.0
      %439 = vmatpush1.msra.mxu0 0.0
      %440 = vmatprep.subr.mxu0 0.0
      %441 = vmatpush1.msra.mxu0 0.0
      %442 = vmatprep.subr.mxu0 0.0
      %443 = vmatpush1.msra.mxu0 0.0
      %444 = vmatprep.subr.mxu0 0.0
      %445 = vmatpush1.msra.mxu0 0.0
      %446 = vmatprep.subr.mxu0 0.0
      %447 = vmatpush1.msra.mxu0 0.0
      %448 = vmatprep.subr.mxu0 0.0
      %449 = vmatpush1.msra.mxu0 0.0
      %450 = vmatprep.subr.mxu0 0.0
      %451 = vmatpush1.msra.mxu0 %v316
      %452 = vmatprep.subr.mxu0 0.0
      %453 = vmatpush1.msra.mxu0 %v315
      %454 = vmatprep.subr.mxu0 0.0
      %455 = vmatpush2.msra.mxu0 0.0
      %456 = vmatprep.subr.mxu0 0.0
      %457 = vmatpush2.msra.mxu0 0.0
      %458 = vmatprep.subr.mxu0 0.0
      %459 = vmatpush2.msra.mxu0 0.0
      %460 = vmatprep.subr.mxu0 0.0
      %461 = vmatpush2.msra.mxu0 0.0
      %462 = vmatprep.subr.mxu0 0.0
      %463 = vmatpush2.msra.mxu0 0.0
      %464 = vmatprep.subr.mxu0 0.0
      %465 = vmatpush2.msra.mxu0 0.0
      %466 = vmatprep.subr.mxu0 0.0
      %467 = vmatpush2.msra.mxu0 0.0
      %468 = vmatprep.subr.mxu0 0.0
      %469 = vmatpush2.msra.mxu0 0.0
      %470 = vmatprep.subr.mxu0 0.0
      %471 = vmatpush2.msra.mxu0 0.0
      %472 = vmatprep.subr.mxu0 0.0
      %473 = vmatpush2.msra.mxu0 0.0
      %474 = vmatprep.subr.mxu0 0.0
      %475 = vmatpush2.msra.mxu0 0.0
      %476 = vmatprep.subr.mxu0 0.0
      %477 = vmatpush2.msra.mxu0 0.0
      %478 = vmatprep.subr.mxu0 0.0
      %479 = vmatpush2.msra.mxu0 0.0
      %480 = vmatprep.subr.mxu0 0.0
      %481 = vmatpush2.msra.mxu0 0.0
      %482 = vmatprep.subr.mxu0 0.0
      %483 = vmatpush2.msra.mxu0 0.0
      %484 = vmatprep.subr.mxu0 0.0
      %485 = vmatpush2.msra.mxu0 0.0
      %486 = vmatprep.mubr.f32.mxu0 0.0
      %487 = vmatmul.mubr.f32.gmra.mxu0 %v418
      %v488 = vpop.f32.mrf.mxu0
      %v489 = vadd.f32 %v410, %v488
      %v490 = vpop.f32.mrf.mxu0
      %491 = vmatprep.mubr.f32.mxu0 0.0
      %492 = vmatmul.mubr.f32.gmra.mxu0 %v420
      %v493 = vpop.f32.mrf.mxu0
      %v494 = vadd.f32 %v415, %v493
      %v495 = vpop.f32.mrf.mxu0
      %496 = vdwg.mxu0
      %v498 = vsel %vm338, %v330, 0
      %v501 = vsel %vm338, %v331, 0
      %503 = vmatprep.subr.mxu0 0.0
      %504 = vmatpush1.msra.mxu0 0.0
      %505 = vmatprep.subr.mxu0 0.0
      %506 = vmatpush1.msra.mxu0 0.0
      %507 = vmatprep.subr.mxu0 0.0
      %508 = vmatpush1.msra.mxu0 0.0
      %509 = vmatprep.subr.mxu0 0.0
      %510 = vmatpush1.msra.mxu0 0.0
      %511 = vmatprep.subr.mxu0 0.0
      %512 = vmatpush1.msra.mxu0 0.0
      %513 = vmatprep.subr.mxu0 0.0
      %514 = vmatpush1.msra.mxu0 0.0
      %515 = vmatprep.subr.mxu0 0.0
      %516 = vmatpush1.msra.mxu0 0.0
      %517 = vmatprep.subr.mxu0 0.0
      %518 = vmatpush1.msra.mxu0 0.0
      %519 = vmatprep.subr.mxu0 0.0
      %520 = vmatpush1.msra.mxu0 0.0
      %521 = vmatprep.subr.mxu0 0.0
      %522 = vmatpush1.msra.mxu0 0.0
      %523 = vmatprep.subr.mxu0 0.0
      %524 = vmatpush1.msra.mxu0 0.0
      %525 = vmatprep.subr.mxu0 0.0
      %526 = vmatpush1.msra.mxu0 0.0
      %527 = vmatprep.subr.mxu0 0.0
      %528 = vmatpush1.msra.mxu0 0.0
      %529 = vmatprep.subr.mxu0 0.0
      %530 = vmatpush1.msra.mxu0 0.0
      %531 = vmatprep.subr.mxu0 0.0
      %532 = vmatpush1.msra.mxu0 %v322
      %533 = vmatprep.subr.mxu0 0.0
      %534 = vmatpush1.msra.mxu0 %v321
      %535 = vmatprep.subr.mxu0 0.0
      %536 = vmatpush2.msra.mxu0 0.0
      %537 = vmatprep.subr.mxu0 0.0
      %538 = vmatpush2.msra.mxu0 0.0
      %539 = vmatprep.subr.mxu0 0.0
      %540 = vmatpush2.msra.mxu0 0.0
      %541 = vmatprep.subr.mxu0 0.0
      %542 = vmatpush2.msra.mxu0 0.0
      %543 = vmatprep.subr.mxu0 0.0
      %544 = vmatpush2.msra.mxu0 0.0
      %545 = vmatprep.subr.mxu0 0.0
      %546 = vmatpush2.msra.mxu0 0.0
      %547 = vmatprep.subr.mxu0 0.0
      %548 = vmatpush2.msra.mxu0 0.0
      %549 = vmatprep.subr.mxu0 0.0
      %550 = vmatpush2.msra.mxu0 0.0
      %551 = vmatprep.subr.mxu0 0.0
      %552 = vmatpush2.msra.mxu0 0.0
      %553 = vmatprep.subr.mxu0 0.0
      %554 = vmatpush2.msra.mxu0 0.0
      %555 = vmatprep.subr.mxu0 0.0
      %556 = vmatpush2.msra.mxu0 0.0
      %557 = vmatprep.subr.mxu0 0.0
      %558 = vmatpush2.msra.mxu0 0.0
      %559 = vmatprep.subr.mxu0 0.0
      %560 = vmatpush2.msra.mxu0 0.0
      %561 = vmatprep.subr.mxu0 0.0
      %562 = vmatpush2.msra.mxu0 0.0
      %563 = vmatprep.subr.mxu0 0.0
      %564 = vmatpush2.msra.mxu0 0.0
      %565 = vmatprep.subr.mxu0 0.0
      %566 = vmatpush2.msra.mxu0 0.0
      %567 = vmatprep.mubr.f32.mxu0 0.0
      %568 = vmatmul.mubr.f32.gmra.mxu0 %v498
      %v569 = vpop.f32.mrf.mxu0
      %v570 = vadd.f32 0.0, %v569
      %v571 = vpop.f32.mrf.mxu0
      %572 = vmatprep.mubr.f32.mxu0 0.0
      %573 = vmatmul.mubr.f32.gmra.mxu0 %v501
      %v574 = vpop.f32.mrf.mxu0
      %v575 = vadd.f32 0.0, %v574
      %v576 = vpop.f32.mrf.mxu0
      %577 = vdwg.mxu0
      %v578 = vadd.f32 %v489, %v570
      %v579 = vadd.f32 %v494, %v575
      %v580 = vrot.slane %v330, 1
      %v581 = vrot.slane %v331, 1
      %v582 = vsel %vm334, %v580, %v581
      %v583 = vsel %vm338, %v582, 0
      %v585 = vsel %vm338, %v581, 0
      %587 = vmatprep.subr.mxu0 0.0
      %588 = vmatpush1.msra.mxu0 0.0
      %589 = vmatprep.subr.mxu0 0.0
      %590 = vmatpush1.msra.mxu0 0.0
      %591 = vmatprep.subr.mxu0 0.0
      %592 = vmatpush1.msra.mxu0 0.0
      %593 = vmatprep.subr.mxu0 0.0
      %594 = vmatpush1.msra.mxu0 0.0
      %595 = vmatprep.subr.mxu0 0.0
      %596 = vmatpush1.msra.mxu0 0.0
      %597 = vmatprep.subr.mxu0 0.0
      %598 = vmatpush1.msra.mxu0 0.0
      %599 = vmatprep.subr.mxu0 0.0
      %600 = vmatpush1.msra.mxu0 0.0
      %601 = vmatprep.subr.mxu0 0.0
      %602 = vmatpush1.msra.mxu0 0.0
      %603 = vmatprep.subr.mxu0 0.0
      %604 = vmatpush1.msra.mxu0 0.0
      %605 = vmatprep.subr.mxu0 0.0
      %606 = vmatpush1.msra.mxu0 0.0
      %607 = vmatprep.subr.mxu0 0.0
      %608 = vmatpush1.msra.mxu0 0.0
      %609 = vmatprep.subr.mxu0 0.0
      %610 = vmatpush1.msra.mxu0 0.0
      %611 = vmatprep.subr.mxu0 0.0
      %612 = vmatpush1.msra.mxu0 0.0
      %613 = vmatprep.subr.mxu0 0.0
      %614 = vmatpush1.msra.mxu0 0.0
      %615 = vmatprep.subr.mxu0 0.0
      %616 = vmatpush1.msra.mxu0 %v325
      %617 = vmatprep.subr.mxu0 0.0
      %618 = vmatpush1.msra.mxu0 %v324
      %619 = vmatprep.subr.mxu0 0.0
      %620 = vmatpush2.msra.mxu0 0.0
      %621 = vmatprep.subr.mxu0 0.0
      %622 = vmatpush2.msra.mxu0 0.0
      %623 = vmatprep.subr.mxu0 0.0
      %624 = vmatpush2.msra.mxu0 0.0
      %625 = vmatprep.subr.mxu0 0.0
      %626 = vmatpush2.msra.mxu0 0.0
      %627 = vmatprep.subr.mxu0 0.0
      %628 = vmatpush2.msra.mxu0 0.0
      %629 = vmatprep.subr.mxu0 0.0
      %630 = vmatpush2.msra.mxu0 0.0
      %631 = vmatprep.subr.mxu0 0.0
      %632 = vmatpush2.msra.mxu0 0.0
      %633 = vmatprep.subr.mxu0 0.0
      %634 = vmatpush2.msra.mxu0 0.0
      %635 = vmatprep.subr.mxu0 0.0
      %636 = vmatpush2.msra.mxu0 0.0
      %637 = vmatprep.subr.mxu0 0.0
      %638 = vmatpush2.msra.mxu0 0.0
      %639 = vmatprep.subr.mxu0 0.0
      %640 = vmatpush2.msra.mxu0 0.0
      %641 = vmatprep.subr.mxu0 0.0
      %642 = vmatpush2.msra.mxu0 0.0
      %643 = vmatprep.subr.mxu0 0.0
      %644 = vmatpush2.msra.mxu0 0.0
      %645 = vmatprep.subr.mxu0 0.0
      %646 = vmatpush2.msra.mxu0 0.0
      %647 = vmatprep.subr.mxu0 0.0
      %648 = vmatpush2.msra.mxu0 0.0
      %649 = vmatprep.subr.mxu0 0.0
      %650 = vmatpush2.msra.mxu0 0.0
      %651 = vmatprep.mubr.f32.mxu0 0.0
      %652 = vmatmul.mubr.f32.gmra.mxu0 %v583
      %v653 = vpop.f32.mrf.mxu0
      %v654 = vadd.f32 0.0, %v653
      %v655 = vpop.f32.mrf.mxu0
      %656 = vmatprep.mubr.f32.mxu0 0.0
      %657 = vmatmul.mubr.f32.gmra.mxu0 %v585
      %v658 = vpop.f32.mrf.mxu0
      %v659 = vadd.f32 0.0, %v658
      %v660 = vpop.f32.mrf.mxu0
      %661 = vdwg.mxu0
      %v662 = vadd.f32 %v578, %v654
      %v663 = vadd.f32 %v579, %v659
      %v665 = vlaneseq
      %v666 = vshrl.u32 %v665, 7
      %v667 = vsub.s32 0, %v666
      %v668 = vrot.slane %v326, %v667
      %v670 = vadd.f32 %v662, %v668
      %v671 = vadd.f32 %v663, %v668
      %v672 = vmax.f32 %v670, 0.0
      %v673 = vmax.f32 %v671, 0.0
      %676 = vrot.lane.b32.xlu0 %v672, 120
      %v677 = vpop.permute.xlu0 %676
      %678 = vrot.lane.b32.xlu0 %v673, 120
      %v679 = vpop.permute.xlu0 %678
      %v682 = vmax.f32 %v672, %v677
      %v683 = vmax.f32 %v673, %v679
      %686 = vrot.lane.b32.xlu0 %v682, 112
      %v687 = vpop.permute.xlu0 %686
      %688 = vrot.lane.b32.xlu0 %v683, 112
      %v689 = vpop.permute.xlu0 %688
      %v692 = vmax.f32 %v682, %v687
      %v693 = vmax.f32 %v683, %v689
      %vm694 = vcmask 64512
      %695 = vst.msk [vmem:[%s313] sm:$0xff] %vm694, %v692
      %vm696 = vcmask 63488
      %697 = vst.msk [vmem:[%s313 + $0x8] sm:$0x7f] %vm696, %v693
      %v698 = vld [vmem:[%s329] sm:$0xff]
      %v699 = vld [vmem:[%s329 + $0x8] sm:$0xff]
      %s700 = scalar_lea.vmem %s284, 32
      %v701 = vld [vmem:[%s700] sm:$0xff]
      %v702 = vld [vmem:[%s700 + $0x8] sm:$0xff]
      %v705 = vrot.slane %v698, 1
      %v706 = vrot.slane %v699, 1
      %v707 = vsel %vm334, %v705, %v706
      %v708 = vsel %vm338, %v707, 0
      %v710 = vsel %vm338, %v706, 0
      %712 = vmatprep.subr.mxu0 0.0
      %713 = vmatpush1.msra.mxu0 0.0
      %714 = vmatprep.subr.mxu0 0.0
      %715 = vmatpush1.msra.mxu0 0.0
      %716 = vmatprep.subr.mxu0 0.0
      %717 = vmatpush1.msra.mxu0 0.0
      %718 = vmatprep.subr.mxu0 0.0
      %719 = vmatpush1.msra.mxu0 0.0
      %720 = vmatprep.subr.mxu0 0.0
      %721 = vmatpush1.msra.mxu0 0.0
      %722 = vmatprep.subr.mxu0 0.0
      %723 = vmatpush1.msra.mxu0 0.0
      %724 = vmatprep.subr.mxu0 0.0
      %725 = vmatpush1.msra.mxu0 0.0
      %726 = vmatprep.subr.mxu0 0.0
      %727 = vmatpush1.msra.mxu0 0.0
      %728 = vmatprep.subr.mxu0 0.0
      %729 = vmatpush1.msra.mxu0 0.0
      %730 = vmatprep.subr.mxu0 0.0
      %731 = vmatpush1.msra.mxu0 0.0
      %732 = vmatprep.subr.mxu0 0.0
      %733 = vmatpush1.msra.mxu0 0.0
      %734 = vmatprep.subr.mxu0 0.0
      %735 = vmatpush1.msra.mxu0 0.0
      %736 = vmatprep.subr.mxu0 0.0
      %737 = vmatpush1.msra.mxu0 0.0
      %738 = vmatprep.subr.mxu0 0.0
      %739 = vmatpush1.msra.mxu0 0.0
      %740 = vmatprep.subr.mxu0 0.0
      %741 = vmatpush1.msra.mxu0 %v319
      %742 = vmatprep.subr.mxu0 0.0
      %743 = vmatpush1.msra.mxu0 %v318
      %744 = vmatprep.subr.mxu0 0.0
      %745 = vmatpush2.msra.mxu0 0.0
      %746 = vmatprep.subr.mxu0 0.0
      %747 = vmatpush2.msra.mxu0 0.0
      %748 = vmatprep.subr.mxu0 0.0
      %749 = vmatpush2.msra.mxu0 0.0
      %750 = vmatprep.subr.mxu0 0.0
      %751 = vmatpush2.msra.mxu0 0.0
      %752 = vmatprep.subr.mxu0 0.0
      %753 = vmatpush2.msra.mxu0 0.0
      %754 = vmatprep.subr.mxu0 0.0
      %755 = vmatpush2.msra.mxu0 0.0
      %756 = vmatprep.subr.mxu0 0.0
      %757 = vmatpush2.msra.mxu0 0.0
      %758 = vmatprep.subr.mxu0 0.0
      %759 = vmatpush2.msra.mxu0 0.0
      %760 = vmatprep.subr.mxu0 0.0
      %761 = vmatpush2.msra.mxu0 0.0
      %762 = vmatprep.subr.mxu0 0.0
      %763 = vmatpush2.msra.mxu0 0.0
      %764 = vmatprep.subr.mxu0 0.0
      %765 = vmatpush2.msra.mxu0 0.0
      %766 = vmatprep.subr.mxu0 0.0
      %767 = vmatpush2.msra.mxu0 0.0
      %768 = vmatprep.subr.mxu0 0.0
      %769 = vmatpush2.msra.mxu0 0.0
      %770 = vmatprep.subr.mxu0 0.0
      %771 = vmatpush2.msra.mxu0 0.0
      %772 = vmatprep.subr.mxu0 0.0
      %773 = vmatpush2.msra.mxu0 0.0
      %774 = vmatprep.subr.mxu0 0.0
      %775 = vmatpush2.msra.mxu0 0.0
      %776 = vmatprep.mubr.f32.mxu0 0.0
      %777 = vmatmul.mubr.f32.gmra.mxu0 %v708
      %v778 = vpop.f32.mrf.mxu0
      %v779 = vadd.f32 0.0, %v778
      %v780 = vpop.f32.mrf.mxu0
      %781 = vmatprep.mubr.f32.mxu0 0.0
      %782 = vmatmul.mubr.f32.gmra.mxu0 %v710
      %v783 = vpop.f32.mrf.mxu0
      %v784 = vadd.f32 0.0, %v783
      %v785 = vpop.f32.mrf.mxu0
      %786 = vdwg.mxu0
      %v787 = vsel %vm338, %v698, 0
      %v789 = vsel %vm338, %v699, 0
      %791 = vmatprep.subr.mxu0 0.0
      %792 = vmatpush1.msra.mxu0 0.0
      %793 = vmatprep.subr.mxu0 0.0
      %794 = vmatpush1.msra.mxu0 0.0
      %795 = vmatprep.subr.mxu0 0.0
      %796 = vmatpush1.msra.mxu0 0.0
      %797 = vmatprep.subr.mxu0 0.0
      %798 = vmatpush1.msra.mxu0 0.0
      %799 = vmatprep.subr.mxu0 0.0
      %800 = vmatpush1.msra.mxu0 0.0
      %801 = vmatprep.subr.mxu0 0.0
      %802 = vmatpush1.msra.mxu0 0.0
      %803 = vmatprep.subr.mxu0 0.0
      %804 = vmatpush1.msra.mxu0 0.0
      %805 = vmatprep.subr.mxu0 0.0
      %806 = vmatpush1.msra.mxu0 0.0
      %807 = vmatprep.subr.mxu0 0.0
      %808 = vmatpush1.msra.mxu0 0.0
      %809 = vmatprep.subr.mxu0 0.0
      %810 = vmatpush1.msra.mxu0 0.0
      %811 = vmatprep.subr.mxu0 0.0
      %812 = vmatpush1.msra.mxu0 0.0
      %813 = vmatprep.subr.mxu0 0.0
      %814 = vmatpush1.msra.mxu0 0.0
      %815 = vmatprep.subr.mxu0 0.0
      %816 = vmatpush1.msra.mxu0 0.0
      %817 = vmatprep.subr.mxu0 0.0
      %818 = vmatpush1.msra.mxu0 0.0
      %819 = vmatprep.subr.mxu0 0.0
      %820 = vmatpush1.msra.mxu0 %v316
      %821 = vmatprep.subr.mxu0 0.0
      %822 = vmatpush1.msra.mxu0 %v315
      %823 = vmatprep.subr.mxu0 0.0
      %824 = vmatpush2.msra.mxu0 0.0
      %825 = vmatprep.subr.mxu0 0.0
      %826 = vmatpush2.msra.mxu0 0.0
      %827 = vmatprep.subr.mxu0 0.0
      %828 = vmatpush2.msra.mxu0 0.0
      %829 = vmatprep.subr.mxu0 0.0
      %830 = vmatpush2.msra.mxu0 0.0
      %831 = vmatprep.subr.mxu0 0.0
      %832 = vmatpush2.msra.mxu0 0.0
      %833 = vmatprep.subr.mxu0 0.0
      %834 = vmatpush2.msra.mxu0 0.0
      %835 = vmatprep.subr.mxu0 0.0
      %836 = vmatpush2.msra.mxu0 0.0
      %837 = vmatprep.subr.mxu0 0.0
      %838 = vmatpush2.msra.mxu0 0.0
      %839 = vmatprep.subr.mxu0 0.0
      %840 = vmatpush2.msra.mxu0 0.0
      %841 = vmatprep.subr.mxu0 0.0
      %842 = vmatpush2.msra.mxu0 0.0
      %843 = vmatprep.subr.mxu0 0.0
      %844 = vmatpush2.msra.mxu0 0.0
      %845 = vmatprep.subr.mxu0 0.0
      %846 = vmatpush2.msra.mxu0 0.0
      %847 = vmatprep.subr.mxu0 0.0
      %848 = vmatpush2.msra.mxu0 0.0
      %849 = vmatprep.subr.mxu0 0.0
      %850 = vmatpush2.msra.mxu0 0.0
      %851 = vmatprep.subr.mxu0 0.0
      %852 = vmatpush2.msra.mxu0 0.0
      %853 = vmatprep.subr.mxu0 0.0
      %854 = vmatpush2.msra.mxu0 0.0
      %855 = vmatprep.mubr.f32.mxu0 0.0
      %856 = vmatmul.mubr.f32.gmra.mxu0 %v787
      %v857 = vpop.f32.mrf.mxu0
      %v858 = vadd.f32 %v779, %v857
      %v859 = vpop.f32.mrf.mxu0
      %860 = vmatprep.mubr.f32.mxu0 0.0
      %861 = vmatmul.mubr.f32.gmra.mxu0 %v789
      %v862 = vpop.f32.mrf.mxu0
      %v863 = vadd.f32 %v784, %v862
      %v864 = vpop.f32.mrf.mxu0
      %865 = vdwg.mxu0
      %v867 = vsel %vm338, %v701, 0
      %v870 = vsel %vm338, %v702, 0
      %872 = vmatprep.subr.mxu0 0.0
      %873 = vmatpush1.msra.mxu0 0.0
      %874 = vmatprep.subr.mxu0 0.0
      %875 = vmatpush1.msra.mxu0 0.0
      %876 = vmatprep.subr.mxu0 0.0
      %877 = vmatpush1.msra.mxu0 0.0
      %878 = vmatprep.subr.mxu0 0.0
      %879 = vmatpush1.msra.mxu0 0.0
      %880 = vmatprep.subr.mxu0 0.0
      %881 = vmatpush1.msra.mxu0 0.0
      %882 = vmatprep.subr.mxu0 0.0
      %883 = vmatpush1.msra.mxu0 0.0
      %884 = vmatprep.subr.mxu0 0.0
      %885 = vmatpush1.msra.mxu0 0.0
      %886 = vmatprep.subr.mxu0 0.0
      %887 = vmatpush1.msra.mxu0 0.0
      %888 = vmatprep.subr.mxu0 0.0
      %889 = vmatpush1.msra.mxu0 0.0
      %890 = vmatprep.subr.mxu0 0.0
      %891 = vmatpush1.msra.mxu0 0.0
      %892 = vmatprep.subr.mxu0 0.0
      %893 = vmatpush1.msra.mxu0 0.0
      %894 = vmatprep.subr.mxu0 0.0
      %895 = vmatpush1.msra.mxu0 0.0
      %896 = vmatprep.subr.mxu0 0.0
      %897 = vmatpush1.msra.mxu0 0.0
      %898 = vmatprep.subr.mxu0 0.0
      %899 = vmatpush1.msra.mxu0 0.0
      %900 = vmatprep.subr.mxu0 0.0
      %901 = vmatpush1.msra.mxu0 %v322
      %902 = vmatprep.subr.mxu0 0.0
      %903 = vmatpush1.msra.mxu0 %v321
      %904 = vmatprep.subr.mxu0 0.0
      %905 = vmatpush2.msra.mxu0 0.0
      %906 = vmatprep.subr.mxu0 0.0
      %907 = vmatpush2.msra.mxu0 0.0
      %908 = vmatprep.subr.mxu0 0.0
      %909 = vmatpush2.msra.mxu0 0.0
      %910 = vmatprep.subr.mxu0 0.0
      %911 = vmatpush2.msra.mxu0 0.0
      %912 = vmatprep.subr.mxu0 0.0
      %913 = vmatpush2.msra.mxu0 0.0
      %914 = vmatprep.subr.mxu0 0.0
      %915 = vmatpush2.msra.mxu0 0.0
      %916 = vmatprep.subr.mxu0 0.0
      %917 = vmatpush2.msra.mxu0 0.0
      %918 = vmatprep.subr.mxu0 0.0
      %919 = vmatpush2.msra.mxu0 0.0
      %920 = vmatprep.subr.mxu0 0.0
      %921 = vmatpush2.msra.mxu0 0.0
      %922 = vmatprep.subr.mxu0 0.0
      %923 = vmatpush2.msra.mxu0 0.0
      %924 = vmatprep.subr.mxu0 0.0
      %925 = vmatpush2.msra.mxu0 0.0
      %926 = vmatprep.subr.mxu0 0.0
      %927 = vmatpush2.msra.mxu0 0.0
      %928 = vmatprep.subr.mxu0 0.0
      %929 = vmatpush2.msra.mxu0 0.0
      %930 = vmatprep.subr.mxu0 0.0
      %931 = vmatpush2.msra.mxu0 0.0
      %932 = vmatprep.subr.mxu0 0.0
      %933 = vmatpush2.msra.mxu0 0.0
      %934 = vmatprep.subr.mxu0 0.0
      %935 = vmatpush2.msra.mxu0 0.0
      %936 = vmatprep.mubr.f32.mxu0 0.0
      %937 = vmatmul.mubr.f32.gmra.mxu0 %v867
      %v938 = vpop.f32.mrf.mxu0
      %v939 = vadd.f32 0.0, %v938
      %v940 = vpop.f32.mrf.mxu0
      %941 = vmatprep.mubr.f32.mxu0 0.0
      %942 = vmatmul.mubr.f32.gmra.mxu0 %v870
      %v943 = vpop.f32.mrf.mxu0
      %v944 = vadd.f32 0.0, %v943
      %v945 = vpop.f32.mrf.mxu0
      %946 = vdwg.mxu0
      %v947 = vadd.f32 %v858, %v939
      %v948 = vadd.f32 %v863, %v944
      %v949 = vrot.slane %v701, 1
      %v950 = vrot.slane %v702, 1
      %v951 = vsel %vm334, %v949, %v950
      %v952 = vsel %vm338, %v951, 0
      %v954 = vsel %vm338, %v950, 0
      %956 = vmatprep.subr.mxu0 0.0
      %957 = vmatpush1.msra.mxu0 0.0
      %958 = vmatprep.subr.mxu0 0.0
      %959 = vmatpush1.msra.mxu0 0.0
      %960 = vmatprep.subr.mxu0 0.0
      %961 = vmatpush1.msra.mxu0 0.0
      %962 = vmatprep.subr.mxu0 0.0
      %963 = vmatpush1.msra.mxu0 0.0
      %964 = vmatprep.subr.mxu0 0.0
      %965 = vmatpush1.msra.mxu0 0.0
      %966 = vmatprep.subr.mxu0 0.0
      %967 = vmatpush1.msra.mxu0 0.0
      %968 = vmatprep.subr.mxu0 0.0
      %969 = vmatpush1.msra.mxu0 0.0
      %970 = vmatprep.subr.mxu0 0.0
      %971 = vmatpush1.msra.mxu0 0.0
      %972 = vmatprep.subr.mxu0 0.0
      %973 = vmatpush1.msra.mxu0 0.0
      %974 = vmatprep.subr.mxu0 0.0
      %975 = vmatpush1.msra.mxu0 0.0
      %976 = vmatprep.subr.mxu0 0.0
      %977 = vmatpush1.msra.mxu0 0.0
      %978 = vmatprep.subr.mxu0 0.0
      %979 = vmatpush1.msra.mxu0 0.0
      %980 = vmatprep.subr.mxu0 0.0
      %981 = vmatpush1.msra.mxu0 0.0
      %982 = vmatprep.subr.mxu0 0.0
      %983 = vmatpush1.msra.mxu0 0.0
      %984 = vmatprep.subr.mxu0 0.0
      %985 = vmatpush1.msra.mxu0 %v325
      %986 = vmatprep.subr.mxu0 0.0
      %987 = vmatpush1.msra.mxu0 %v324
      %988 = vmatprep.subr.mxu0 0.0
      %989 = vmatpush2.msra.mxu0 0.0
      %990 = vmatprep.subr.mxu0 0.0
      %991 = vmatpush2.msra.mxu0 0.0
      %992 = vmatprep.subr.mxu0 0.0
      %993 = vmatpush2.msra.mxu0 0.0
      %994 = vmatprep.subr.mxu0 0.0
      %995 = vmatpush2.msra.mxu0 0.0
      %996 = vmatprep.subr.mxu0 0.0
      %997 = vmatpush2.msra.mxu0 0.0
      %998 = vmatprep.subr.mxu0 0.0
      %999 = vmatpush2.msra.mxu0 0.0
      %1000 = vmatprep.subr.mxu0 0.0
      %1001 = vmatpush2.msra.mxu0 0.0
      %1002 = vmatprep.subr.mxu0 0.0
      %1003 = vmatpush2.msra.mxu0 0.0
      %1004 = vmatprep.subr.mxu0 0.0
      %1005 = vmatpush2.msra.mxu0 0.0
      %1006 = vmatprep.subr.mxu0 0.0
      %1007 = vmatpush2.msra.mxu0 0.0
      %1008 = vmatprep.subr.mxu0 0.0
      %1009 = vmatpush2.msra.mxu0 0.0
      %1010 = vmatprep.subr.mxu0 0.0
      %1011 = vmatpush2.msra.mxu0 0.0
      %1012 = vmatprep.subr.mxu0 0.0
      %1013 = vmatpush2.msra.mxu0 0.0
      %1014 = vmatprep.subr.mxu0 0.0
      %1015 = vmatpush2.msra.mxu0 0.0
      %1016 = vmatprep.subr.mxu0 0.0
      %1017 = vmatpush2.msra.mxu0 0.0
      %1018 = vmatprep.subr.mxu0 0.0
      %1019 = vmatpush2.msra.mxu0 0.0
      %1020 = vmatprep.mubr.f32.mxu0 0.0
      %1021 = vmatmul.mubr.f32.gmra.mxu0 %v952
      %v1022 = vpop.f32.mrf.mxu0
      %v1023 = vadd.f32 0.0, %v1022
      %v1024 = vpop.f32.mrf.mxu0
      %1025 = vmatprep.mubr.f32.mxu0 0.0
      %1026 = vmatmul.mubr.f32.gmra.mxu0 %v954
      %v1027 = vpop.f32.mrf.mxu0
      %v1028 = vadd.f32 0.0, %v1027
      %v1029 = vpop.f32.mrf.mxu0
      %1030 = vdwg.mxu0
      %v1031 = vadd.f32 %v947, %v1023
      %v1032 = vadd.f32 %v948, %v1028
      %v1033 = vadd.f32 %v1031, %v668
      %v1034 = vadd.f32 %v1032, %v668
      %v1035 = vmax.f32 %v1033, 0.0
      %v1036 = vmax.f32 %v1034, 0.0
      %1039 = vrot.lane.b32.xlu0 %v1035, 120
      %v1040 = vpop.permute.xlu0 %1039
      %1041 = vrot.lane.b32.xlu0 %v1036, 120
      %v1042 = vpop.permute.xlu0 %1041
      %v1045 = vmax.f32 %v1035, %v1040
      %v1046 = vmax.f32 %v1036, %v1042
      %1049 = vrot.lane.b32.xlu0 %v1045, 112
      %v1050 = vpop.permute.xlu0 %1049
      %1051 = vrot.lane.b32.xlu0 %v1046, 112
      %v1052 = vpop.permute.xlu0 %1051
      %v1055 = vmax.f32 %v1045, %v1050
      %v1056 = vmax.f32 %v1046, %v1052
      %s1057 = scalar_lea.vmem %s313, 16
      %1058 = vst.msk [vmem:[%s1057] sm:$0xff] %vm694, %v1055
      %1059 = vst.msk [vmem:[%s1057 + $0x8] sm:$0x7f] %vm696, %v1056
      %v1060 = vld [vmem:[%s700] sm:$0xff]
      %v1061 = vld [vmem:[%s700 + $0x8] sm:$0xff]
      %s1062 = scalar_lea.vmem %s284, 48
      %v1063 = vld [vmem:[%s1062] sm:$0xff]
      %v1064 = vld [vmem:[%s1062 + $0x8] sm:$0xff]
      %v1067 = vrot.slane %v1060, 1
      %v1068 = vrot.slane %v1061, 1
      %v1069 = vsel %vm334, %v1067, %v1068
      %v1070 = vsel %vm338, %v1069, 0
      %v1072 = vsel %vm338, %v1068, 0
      %1074 = vmatprep.subr.mxu0 0.0
      %1075 = vmatpush1.msra.mxu0 0.0
      %1076 = vmatprep.subr.mxu0 0.0
      %1077 = vmatpush1.msra.mxu0 0.0
      %1078 = vmatprep.subr.mxu0 0.0
      %1079 = vmatpush1.msra.mxu0 0.0
      %1080 = vmatprep.subr.mxu0 0.0
      %1081 = vmatpush1.msra.mxu0 0.0
      %1082 = vmatprep.subr.mxu0 0.0
      %1083 = vmatpush1.msra.mxu0 0.0
      %1084 = vmatprep.subr.mxu0 0.0
      %1085 = vmatpush1.msra.mxu0 0.0
      %1086 = vmatprep.subr.mxu0 0.0
      %1087 = vmatpush1.msra.mxu0 0.0
      %1088 = vmatprep.subr.mxu0 0.0
      %1089 = vmatpush1.msra.mxu0 0.0
      %1090 = vmatprep.subr.mxu0 0.0
      %1091 = vmatpush1.msra.mxu0 0.0
      %1092 = vmatprep.subr.mxu0 0.0
      %1093 = vmatpush1.msra.mxu0 0.0
      %1094 = vmatprep.subr.mxu0 0.0
      %1095 = vmatpush1.msra.mxu0 0.0
      %1096 = vmatprep.subr.mxu0 0.0
      %1097 = vmatpush1.msra.mxu0 0.0
      %1098 = vmatprep.subr.mxu0 0.0
      %1099 = vmatpush1.msra.mxu0 0.0
      %1100 = vmatprep.subr.mxu0 0.0
      %1101 = vmatpush1.msra.mxu0 0.0
      %1102 = vmatprep.subr.mxu0 0.0
      %1103 = vmatpush1.msra.mxu0 %v319
      %1104 = vmatprep.subr.mxu0 0.0
      %1105 = vmatpush1.msra.mxu0 %v318
      %1106 = vmatprep.subr.mxu0 0.0
      %1107 = vmatpush2.msra.mxu0 0.0
      %1108 = vmatprep.subr.mxu0 0.0
      %1109 = vmatpush2.msra.mxu0 0.0
      %1110 = vmatprep.subr.mxu0 0.0
      %1111 = vmatpush2.msra.mxu0 0.0
      %1112 = vmatprep.subr.mxu0 0.0
      %1113 = vmatpush2.msra.mxu0 0.0
      %1114 = vmatprep.subr.mxu0 0.0
      %1115 = vmatpush2.msra.mxu0 0.0
      %1116 = vmatprep.subr.mxu0 0.0
      %1117 = vmatpush2.msra.mxu0 0.0
      %1118 = vmatprep.subr.mxu0 0.0
      %1119 = vmatpush2.msra.mxu0 0.0
      %1120 = vmatprep.subr.mxu0 0.0
      %1121 = vmatpush2.msra.mxu0 0.0
      %1122 = vmatprep.subr.mxu0 0.0
      %1123 = vmatpush2.msra.mxu0 0.0
      %1124 = vmatprep.subr.mxu0 0.0
      %1125 = vmatpush2.msra.mxu0 0.0
      %1126 = vmatprep.subr.mxu0 0.0
      %1127 = vmatpush2.msra.mxu0 0.0
      %1128 = vmatprep.subr.mxu0 0.0
      %1129 = vmatpush2.msra.mxu0 0.0
      %1130 = vmatprep.subr.mxu0 0.0
      %1131 = vmatpush2.msra.mxu0 0.0
      %1132 = vmatprep.subr.mxu0 0.0
      %1133 = vmatpush2.msra.mxu0 0.0
      %1134 = vmatprep.subr.mxu0 0.0
      %1135 = vmatpush2.msra.mxu0 0.0
      %1136 = vmatprep.subr.mxu0 0.0
      %1137 = vmatpush2.msra.mxu0 0.0
      %1138 = vmatprep.mubr.f32.mxu0 0.0
      %1139 = vmatmul.mubr.f32.gmra.mxu0 %v1070
      %v1140 = vpop.f32.mrf.mxu0
      %v1141 = vadd.f32 0.0, %v1140
      %v1142 = vpop.f32.mrf.mxu0
      %1143 = vmatprep.mubr.f32.mxu0 0.0
      %1144 = vmatmul.mubr.f32.gmra.mxu0 %v1072
      %v1145 = vpop.f32.mrf.mxu0
      %v1146 = vadd.f32 0.0, %v1145
      %v1147 = vpop.f32.mrf.mxu0
      %1148 = vdwg.mxu0
      %v1149 = vsel %vm338, %v1060, 0
      %v1151 = vsel %vm338, %v1061, 0
      %1153 = vmatprep.subr.mxu0 0.0
      %1154 = vmatpush1.msra.mxu0 0.0
      %1155 = vmatprep.subr.mxu0 0.0
      %1156 = vmatpush1.msra.mxu0 0.0
      %1157 = vmatprep.subr.mxu0 0.0
      %1158 = vmatpush1.msra.mxu0 0.0
      %1159 = vmatprep.subr.mxu0 0.0
      %1160 = vmatpush1.msra.mxu0 0.0
      %1161 = vmatprep.subr.mxu0 0.0
      %1162 = vmatpush1.msra.mxu0 0.0
      %1163 = vmatprep.subr.mxu0 0.0
      %1164 = vmatpush1.msra.mxu0 0.0
      %1165 = vmatprep.subr.mxu0 0.0
      %1166 = vmatpush1.msra.mxu0 0.0
      %1167 = vmatprep.subr.mxu0 0.0
      %1168 = vmatpush1.msra.mxu0 0.0
      %1169 = vmatprep.subr.mxu0 0.0
      %1170 = vmatpush1.msra.mxu0 0.0
      %1171 = vmatprep.subr.mxu0 0.0
      %1172 = vmatpush1.msra.mxu0 0.0
      %1173 = vmatprep.subr.mxu0 0.0
      %1174 = vmatpush1.msra.mxu0 0.0
      %1175 = vmatprep.subr.mxu0 0.0
      %1176 = vmatpush1.msra.mxu0 0.0
      %1177 = vmatprep.subr.mxu0 0.0
      %1178 = vmatpush1.msra.mxu0 0.0
      %1179 = vmatprep.subr.mxu0 0.0
      %1180 = vmatpush1.msra.mxu0 0.0
      %1181 = vmatprep.subr.mxu0 0.0
      %1182 = vmatpush1.msra.mxu0 %v316
      %1183 = vmatprep.subr.mxu0 0.0
      %1184 = vmatpush1.msra.mxu0 %v315
      %1185 = vmatprep.subr.mxu0 0.0
      %1186 = vmatpush2.msra.mxu0 0.0
      %1187 = vmatprep.subr.mxu0 0.0
      %1188 = vmatpush2.msra.mxu0 0.0
      %1189 = vmatprep.subr.mxu0 0.0
      %1190 = vmatpush2.msra.mxu0 0.0
      %1191 = vmatprep.subr.mxu0 0.0
      %1192 = vmatpush2.msra.mxu0 0.0
      %1193 = vmatprep.subr.mxu0 0.0
      %1194 = vmatpush2.msra.mxu0 0.0
      %1195 = vmatprep.subr.mxu0 0.0
      %1196 = vmatpush2.msra.mxu0 0.0
      %1197 = vmatprep.subr.mxu0 0.0
      %1198 = vmatpush2.msra.mxu0 0.0
      %1199 = vmatprep.subr.mxu0 0.0
      %1200 = vmatpush2.msra.mxu0 0.0
      %1201 = vmatprep.subr.mxu0 0.0
      %1202 = vmatpush2.msra.mxu0 0.0
      %1203 = vmatprep.subr.mxu0 0.0
      %1204 = vmatpush2.msra.mxu0 0.0
      %1205 = vmatprep.subr.mxu0 0.0
      %1206 = vmatpush2.msra.mxu0 0.0
      %1207 = vmatprep.subr.mxu0 0.0
      %1208 = vmatpush2.msra.mxu0 0.0
      %1209 = vmatprep.subr.mxu0 0.0
      %1210 = vmatpush2.msra.mxu0 0.0
      %1211 = vmatprep.subr.mxu0 0.0
      %1212 = vmatpush2.msra.mxu0 0.0
      %1213 = vmatprep.subr.mxu0 0.0
      %1214 = vmatpush2.msra.mxu0 0.0
      %1215 = vmatprep.subr.mxu0 0.0
      %1216 = vmatpush2.msra.mxu0 0.0
      %1217 = vmatprep.mubr.f32.mxu0 0.0
      %1218 = vmatmul.mubr.f32.gmra.mxu0 %v1149
      %v1219 = vpop.f32.mrf.mxu0
      %v1220 = vadd.f32 %v1141, %v1219
      %v1221 = vpop.f32.mrf.mxu0
      %1222 = vmatprep.mubr.f32.mxu0 0.0
      %1223 = vmatmul.mubr.f32.gmra.mxu0 %v1151
      %v1224 = vpop.f32.mrf.mxu0
      %v1225 = vadd.f32 %v1146, %v1224
      %v1226 = vpop.f32.mrf.mxu0
      %1227 = vdwg.mxu0
      %v1229 = vsel %vm338, %v1063, 0
      %v1232 = vsel %vm338, %v1064, 0
      %1234 = vmatprep.subr.mxu0 0.0
      %1235 = vmatpush1.msra.mxu0 0.0
      %1236 = vmatprep.subr.mxu0 0.0
      %1237 = vmatpush1.msra.mxu0 0.0
      %1238 = vmatprep.subr.mxu0 0.0
      %1239 = vmatpush1.msra.mxu0 0.0
      %1240 = vmatprep.subr.mxu0 0.0
      %1241 = vmatpush1.msra.mxu0 0.0
      %1242 = vmatprep.subr.mxu0 0.0
      %1243 = vmatpush1.msra.mxu0 0.0
      %1244 = vmatprep.subr.mxu0 0.0
      %1245 = vmatpush1.msra.mxu0 0.0
      %1246 = vmatprep.subr.mxu0 0.0
      %1247 = vmatpush1.msra.mxu0 0.0
      %1248 = vmatprep.subr.mxu0 0.0
      %1249 = vmatpush1.msra.mxu0 0.0
      %1250 = vmatprep.subr.mxu0 0.0
      %1251 = vmatpush1.msra.mxu0 0.0
      %1252 = vmatprep.subr.mxu0 0.0
      %1253 = vmatpush1.msra.mxu0 0.0
      %1254 = vmatprep.subr.mxu0 0.0
      %1255 = vmatpush1.msra.mxu0 0.0
      %1256 = vmatprep.subr.mxu0 0.0
      %1257 = vmatpush1.msra.mxu0 0.0
      %1258 = vmatprep.subr.mxu0 0.0
      %1259 = vmatpush1.msra.mxu0 0.0
      %1260 = vmatprep.subr.mxu0 0.0
      %1261 = vmatpush1.msra.mxu0 0.0
      %1262 = vmatprep.subr.mxu0 0.0
      %1263 = vmatpush1.msra.mxu0 %v322
      %1264 = vmatprep.subr.mxu0 0.0
      %1265 = vmatpush1.msra.mxu0 %v321
      %1266 = vmatprep.subr.mxu0 0.0
      %1267 = vmatpush2.msra.mxu0 0.0
      %1268 = vmatprep.subr.mxu0 0.0
      %1269 = vmatpush2.msra.mxu0 0.0
      %1270 = vmatprep.subr.mxu0 0.0
      %1271 = vmatpush2.msra.mxu0 0.0
      %1272 = vmatprep.subr.mxu0 0.0
      %1273 = vmatpush2.msra.mxu0 0.0
      %1274 = vmatprep.subr.mxu0 0.0
      %1275 = vmatpush2.msra.mxu0 0.0
      %1276 = vmatprep.subr.mxu0 0.0
      %1277 = vmatpush2.msra.mxu0 0.0
      %1278 = vmatprep.subr.mxu0 0.0
      %1279 = vmatpush2.msra.mxu0 0.0
      %1280 = vmatprep.subr.mxu0 0.0
      %1281 = vmatpush2.msra.mxu0 0.0
      %1282 = vmatprep.subr.mxu0 0.0
      %1283 = vmatpush2.msra.mxu0 0.0
      %1284 = vmatprep.subr.mxu0 0.0
      %1285 = vmatpush2.msra.mxu0 0.0
      %1286 = vmatprep.subr.mxu0 0.0
      %1287 = vmatpush2.msra.mxu0 0.0
      %1288 = vmatprep.subr.mxu0 0.0
      %1289 = vmatpush2.msra.mxu0 0.0
      %1290 = vmatprep.subr.mxu0 0.0
      %1291 = vmatpush2.msra.mxu0 0.0
      %1292 = vmatprep.subr.mxu0 0.0
      %1293 = vmatpush2.msra.mxu0 0.0
      %1294 = vmatprep.subr.mxu0 0.0
      %1295 = vmatpush2.msra.mxu0 0.0
      %1296 = vmatprep.subr.mxu0 0.0
      %1297 = vmatpush2.msra.mxu0 0.0
      %1298 = vmatprep.mubr.f32.mxu0 0.0
      %1299 = vmatmul.mubr.f32.gmra.mxu0 %v1229
      %v1300 = vpop.f32.mrf.mxu0
      %v1301 = vadd.f32 0.0, %v1300
      %v1302 = vpop.f32.mrf.mxu0
      %1303 = vmatprep.mubr.f32.mxu0 0.0
      %1304 = vmatmul.mubr.f32.gmra.mxu0 %v1232
      %v1305 = vpop.f32.mrf.mxu0
      %v1306 = vadd.f32 0.0, %v1305
      %v1307 = vpop.f32.mrf.mxu0
      %1308 = vdwg.mxu0
      %v1309 = vadd.f32 %v1220, %v1301
      %v1310 = vadd.f32 %v1225, %v1306
      %v1311 = vrot.slane %v1063, 1
      %v1312 = vrot.slane %v1064, 1
      %v1313 = vsel %vm334, %v1311, %v1312
      %v1314 = vsel %vm338, %v1313, 0
      %v1316 = vsel %vm338, %v1312, 0
      %1318 = vmatprep.subr.mxu0 0.0
      %1319 = vmatpush1.msra.mxu0 0.0
      %1320 = vmatprep.subr.mxu0 0.0
      %1321 = vmatpush1.msra.mxu0 0.0
      %1322 = vmatprep.subr.mxu0 0.0
      %1323 = vmatpush1.msra.mxu0 0.0
      %1324 = vmatprep.subr.mxu0 0.0
      %1325 = vmatpush1.msra.mxu0 0.0
      %1326 = vmatprep.subr.mxu0 0.0
      %1327 = vmatpush1.msra.mxu0 0.0
      %1328 = vmatprep.subr.mxu0 0.0
      %1329 = vmatpush1.msra.mxu0 0.0
      %1330 = vmatprep.subr.mxu0 0.0
      %1331 = vmatpush1.msra.mxu0 0.0
      %1332 = vmatprep.subr.mxu0 0.0
      %1333 = vmatpush1.msra.mxu0 0.0
      %1334 = vmatprep.subr.mxu0 0.0
      %1335 = vmatpush1.msra.mxu0 0.0
      %1336 = vmatprep.subr.mxu0 0.0
      %1337 = vmatpush1.msra.mxu0 0.0
      %1338 = vmatprep.subr.mxu0 0.0
      %1339 = vmatpush1.msra.mxu0 0.0
      %1340 = vmatprep.subr.mxu0 0.0
      %1341 = vmatpush1.msra.mxu0 0.0
      %1342 = vmatprep.subr.mxu0 0.0
      %1343 = vmatpush1.msra.mxu0 0.0
      %1344 = vmatprep.subr.mxu0 0.0
      %1345 = vmatpush1.msra.mxu0 0.0
      %1346 = vmatprep.subr.mxu0 0.0
      %1347 = vmatpush1.msra.mxu0 %v325
      %1348 = vmatprep.subr.mxu0 0.0
      %1349 = vmatpush1.msra.mxu0 %v324
      %1350 = vmatprep.subr.mxu0 0.0
      %1351 = vmatpush2.msra.mxu0 0.0
      %1352 = vmatprep.subr.mxu0 0.0
      %1353 = vmatpush2.msra.mxu0 0.0
      %1354 = vmatprep.subr.mxu0 0.0
      %1355 = vmatpush2.msra.mxu0 0.0
      %1356 = vmatprep.subr.mxu0 0.0
      %1357 = vmatpush2.msra.mxu0 0.0
      %1358 = vmatprep.subr.mxu0 0.0
      %1359 = vmatpush2.msra.mxu0 0.0
      %1360 = vmatprep.subr.mxu0 0.0
      %1361 = vmatpush2.msra.mxu0 0.0
      %1362 = vmatprep.subr.mxu0 0.0
      %1363 = vmatpush2.msra.mxu0 0.0
      %1364 = vmatprep.subr.mxu0 0.0
      %1365 = vmatpush2.msra.mxu0 0.0
      %1366 = vmatprep.subr.mxu0 0.0
      %1367 = vmatpush2.msra.mxu0 0.0
      %1368 = vmatprep.subr.mxu0 0.0
      %1369 = vmatpush2.msra.mxu0 0.0
      %1370 = vmatprep.subr.mxu0 0.0
      %1371 = vmatpush2.msra.mxu0 0.0
      %1372 = vmatprep.subr.mxu0 0.0
      %1373 = vmatpush2.msra.mxu0 0.0
      %1374 = vmatprep.subr.mxu0 0.0
      %1375 = vmatpush2.msra.mxu0 0.0
      %1376 = vmatprep.subr.mxu0 0.0
      %1377 = vmatpush2.msra.mxu0 0.0
      %1378 = vmatprep.subr.mxu0 0.0
      %1379 = vmatpush2.msra.mxu0 0.0
      %1380 = vmatprep.subr.mxu0 0.0
      %1381 = vmatpush2.msra.mxu0 0.0
      %1382 = vmatprep.mubr.f32.mxu0 0.0
      %1383 = vmatmul.mubr.f32.gmra.mxu0 %v1314
      %v1384 = vpop.f32.mrf.mxu0
      %v1385 = vadd.f32 0.0, %v1384
      %v1386 = vpop.f32.mrf.mxu0
      %1387 = vmatprep.mubr.f32.mxu0 0.0
      %1388 = vmatmul.mubr.f32.gmra.mxu0 %v1316
      %v1389 = vpop.f32.mrf.mxu0
      %v1390 = vadd.f32 0.0, %v1389
      %v1391 = vpop.f32.mrf.mxu0
      %1392 = vdwg.mxu0
      %v1393 = vadd.f32 %v1309, %v1385
      %v1394 = vadd.f32 %v1310, %v1390
      %v1395 = vadd.f32 %v1393, %v668
      %v1396 = vadd.f32 %v1394, %v668
      %v1397 = vmax.f32 %v1395, 0.0
      %v1398 = vmax.f32 %v1396, 0.0
      %1401 = vrot.lane.b32.xlu0 %v1397, 120
      %v1402 = vpop.permute.xlu0 %1401
      %1403 = vrot.lane.b32.xlu0 %v1398, 120
      %v1404 = vpop.permute.xlu0 %1403
      %v1407 = vmax.f32 %v1397, %v1402
      %v1408 = vmax.f32 %v1398, %v1404
      %1411 = vrot.lane.b32.xlu0 %v1407, 112
      %v1412 = vpop.permute.xlu0 %1411
      %1413 = vrot.lane.b32.xlu0 %v1408, 112
      %v1414 = vpop.permute.xlu0 %1413
      %v1417 = vmax.f32 %v1407, %v1412
      %v1418 = vmax.f32 %v1408, %v1414
      %s1419 = scalar_lea.vmem %s313, 32
      %1420 = vst.msk [vmem:[%s1419] sm:$0xff] %vm694, %v1417
      %1421 = vst.msk [vmem:[%s1419 + $0x8] sm:$0x7f] %vm696, %v1418
      %v1422 = vld [vmem:[%s1062] sm:$0xff]
      %v1423 = vld [vmem:[%s1062 + $0x8] sm:$0xff]
      %s1424 = scalar_lea.vmem %s284, 64
      %v1425 = vld [vmem:[%s1424] sm:$0xff]
      %v1426 = vld [vmem:[%s1424 + $0x8] sm:$0xff]
      %v1429 = vrot.slane %v1422, 1
      %v1430 = vrot.slane %v1423, 1
      %v1431 = vsel %vm334, %v1429, %v1430
      %v1432 = vsel %vm338, %v1431, 0
      %v1434 = vsel %vm338, %v1430, 0
      %1436 = vmatprep.subr.mxu0 0.0
      %1437 = vmatpush1.msra.mxu0 0.0
      %1438 = vmatprep.subr.mxu0 0.0
      %1439 = vmatpush1.msra.mxu0 0.0
      %1440 = vmatprep.subr.mxu0 0.0
      %1441 = vmatpush1.msra.mxu0 0.0
      %1442 = vmatprep.subr.mxu0 0.0
      %1443 = vmatpush1.msra.mxu0 0.0
      %1444 = vmatprep.subr.mxu0 0.0
      %1445 = vmatpush1.msra.mxu0 0.0
      %1446 = vmatprep.subr.mxu0 0.0
      %1447 = vmatpush1.msra.mxu0 0.0
      %1448 = vmatprep.subr.mxu0 0.0
      %1449 = vmatpush1.msra.mxu0 0.0
      %1450 = vmatprep.subr.mxu0 0.0
      %1451 = vmatpush1.msra.mxu0 0.0
      %1452 = vmatprep.subr.mxu0 0.0
      %1453 = vmatpush1.msra.mxu0 0.0
      %1454 = vmatprep.subr.mxu0 0.0
      %1455 = vmatpush1.msra.mxu0 0.0
      %1456 = vmatprep.subr.mxu0 0.0
      %1457 = vmatpush1.msra.mxu0 0.0
      %1458 = vmatprep.subr.mxu0 0.0
      %1459 = vmatpush1.msra.mxu0 0.0
      %1460 = vmatprep.subr.mxu0 0.0
      %1461 = vmatpush1.msra.mxu0 0.0
      %1462 = vmatprep.subr.mxu0 0.0
      %1463 = vmatpush1.msra.mxu0 0.0
      %1464 = vmatprep.subr.mxu0 0.0
      %1465 = vmatpush1.msra.mxu0 %v319
      %1466 = vmatprep.subr.mxu0 0.0
      %1467 = vmatpush1.msra.mxu0 %v318
      %1468 = vmatprep.subr.mxu0 0.0
      %1469 = vmatpush2.msra.mxu0 0.0
      %1470 = vmatprep.subr.mxu0 0.0
      %1471 = vmatpush2.msra.mxu0 0.0
      %1472 = vmatprep.subr.mxu0 0.0
      %1473 = vmatpush2.msra.mxu0 0.0
      %1474 = vmatprep.subr.mxu0 0.0
      %1475 = vmatpush2.msra.mxu0 0.0
      %1476 = vmatprep.subr.mxu0 0.0
      %1477 = vmatpush2.msra.mxu0 0.0
      %1478 = vmatprep.subr.mxu0 0.0
      %1479 = vmatpush2.msra.mxu0 0.0
      %1480 = vmatprep.subr.mxu0 0.0
      %1481 = vmatpush2.msra.mxu0 0.0
      %1482 = vmatprep.subr.mxu0 0.0
      %1483 = vmatpush2.msra.mxu0 0.0
      %1484 = vmatprep.subr.mxu0 0.0
      %1485 = vmatpush2.msra.mxu0 0.0
      %1486 = vmatprep.subr.mxu0 0.0
      %1487 = vmatpush2.msra.mxu0 0.0
      %1488 = vmatprep.subr.mxu0 0.0
      %1489 = vmatpush2.msra.mxu0 0.0
      %1490 = vmatprep.subr.mxu0 0.0
      %1491 = vmatpush2.msra.mxu0 0.0
      %1492 = vmatprep.subr.mxu0 0.0
      %1493 = vmatpush2.msra.mxu0 0.0
      %1494 = vmatprep.subr.mxu0 0.0
      %1495 = vmatpush2.msra.mxu0 0.0
      %1496 = vmatprep.subr.mxu0 0.0
      %1497 = vmatpush2.msra.mxu0 0.0
      %1498 = vmatprep.subr.mxu0 0.0
      %1499 = vmatpush2.msra.mxu0 0.0
      %1500 = vmatprep.mubr.f32.mxu0 0.0
      %1501 = vmatmul.mubr.f32.gmra.mxu0 %v1432
      %v1502 = vpop.f32.mrf.mxu0
      %v1503 = vadd.f32 0.0, %v1502
      %v1504 = vpop.f32.mrf.mxu0
      %1505 = vmatprep.mubr.f32.mxu0 0.0
      %1506 = vmatmul.mubr.f32.gmra.mxu0 %v1434
      %v1507 = vpop.f32.mrf.mxu0
      %v1508 = vadd.f32 0.0, %v1507
      %v1509 = vpop.f32.mrf.mxu0
      %1510 = vdwg.mxu0
      %v1511 = vsel %vm338, %v1422, 0
      %v1513 = vsel %vm338, %v1423, 0
      %1515 = vmatprep.subr.mxu0 0.0
      %1516 = vmatpush1.msra.mxu0 0.0
      %1517 = vmatprep.subr.mxu0 0.0
      %1518 = vmatpush1.msra.mxu0 0.0
      %1519 = vmatprep.subr.mxu0 0.0
      %1520 = vmatpush1.msra.mxu0 0.0
      %1521 = vmatprep.subr.mxu0 0.0
      %1522 = vmatpush1.msra.mxu0 0.0
      %1523 = vmatprep.subr.mxu0 0.0
      %1524 = vmatpush1.msra.mxu0 0.0
      %1525 = vmatprep.subr.mxu0 0.0
      %1526 = vmatpush1.msra.mxu0 0.0
      %1527 = vmatprep.subr.mxu0 0.0
      %1528 = vmatpush1.msra.mxu0 0.0
      %1529 = vmatprep.subr.mxu0 0.0
      %1530 = vmatpush1.msra.mxu0 0.0
      %1531 = vmatprep.subr.mxu0 0.0
      %1532 = vmatpush1.msra.mxu0 0.0
      %1533 = vmatprep.subr.mxu0 0.0
      %1534 = vmatpush1.msra.mxu0 0.0
      %1535 = vmatprep.subr.mxu0 0.0
      %1536 = vmatpush1.msra.mxu0 0.0
      %1537 = vmatprep.subr.mxu0 0.0
      %1538 = vmatpush1.msra.mxu0 0.0
      %1539 = vmatprep.subr.mxu0 0.0
      %1540 = vmatpush1.msra.mxu0 0.0
      %1541 = vmatprep.subr.mxu0 0.0
      %1542 = vmatpush1.msra.mxu0 0.0
      %1543 = vmatprep.subr.mxu0 0.0
      %1544 = vmatpush1.msra.mxu0 %v316
      %1545 = vmatprep.subr.mxu0 0.0
      %1546 = vmatpush1.msra.mxu0 %v315
      %1547 = vmatprep.subr.mxu0 0.0
      %1548 = vmatpush2.msra.mxu0 0.0
      %1549 = vmatprep.subr.mxu0 0.0
      %1550 = vmatpush2.msra.mxu0 0.0
      %1551 = vmatprep.subr.mxu0 0.0
      %1552 = vmatpush2.msra.mxu0 0.0
      %1553 = vmatprep.subr.mxu0 0.0
      %1554 = vmatpush2.msra.mxu0 0.0
      %1555 = vmatprep.subr.mxu0 0.0
      %1556 = vmatpush2.msra.mxu0 0.0
      %1557 = vmatprep.subr.mxu0 0.0
      %1558 = vmatpush2.msra.mxu0 0.0
      %1559 = vmatprep.subr.mxu0 0.0
      %1560 = vmatpush2.msra.mxu0 0.0
      %1561 = vmatprep.subr.mxu0 0.0
      %1562 = vmatpush2.msra.mxu0 0.0
      %1563 = vmatprep.subr.mxu0 0.0
      %1564 = vmatpush2.msra.mxu0 0.0
      %1565 = vmatprep.subr.mxu0 0.0
      %1566 = vmatpush2.msra.mxu0 0.0
      %1567 = vmatprep.subr.mxu0 0.0
      %1568 = vmatpush2.msra.mxu0 0.0
      %1569 = vmatprep.subr.mxu0 0.0
      %1570 = vmatpush2.msra.mxu0 0.0
      %1571 = vmatprep.subr.mxu0 0.0
      %1572 = vmatpush2.msra.mxu0 0.0
      %1573 = vmatprep.subr.mxu0 0.0
      %1574 = vmatpush2.msra.mxu0 0.0
      %1575 = vmatprep.subr.mxu0 0.0
      %1576 = vmatpush2.msra.mxu0 0.0
      %1577 = vmatprep.subr.mxu0 0.0
      %1578 = vmatpush2.msra.mxu0 0.0
      %1579 = vmatprep.mubr.f32.mxu0 0.0
      %1580 = vmatmul.mubr.f32.gmra.mxu0 %v1511
      %v1581 = vpop.f32.mrf.mxu0
      %v1582 = vadd.f32 %v1503, %v1581
      %v1583 = vpop.f32.mrf.mxu0
      %1584 = vmatprep.mubr.f32.mxu0 0.0
      %1585 = vmatmul.mubr.f32.gmra.mxu0 %v1513
      %v1586 = vpop.f32.mrf.mxu0
      %v1587 = vadd.f32 %v1508, %v1586
      %v1588 = vpop.f32.mrf.mxu0
      %1589 = vdwg.mxu0
      %v1591 = vsel %vm338, %v1425, 0
      %v1594 = vsel %vm338, %v1426, 0
      %1596 = vmatprep.subr.mxu0 0.0
      %1597 = vmatpush1.msra.mxu0 0.0
      %1598 = vmatprep.subr.mxu0 0.0
      %1599 = vmatpush1.msra.mxu0 0.0
      %1600 = vmatprep.subr.mxu0 0.0
      %1601 = vmatpush1.msra.mxu0 0.0
      %1602 = vmatprep.subr.mxu0 0.0
      %1603 = vmatpush1.msra.mxu0 0.0
      %1604 = vmatprep.subr.mxu0 0.0
      %1605 = vmatpush1.msra.mxu0 0.0
      %1606 = vmatprep.subr.mxu0 0.0
      %1607 = vmatpush1.msra.mxu0 0.0
      %1608 = vmatprep.subr.mxu0 0.0
      %1609 = vmatpush1.msra.mxu0 0.0
      %1610 = vmatprep.subr.mxu0 0.0
      %1611 = vmatpush1.msra.mxu0 0.0
      %1612 = vmatprep.subr.mxu0 0.0
      %1613 = vmatpush1.msra.mxu0 0.0
      %1614 = vmatprep.subr.mxu0 0.0
      %1615 = vmatpush1.msra.mxu0 0.0
      %1616 = vmatprep.subr.mxu0 0.0
      %1617 = vmatpush1.msra.mxu0 0.0
      %1618 = vmatprep.subr.mxu0 0.0
      %1619 = vmatpush1.msra.mxu0 0.0
      %1620 = vmatprep.subr.mxu0 0.0
      %1621 = vmatpush1.msra.mxu0 0.0
      %1622 = vmatprep.subr.mxu0 0.0
      %1623 = vmatpush1.msra.mxu0 0.0
      %1624 = vmatprep.subr.mxu0 0.0
      %1625 = vmatpush1.msra.mxu0 %v322
      %1626 = vmatprep.subr.mxu0 0.0
      %1627 = vmatpush1.msra.mxu0 %v321
      %1628 = vmatprep.subr.mxu0 0.0
      %1629 = vmatpush2.msra.mxu0 0.0
      %1630 = vmatprep.subr.mxu0 0.0
      %1631 = vmatpush2.msra.mxu0 0.0
      %1632 = vmatprep.subr.mxu0 0.0
      %1633 = vmatpush2.msra.mxu0 0.0
      %1634 = vmatprep.subr.mxu0 0.0
      %1635 = vmatpush2.msra.mxu0 0.0
      %1636 = vmatprep.subr.mxu0 0.0
      %1637 = vmatpush2.msra.mxu0 0.0
      %1638 = vmatprep.subr.mxu0 0.0
      %1639 = vmatpush2.msra.mxu0 0.0
      %1640 = vmatprep.subr.mxu0 0.0
      %1641 = vmatpush2.msra.mxu0 0.0
      %1642 = vmatprep.subr.mxu0 0.0
      %1643 = vmatpush2.msra.mxu0 0.0
      %1644 = vmatprep.subr.mxu0 0.0
      %1645 = vmatpush2.msra.mxu0 0.0
      %1646 = vmatprep.subr.mxu0 0.0
      %1647 = vmatpush2.msra.mxu0 0.0
      %1648 = vmatprep.subr.mxu0 0.0
      %1649 = vmatpush2.msra.mxu0 0.0
      %1650 = vmatprep.subr.mxu0 0.0
      %1651 = vmatpush2.msra.mxu0 0.0
      %1652 = vmatprep.subr.mxu0 0.0
      %1653 = vmatpush2.msra.mxu0 0.0
      %1654 = vmatprep.subr.mxu0 0.0
      %1655 = vmatpush2.msra.mxu0 0.0
      %1656 = vmatprep.subr.mxu0 0.0
      %1657 = vmatpush2.msra.mxu0 0.0
      %1658 = vmatprep.subr.mxu0 0.0
      %1659 = vmatpush2.msra.mxu0 0.0
      %1660 = vmatprep.mubr.f32.mxu0 0.0
      %1661 = vmatmul.mubr.f32.gmra.mxu0 %v1591
      %v1662 = vpop.f32.mrf.mxu0
      %v1663 = vadd.f32 0.0, %v1662
      %v1664 = vpop.f32.mrf.mxu0
      %1665 = vmatprep.mubr.f32.mxu0 0.0
      %1666 = vmatmul.mubr.f32.gmra.mxu0 %v1594
      %v1667 = vpop.f32.mrf.mxu0
      %v1668 = vadd.f32 0.0, %v1667
      %v1669 = vpop.f32.mrf.mxu0
      %1670 = vdwg.mxu0
      %v1671 = vadd.f32 %v1582, %v1663
      %v1672 = vadd.f32 %v1587, %v1668
      %v1673 = vrot.slane %v1425, 1
      %v1674 = vrot.slane %v1426, 1
      %v1675 = vsel %vm334, %v1673, %v1674
      %v1676 = vsel %vm338, %v1675, 0
      %v1678 = vsel %vm338, %v1674, 0
      %1680 = vmatprep.subr.mxu0 0.0
      %1681 = vmatpush1.msra.mxu0 0.0
      %1682 = vmatprep.subr.mxu0 0.0
      %1683 = vmatpush1.msra.mxu0 0.0
      %1684 = vmatprep.subr.mxu0 0.0
      %1685 = vmatpush1.msra.mxu0 0.0
      %1686 = vmatprep.subr.mxu0 0.0
      %1687 = vmatpush1.msra.mxu0 0.0
      %1688 = vmatprep.subr.mxu0 0.0
      %1689 = vmatpush1.msra.mxu0 0.0
      %1690 = vmatprep.subr.mxu0 0.0
      %1691 = vmatpush1.msra.mxu0 0.0
      %1692 = vmatprep.subr.mxu0 0.0
      %1693 = vmatpush1.msra.mxu0 0.0
      %1694 = vmatprep.subr.mxu0 0.0
      %1695 = vmatpush1.msra.mxu0 0.0
      %1696 = vmatprep.subr.mxu0 0.0
      %1697 = vmatpush1.msra.mxu0 0.0
      %1698 = vmatprep.subr.mxu0 0.0
      %1699 = vmatpush1.msra.mxu0 0.0
      %1700 = vmatprep.subr.mxu0 0.0
      %1701 = vmatpush1.msra.mxu0 0.0
      %1702 = vmatprep.subr.mxu0 0.0
      %1703 = vmatpush1.msra.mxu0 0.0
      %1704 = vmatprep.subr.mxu0 0.0
      %1705 = vmatpush1.msra.mxu0 0.0
      %1706 = vmatprep.subr.mxu0 0.0
      %1707 = vmatpush1.msra.mxu0 0.0
      %1708 = vmatprep.subr.mxu0 0.0
      %1709 = vmatpush1.msra.mxu0 %v325
      %1710 = vmatprep.subr.mxu0 0.0
      %1711 = vmatpush1.msra.mxu0 %v324
      %1712 = vmatprep.subr.mxu0 0.0
      %1713 = vmatpush2.msra.mxu0 0.0
      %1714 = vmatprep.subr.mxu0 0.0
      %1715 = vmatpush2.msra.mxu0 0.0
      %1716 = vmatprep.subr.mxu0 0.0
      %1717 = vmatpush2.msra.mxu0 0.0
      %1718 = vmatprep.subr.mxu0 0.0
      %1719 = vmatpush2.msra.mxu0 0.0
      %1720 = vmatprep.subr.mxu0 0.0
      %1721 = vmatpush2.msra.mxu0 0.0
      %1722 = vmatprep.subr.mxu0 0.0
      %1723 = vmatpush2.msra.mxu0 0.0
      %1724 = vmatprep.subr.mxu0 0.0
      %1725 = vmatpush2.msra.mxu0 0.0
      %1726 = vmatprep.subr.mxu0 0.0
      %1727 = vmatpush2.msra.mxu0 0.0
      %1728 = vmatprep.subr.mxu0 0.0
      %1729 = vmatpush2.msra.mxu0 0.0
      %1730 = vmatprep.subr.mxu0 0.0
      %1731 = vmatpush2.msra.mxu0 0.0
      %1732 = vmatprep.subr.mxu0 0.0
      %1733 = vmatpush2.msra.mxu0 0.0
      %1734 = vmatprep.subr.mxu0 0.0
      %1735 = vmatpush2.msra.mxu0 0.0
      %1736 = vmatprep.subr.mxu0 0.0
      %1737 = vmatpush2.msra.mxu0 0.0
      %1738 = vmatprep.subr.mxu0 0.0
      %1739 = vmatpush2.msra.mxu0 0.0
      %1740 = vmatprep.subr.mxu0 0.0
      %1741 = vmatpush2.msra.mxu0 0.0
      %1742 = vmatprep.subr.mxu0 0.0
      %1743 = vmatpush2.msra.mxu0 0.0
      %1744 = vmatprep.mubr.f32.mxu0 0.0
      %1745 = vmatmul.mubr.f32.gmra.mxu0 %v1676
      %v1746 = vpop.f32.mrf.mxu0
      %v1747 = vadd.f32 0.0, %v1746
      %v1748 = vpop.f32.mrf.mxu0
      %1749 = vmatprep.mubr.f32.mxu0 0.0
      %1750 = vmatmul.mubr.f32.gmra.mxu0 %v1678
      %v1751 = vpop.f32.mrf.mxu0
      %v1752 = vadd.f32 0.0, %v1751
      %v1753 = vpop.f32.mrf.mxu0
      %1754 = vdwg.mxu0
      %v1755 = vadd.f32 %v1671, %v1747
      %v1756 = vadd.f32 %v1672, %v1752
      %v1757 = vadd.f32 %v1755, %v668
      %v1758 = vadd.f32 %v1756, %v668
      %v1759 = vmax.f32 %v1757, 0.0
      %v1760 = vmax.f32 %v1758, 0.0
      %1763 = vrot.lane.b32.xlu0 %v1759, 120
      %v1764 = vpop.permute.xlu0 %1763
      %1765 = vrot.lane.b32.xlu0 %v1760, 120
      %v1766 = vpop.permute.xlu0 %1765
      %v1769 = vmax.f32 %v1759, %v1764
      %v1770 = vmax.f32 %v1760, %v1766
      %1773 = vrot.lane.b32.xlu0 %v1769, 112
      %v1774 = vpop.permute.xlu0 %1773
      %1775 = vrot.lane.b32.xlu0 %v1770, 112
      %v1776 = vpop.permute.xlu0 %1775
      %v1779 = vmax.f32 %v1769, %v1774
      %v1780 = vmax.f32 %v1770, %v1776
      %s1781 = scalar_lea.vmem %s313, 48
      %1782 = vst.msk [vmem:[%s1781] sm:$0xff] %vm694, %v1779
      %1783 = vst.msk [vmem:[%s1781 + $0x8] sm:$0x7f] %vm696, %v1780
      %v1784 = vld [vmem:[%s1424] sm:$0xff]
      %v1785 = vld [vmem:[%s1424 + $0x8] sm:$0xff]
      %s1786 = scalar_lea.vmem %s284, 80
      %v1787 = vld [vmem:[%s1786] sm:$0xff]
      %v1788 = vld [vmem:[%s1786 + $0x8] sm:$0xff]
      %v1791 = vrot.slane %v1784, 1
      %v1792 = vrot.slane %v1785, 1
      %v1793 = vsel %vm334, %v1791, %v1792
      %v1794 = vsel %vm338, %v1793, 0
      %v1796 = vsel %vm338, %v1792, 0
      %1798 = vmatprep.subr.mxu0 0.0
      %1799 = vmatpush1.msra.mxu0 0.0
      %1800 = vmatprep.subr.mxu0 0.0
      %1801 = vmatpush1.msra.mxu0 0.0
      %1802 = vmatprep.subr.mxu0 0.0
      %1803 = vmatpush1.msra.mxu0 0.0
      %1804 = vmatprep.subr.mxu0 0.0
      %1805 = vmatpush1.msra.mxu0 0.0
      %1806 = vmatprep.subr.mxu0 0.0
      %1807 = vmatpush1.msra.mxu0 0.0
      %1808 = vmatprep.subr.mxu0 0.0
      %1809 = vmatpush1.msra.mxu0 0.0
      %1810 = vmatprep.subr.mxu0 0.0
      %1811 = vmatpush1.msra.mxu0 0.0
      %1812 = vmatprep.subr.mxu0 0.0
      %1813 = vmatpush1.msra.mxu0 0.0
      %1814 = vmatprep.subr.mxu0 0.0
      %1815 = vmatpush1.msra.mxu0 0.0
      %1816 = vmatprep.subr.mxu0 0.0
      %1817 = vmatpush1.msra.mxu0 0.0
      %1818 = vmatprep.subr.mxu0 0.0
      %1819 = vmatpush1.msra.mxu0 0.0
      %1820 = vmatprep.subr.mxu0 0.0
      %1821 = vmatpush1.msra.mxu0 0.0
      %1822 = vmatprep.subr.mxu0 0.0
      %1823 = vmatpush1.msra.mxu0 0.0
      %1824 = vmatprep.subr.mxu0 0.0
      %1825 = vmatpush1.msra.mxu0 0.0
      %1826 = vmatprep.subr.mxu0 0.0
      %1827 = vmatpush1.msra.mxu0 %v319
      %1828 = vmatprep.subr.mxu0 0.0
      %1829 = vmatpush1.msra.mxu0 %v318
      %1830 = vmatprep.subr.mxu0 0.0
      %1831 = vmatpush2.msra.mxu0 0.0
      %1832 = vmatprep.subr.mxu0 0.0
      %1833 = vmatpush2.msra.mxu0 0.0
      %1834 = vmatprep.subr.mxu0 0.0
      %1835 = vmatpush2.msra.mxu0 0.0
      %1836 = vmatprep.subr.mxu0 0.0
      %1837 = vmatpush2.msra.mxu0 0.0
      %1838 = vmatprep.subr.mxu0 0.0
      %1839 = vmatpush2.msra.mxu0 0.0
      %1840 = vmatprep.subr.mxu0 0.0
      %1841 = vmatpush2.msra.mxu0 0.0
      %1842 = vmatprep.subr.mxu0 0.0
      %1843 = vmatpush2.msra.mxu0 0.0
      %1844 = vmatprep.subr.mxu0 0.0
      %1845 = vmatpush2.msra.mxu0 0.0
      %1846 = vmatprep.subr.mxu0 0.0
      %1847 = vmatpush2.msra.mxu0 0.0
      %1848 = vmatprep.subr.mxu0 0.0
      %1849 = vmatpush2.msra.mxu0 0.0
      %1850 = vmatprep.subr.mxu0 0.0
      %1851 = vmatpush2.msra.mxu0 0.0
      %1852 = vmatprep.subr.mxu0 0.0
      %1853 = vmatpush2.msra.mxu0 0.0
      %1854 = vmatprep.subr.mxu0 0.0
      %1855 = vmatpush2.msra.mxu0 0.0
      %1856 = vmatprep.subr.mxu0 0.0
      %1857 = vmatpush2.msra.mxu0 0.0
      %1858 = vmatprep.subr.mxu0 0.0
      %1859 = vmatpush2.msra.mxu0 0.0
      %1860 = vmatprep.subr.mxu0 0.0
      %1861 = vmatpush2.msra.mxu0 0.0
      %1862 = vmatprep.mubr.f32.mxu0 0.0
      %1863 = vmatmul.mubr.f32.gmra.mxu0 %v1794
      %v1864 = vpop.f32.mrf.mxu0
      %v1865 = vadd.f32 0.0, %v1864
      %v1866 = vpop.f32.mrf.mxu0
      %1867 = vmatprep.mubr.f32.mxu0 0.0
      %1868 = vmatmul.mubr.f32.gmra.mxu0 %v1796
      %v1869 = vpop.f32.mrf.mxu0
      %v1870 = vadd.f32 0.0, %v1869
      %v1871 = vpop.f32.mrf.mxu0
      %1872 = vdwg.mxu0
      %v1873 = vsel %vm338, %v1784, 0
      %v1875 = vsel %vm338, %v1785, 0
      %1877 = vmatprep.subr.mxu0 0.0
      %1878 = vmatpush1.msra.mxu0 0.0
      %1879 = vmatprep.subr.mxu0 0.0
      %1880 = vmatpush1.msra.mxu0 0.0
      %1881 = vmatprep.subr.mxu0 0.0
      %1882 = vmatpush1.msra.mxu0 0.0
      %1883 = vmatprep.subr.mxu0 0.0
      %1884 = vmatpush1.msra.mxu0 0.0
      %1885 = vmatprep.subr.mxu0 0.0
      %1886 = vmatpush1.msra.mxu0 0.0
      %1887 = vmatprep.subr.mxu0 0.0
      %1888 = vmatpush1.msra.mxu0 0.0
      %1889 = vmatprep.subr.mxu0 0.0
      %1890 = vmatpush1.msra.mxu0 0.0
      %1891 = vmatprep.subr.mxu0 0.0
      %1892 = vmatpush1.msra.mxu0 0.0
      %1893 = vmatprep.subr.mxu0 0.0
      %1894 = vmatpush1.msra.mxu0 0.0
      %1895 = vmatprep.subr.mxu0 0.0
      %1896 = vmatpush1.msra.mxu0 0.0
      %1897 = vmatprep.subr.mxu0 0.0
      %1898 = vmatpush1.msra.mxu0 0.0
      %1899 = vmatprep.subr.mxu0 0.0
      %1900 = vmatpush1.msra.mxu0 0.0
      %1901 = vmatprep.subr.mxu0 0.0
      %1902 = vmatpush1.msra.mxu0 0.0
      %1903 = vmatprep.subr.mxu0 0.0
      %1904 = vmatpush1.msra.mxu0 0.0
      %1905 = vmatprep.subr.mxu0 0.0
      %1906 = vmatpush1.msra.mxu0 %v316
      %1907 = vmatprep.subr.mxu0 0.0
      %1908 = vmatpush1.msra.mxu0 %v315
      %1909 = vmatprep.subr.mxu0 0.0
      %1910 = vmatpush2.msra.mxu0 0.0
      %1911 = vmatprep.subr.mxu0 0.0
      %1912 = vmatpush2.msra.mxu0 0.0
      %1913 = vmatprep.subr.mxu0 0.0
      %1914 = vmatpush2.msra.mxu0 0.0
      %1915 = vmatprep.subr.mxu0 0.0
      %1916 = vmatpush2.msra.mxu0 0.0
      %1917 = vmatprep.subr.mxu0 0.0
      %1918 = vmatpush2.msra.mxu0 0.0
      %1919 = vmatprep.subr.mxu0 0.0
      %1920 = vmatpush2.msra.mxu0 0.0
      %1921 = vmatprep.subr.mxu0 0.0
      %1922 = vmatpush2.msra.mxu0 0.0
      %1923 = vmatprep.subr.mxu0 0.0
      %1924 = vmatpush2.msra.mxu0 0.0
      %1925 = vmatprep.subr.mxu0 0.0
      %1926 = vmatpush2.msra.mxu0 0.0
      %1927 = vmatprep.subr.mxu0 0.0
      %1928 = vmatpush2.msra.mxu0 0.0
      %1929 = vmatprep.subr.mxu0 0.0
      %1930 = vmatpush2.msra.mxu0 0.0
      %1931 = vmatprep.subr.mxu0 0.0
      %1932 = vmatpush2.msra.mxu0 0.0
      %1933 = vmatprep.subr.mxu0 0.0
      %1934 = vmatpush2.msra.mxu0 0.0
      %1935 = vmatprep.subr.mxu0 0.0
      %1936 = vmatpush2.msra.mxu0 0.0
      %1937 = vmatprep.subr.mxu0 0.0
      %1938 = vmatpush2.msra.mxu0 0.0
      %1939 = vmatprep.subr.mxu0 0.0
      %1940 = vmatpush2.msra.mxu0 0.0
      %1941 = vmatprep.mubr.f32.mxu0 0.0
      %1942 = vmatmul.mubr.f32.gmra.mxu0 %v1873
      %v1943 = vpop.f32.mrf.mxu0
      %v1944 = vadd.f32 %v1865, %v1943
      %v1945 = vpop.f32.mrf.mxu0
      %1946 = vmatprep.mubr.f32.mxu0 0.0
      %1947 = vmatmul.mubr.f32.gmra.mxu0 %v1875
      %v1948 = vpop.f32.mrf.mxu0
      %v1949 = vadd.f32 %v1870, %v1948
      %v1950 = vpop.f32.mrf.mxu0
      %1951 = vdwg.mxu0
      %v1953 = vsel %vm338, %v1787, 0
      %v1956 = vsel %vm338, %v1788, 0
      %1958 = vmatprep.subr.mxu0 0.0
      %1959 = vmatpush1.msra.mxu0 0.0
      %1960 = vmatprep.subr.mxu0 0.0
      %1961 = vmatpush1.msra.mxu0 0.0
      %1962 = vmatprep.subr.mxu0 0.0
      %1963 = vmatpush1.msra.mxu0 0.0
      %1964 = vmatprep.subr.mxu0 0.0
      %1965 = vmatpush1.msra.mxu0 0.0
      %1966 = vmatprep.subr.mxu0 0.0
      %1967 = vmatpush1.msra.mxu0 0.0
      %1968 = vmatprep.subr.mxu0 0.0
      %1969 = vmatpush1.msra.mxu0 0.0
      %1970 = vmatprep.subr.mxu0 0.0
      %1971 = vmatpush1.msra.mxu0 0.0
      %1972 = vmatprep.subr.mxu0 0.0
      %1973 = vmatpush1.msra.mxu0 0.0
      %1974 = vmatprep.subr.mxu0 0.0
      %1975 = vmatpush1.msra.mxu0 0.0
      %1976 = vmatprep.subr.mxu0 0.0
      %1977 = vmatpush1.msra.mxu0 0.0
      %1978 = vmatprep.subr.mxu0 0.0
      %1979 = vmatpush1.msra.mxu0 0.0
      %1980 = vmatprep.subr.mxu0 0.0
      %1981 = vmatpush1.msra.mxu0 0.0
      %1982 = vmatprep.subr.mxu0 0.0
      %1983 = vmatpush1.msra.mxu0 0.0
      %1984 = vmatprep.subr.mxu0 0.0
      %1985 = vmatpush1.msra.mxu0 0.0
      %1986 = vmatprep.subr.mxu0 0.0
      %1987 = vmatpush1.msra.mxu0 %v322
      %1988 = vmatprep.subr.mxu0 0.0
      %1989 = vmatpush1.msra.mxu0 %v321
      %1990 = vmatprep.subr.mxu0 0.0
      %1991 = vmatpush2.msra.mxu0 0.0
      %1992 = vmatprep.subr.mxu0 0.0
      %1993 = vmatpush2.msra.mxu0 0.0
      %1994 = vmatprep.subr.mxu0 0.0
      %1995 = vmatpush2.msra.mxu0 0.0
      %1996 = vmatprep.subr.mxu0 0.0
      %1997 = vmatpush2.msra.mxu0 0.0
      %1998 = vmatprep.subr.mxu0 0.0
      %1999 = vmatpush2.msra.mxu0 0.0
      %2000 = vmatprep.subr.mxu0 0.0
      %2001 = vmatpush2.msra.mxu0 0.0
      %2002 = vmatprep.subr.mxu0 0.0
      %2003 = vmatpush2.msra.mxu0 0.0
      %2004 = vmatprep.subr.mxu0 0.0
      %2005 = vmatpush2.msra.mxu0 0.0
      %2006 = vmatprep.subr.mxu0 0.0
      %2007 = vmatpush2.msra.mxu0 0.0
      %2008 = vmatprep.subr.mxu0 0.0
      %2009 = vmatpush2.msra.mxu0 0.0
      %2010 = vmatprep.subr.mxu0 0.0
      %2011 = vmatpush2.msra.mxu0 0.0
      %2012 = vmatprep.subr.mxu0 0.0
      %2013 = vmatpush2.msra.mxu0 0.0
      %2014 = vmatprep.subr.mxu0 0.0
      %2015 = vmatpush2.msra.mxu0 0.0
      %2016 = vmatprep.subr.mxu0 0.0
      %2017 = vmatpush2.msra.mxu0 0.0
      %2018 = vmatprep.subr.mxu0 0.0
      %2019 = vmatpush2.msra.mxu0 0.0
      %2020 = vmatprep.subr.mxu0 0.0
      %2021 = vmatpush2.msra.mxu0 0.0
      %2022 = vmatprep.mubr.f32.mxu0 0.0
      %2023 = vmatmul.mubr.f32.gmra.mxu0 %v1953
      %v2024 = vpop.f32.mrf.mxu0
      %v2025 = vadd.f32 0.0, %v2024
      %v2026 = vpop.f32.mrf.mxu0
      %2027 = vmatprep.mubr.f32.mxu0 0.0
      %2028 = vmatmul.mubr.f32.gmra.mxu0 %v1956
      %v2029 = vpop.f32.mrf.mxu0
      %v2030 = vadd.f32 0.0, %v2029
      %v2031 = vpop.f32.mrf.mxu0
      %2032 = vdwg.mxu0
      %v2033 = vadd.f32 %v1944, %v2025
      %v2034 = vadd.f32 %v1949, %v2030
      %v2035 = vrot.slane %v1787, 1
      %v2036 = vrot.slane %v1788, 1
      %v2037 = vsel %vm334, %v2035, %v2036
      %v2038 = vsel %vm338, %v2037, 0
      %v2040 = vsel %vm338, %v2036, 0
      %2042 = vmatprep.subr.mxu0 0.0
      %2043 = vmatpush1.msra.mxu0 0.0
      %2044 = vmatprep.subr.mxu0 0.0
      %2045 = vmatpush1.msra.mxu0 0.0
      %2046 = vmatprep.subr.mxu0 0.0
      %2047 = vmatpush1.msra.mxu0 0.0
      %2048 = vmatprep.subr.mxu0 0.0
      %2049 = vmatpush1.msra.mxu0 0.0
      %2050 = vmatprep.subr.mxu0 0.0
      %2051 = vmatpush1.msra.mxu0 0.0
      %2052 = vmatprep.subr.mxu0 0.0
      %2053 = vmatpush1.msra.mxu0 0.0
      %2054 = vmatprep.subr.mxu0 0.0
      %2055 = vmatpush1.msra.mxu0 0.0
      %2056 = vmatprep.subr.mxu0 0.0
      %2057 = vmatpush1.msra.mxu0 0.0
      %2058 = vmatprep.subr.mxu0 0.0
      %2059 = vmatpush1.msra.mxu0 0.0
      %2060 = vmatprep.subr.mxu0 0.0
      %2061 = vmatpush1.msra.mxu0 0.0
      %2062 = vmatprep.subr.mxu0 0.0
      %2063 = vmatpush1.msra.mxu0 0.0
      %2064 = vmatprep.subr.mxu0 0.0
      %2065 = vmatpush1.msra.mxu0 0.0
      %2066 = vmatprep.subr.mxu0 0.0
      %2067 = vmatpush1.msra.mxu0 0.0
      %2068 = vmatprep.subr.mxu0 0.0
      %2069 = vmatpush1.msra.mxu0 0.0
      %2070 = vmatprep.subr.mxu0 0.0
      %2071 = vmatpush1.msra.mxu0 %v325
      %2072 = vmatprep.subr.mxu0 0.0
      %2073 = vmatpush1.msra.mxu0 %v324
      %2074 = vmatprep.subr.mxu0 0.0
      %2075 = vmatpush2.msra.mxu0 0.0
      %2076 = vmatprep.subr.mxu0 0.0
      %2077 = vmatpush2.msra.mxu0 0.0
      %2078 = vmatprep.subr.mxu0 0.0
      %2079 = vmatpush2.msra.mxu0 0.0
      %2080 = vmatprep.subr.mxu0 0.0
      %2081 = vmatpush2.msra.mxu0 0.0
      %2082 = vmatprep.subr.mxu0 0.0
      %2083 = vmatpush2.msra.mxu0 0.0
      %2084 = vmatprep.subr.mxu0 0.0
      %2085 = vmatpush2.msra.mxu0 0.0
      %2086 = vmatprep.subr.mxu0 0.0
      %2087 = vmatpush2.msra.mxu0 0.0
      %2088 = vmatprep.subr.mxu0 0.0
      %2089 = vmatpush2.msra.mxu0 0.0
      %2090 = vmatprep.subr.mxu0 0.0
      %2091 = vmatpush2.msra.mxu0 0.0
      %2092 = vmatprep.subr.mxu0 0.0
      %2093 = vmatpush2.msra.mxu0 0.0
      %2094 = vmatprep.subr.mxu0 0.0
      %2095 = vmatpush2.msra.mxu0 0.0
      %2096 = vmatprep.subr.mxu0 0.0
      %2097 = vmatpush2.msra.mxu0 0.0
      %2098 = vmatprep.subr.mxu0 0.0
      %2099 = vmatpush2.msra.mxu0 0.0
      %2100 = vmatprep.subr.mxu0 0.0
      %2101 = vmatpush2.msra.mxu0 0.0
      %2102 = vmatprep.subr.mxu0 0.0
      %2103 = vmatpush2.msra.mxu0 0.0
      %2104 = vmatprep.subr.mxu0 0.0
      %2105 = vmatpush2.msra.mxu0 0.0
      %2106 = vmatprep.mubr.f32.mxu0 0.0
      %2107 = vmatmul.mubr.f32.gmra.mxu0 %v2038
      %v2108 = vpop.f32.mrf.mxu0
      %v2109 = vadd.f32 0.0, %v2108
      %v2110 = vpop.f32.mrf.mxu0
      %2111 = vmatprep.mubr.f32.mxu0 0.0
      %2112 = vmatmul.mubr.f32.gmra.mxu0 %v2040
      %v2113 = vpop.f32.mrf.mxu0
      %v2114 = vadd.f32 0.0, %v2113
      %v2115 = vpop.f32.mrf.mxu0
      %2116 = vdwg.mxu0
      %v2117 = vadd.f32 %v2033, %v2109
      %v2118 = vadd.f32 %v2034, %v2114
      %v2119 = vadd.f32 %v2117, %v668
      %v2120 = vadd.f32 %v2118, %v668
      %v2121 = vmax.f32 %v2119, 0.0
      %v2122 = vmax.f32 %v2120, 0.0
      %2125 = vrot.lane.b32.xlu0 %v2121, 120
      %v2126 = vpop.permute.xlu0 %2125
      %2127 = vrot.lane.b32.xlu0 %v2122, 120
      %v2128 = vpop.permute.xlu0 %2127
      %v2131 = vmax.f32 %v2121, %v2126
      %v2132 = vmax.f32 %v2122, %v2128
      %2135 = vrot.lane.b32.xlu0 %v2131, 112
      %v2136 = vpop.permute.xlu0 %2135
      %2137 = vrot.lane.b32.xlu0 %v2132, 112
      %v2138 = vpop.permute.xlu0 %2137
      %v2141 = vmax.f32 %v2131, %v2136
      %v2142 = vmax.f32 %v2132, %v2138
      %s2143 = scalar_lea.vmem %s313, 64
      %2144 = vst.msk [vmem:[%s2143] sm:$0xff] %vm694, %v2141
      %2145 = vst.msk [vmem:[%s2143 + $0x8] sm:$0x7f] %vm696, %v2142
      %v2146 = vld [vmem:[%s1786] sm:$0xff]
      %v2147 = vld [vmem:[%s1786 + $0x8] sm:$0xff]
      %s2148 = scalar_lea.vmem %s284, 96
      %v2149 = vld [vmem:[%s2148] sm:$0xff]
      %v2150 = vld [vmem:[%s2148 + $0x8] sm:$0xff]
      %v2153 = vrot.slane %v2146, 1
      %v2154 = vrot.slane %v2147, 1
      %v2155 = vsel %vm334, %v2153, %v2154
      %v2156 = vsel %vm338, %v2155, 0
      %v2158 = vsel %vm338, %v2154, 0
      %2160 = vmatprep.subr.mxu0 0.0
      %2161 = vmatpush1.msra.mxu0 0.0
      %2162 = vmatprep.subr.mxu0 0.0
      %2163 = vmatpush1.msra.mxu0 0.0
      %2164 = vmatprep.subr.mxu0 0.0
      %2165 = vmatpush1.msra.mxu0 0.0
      %2166 = vmatprep.subr.mxu0 0.0
      %2167 = vmatpush1.msra.mxu0 0.0
      %2168 = vmatprep.subr.mxu0 0.0
      %2169 = vmatpush1.msra.mxu0 0.0
      %2170 = vmatprep.subr.mxu0 0.0
      %2171 = vmatpush1.msra.mxu0 0.0
      %2172 = vmatprep.subr.mxu0 0.0
      %2173 = vmatpush1.msra.mxu0 0.0
      %2174 = vmatprep.subr.mxu0 0.0
      %2175 = vmatpush1.msra.mxu0 0.0
      %2176 = vmatprep.subr.mxu0 0.0
      %2177 = vmatpush1.msra.mxu0 0.0
      %2178 = vmatprep.subr.mxu0 0.0
      %2179 = vmatpush1.msra.mxu0 0.0
      %2180 = vmatprep.subr.mxu0 0.0
      %2181 = vmatpush1.msra.mxu0 0.0
      %2182 = vmatprep.subr.mxu0 0.0
      %2183 = vmatpush1.msra.mxu0 0.0
      %2184 = vmatprep.subr.mxu0 0.0
      %2185 = vmatpush1.msra.mxu0 0.0
      %2186 = vmatprep.subr.mxu0 0.0
      %2187 = vmatpush1.msra.mxu0 0.0
      %2188 = vmatprep.subr.mxu0 0.0
      %2189 = vmatpush1.msra.mxu0 %v319
      %2190 = vmatprep.subr.mxu0 0.0
      %2191 = vmatpush1.msra.mxu0 %v318
      %2192 = vmatprep.subr.mxu0 0.0
      %2193 = vmatpush2.msra.mxu0 0.0
      %2194 = vmatprep.subr.mxu0 0.0
      %2195 = vmatpush2.msra.mxu0 0.0
      %2196 = vmatprep.subr.mxu0 0.0
      %2197 = vmatpush2.msra.mxu0 0.0
      %2198 = vmatprep.subr.mxu0 0.0
      %2199 = vmatpush2.msra.mxu0 0.0
      %2200 = vmatprep.subr.mxu0 0.0
      %2201 = vmatpush2.msra.mxu0 0.0
      %2202 = vmatprep.subr.mxu0 0.0
      %2203 = vmatpush2.msra.mxu0 0.0
      %2204 = vmatprep.subr.mxu0 0.0
      %2205 = vmatpush2.msra.mxu0 0.0
      %2206 = vmatprep.subr.mxu0 0.0
      %2207 = vmatpush2.msra.mxu0 0.0
      %2208 = vmatprep.subr.mxu0 0.0
      %2209 = vmatpush2.msra.mxu0 0.0
      %2210 = vmatprep.subr.mxu0 0.0
      %2211 = vmatpush2.msra.mxu0 0.0
      %2212 = vmatprep.subr.mxu0 0.0
      %2213 = vmatpush2.msra.mxu0 0.0
      %2214 = vmatprep.subr.mxu0 0.0
      %2215 = vmatpush2.msra.mxu0 0.0
      %2216 = vmatprep.subr.mxu0 0.0
      %2217 = vmatpush2.msra.mxu0 0.0
      %2218 = vmatprep.subr.mxu0 0.0
      %2219 = vmatpush2.msra.mxu0 0.0
      %2220 = vmatprep.subr.mxu0 0.0
      %2221 = vmatpush2.msra.mxu0 0.0
      %2222 = vmatprep.subr.mxu0 0.0
      %2223 = vmatpush2.msra.mxu0 0.0
      %2224 = vmatprep.mubr.f32.mxu0 0.0
      %2225 = vmatmul.mubr.f32.gmra.mxu0 %v2156
      %v2226 = vpop.f32.mrf.mxu0
      %v2227 = vadd.f32 0.0, %v2226
      %v2228 = vpop.f32.mrf.mxu0
      %2229 = vmatprep.mubr.f32.mxu0 0.0
      %2230 = vmatmul.mubr.f32.gmra.mxu0 %v2158
      %v2231 = vpop.f32.mrf.mxu0
      %v2232 = vadd.f32 0.0, %v2231
      %v2233 = vpop.f32.mrf.mxu0
      %2234 = vdwg.mxu0
      %v2235 = vsel %vm338, %v2146, 0
      %v2237 = vsel %vm338, %v2147, 0
      %2239 = vmatprep.subr.mxu0 0.0
      %2240 = vmatpush1.msra.mxu0 0.0
      %2241 = vmatprep.subr.mxu0 0.0
      %2242 = vmatpush1.msra.mxu0 0.0
      %2243 = vmatprep.subr.mxu0 0.0
      %2244 = vmatpush1.msra.mxu0 0.0
      %2245 = vmatprep.subr.mxu0 0.0
      %2246 = vmatpush1.msra.mxu0 0.0
      %2247 = vmatprep.subr.mxu0 0.0
      %2248 = vmatpush1.msra.mxu0 0.0
      %2249 = vmatprep.subr.mxu0 0.0
      %2250 = vmatpush1.msra.mxu0 0.0
      %2251 = vmatprep.subr.mxu0 0.0
      %2252 = vmatpush1.msra.mxu0 0.0
      %2253 = vmatprep.subr.mxu0 0.0
      %2254 = vmatpush1.msra.mxu0 0.0
      %2255 = vmatprep.subr.mxu0 0.0
      %2256 = vmatpush1.msra.mxu0 0.0
      %2257 = vmatprep.subr.mxu0 0.0
      %2258 = vmatpush1.msra.mxu0 0.0
      %2259 = vmatprep.subr.mxu0 0.0
      %2260 = vmatpush1.msra.mxu0 0.0
      %2261 = vmatprep.subr.mxu0 0.0
      %2262 = vmatpush1.msra.mxu0 0.0
      %2263 = vmatprep.subr.mxu0 0.0
      %2264 = vmatpush1.msra.mxu0 0.0
      %2265 = vmatprep.subr.mxu0 0.0
      %2266 = vmatpush1.msra.mxu0 0.0
      %2267 = vmatprep.subr.mxu0 0.0
      %2268 = vmatpush1.msra.mxu0 %v316
      %2269 = vmatprep.subr.mxu0 0.0
      %2270 = vmatpush1.msra.mxu0 %v315
      %2271 = vmatprep.subr.mxu0 0.0
      %2272 = vmatpush2.msra.mxu0 0.0
      %2273 = vmatprep.subr.mxu0 0.0
      %2274 = vmatpush2.msra.mxu0 0.0
      %2275 = vmatprep.subr.mxu0 0.0
      %2276 = vmatpush2.msra.mxu0 0.0
      %2277 = vmatprep.subr.mxu0 0.0
      %2278 = vmatpush2.msra.mxu0 0.0
      %2279 = vmatprep.subr.mxu0 0.0
      %2280 = vmatpush2.msra.mxu0 0.0
      %2281 = vmatprep.subr.mxu0 0.0
      %2282 = vmatpush2.msra.mxu0 0.0
      %2283 = vmatprep.subr.mxu0 0.0
      %2284 = vmatpush2.msra.mxu0 0.0
      %2285 = vmatprep.subr.mxu0 0.0
      %2286 = vmatpush2.msra.mxu0 0.0
      %2287 = vmatprep.subr.mxu0 0.0
      %2288 = vmatpush2.msra.mxu0 0.0
      %2289 = vmatprep.subr.mxu0 0.0
      %2290 = vmatpush2.msra.mxu0 0.0
      %2291 = vmatprep.subr.mxu0 0.0
      %2292 = vmatpush2.msra.mxu0 0.0
      %2293 = vmatprep.subr.mxu0 0.0
      %2294 = vmatpush2.msra.mxu0 0.0
      %2295 = vmatprep.subr.mxu0 0.0
      %2296 = vmatpush2.msra.mxu0 0.0
      %2297 = vmatprep.subr.mxu0 0.0
      %2298 = vmatpush2.msra.mxu0 0.0
      %2299 = vmatprep.subr.mxu0 0.0
      %2300 = vmatpush2.msra.mxu0 0.0
      %2301 = vmatprep.subr.mxu0 0.0
      %2302 = vmatpush2.msra.mxu0 0.0
      %2303 = vmatprep.mubr.f32.mxu0 0.0
      %2304 = vmatmul.mubr.f32.gmra.mxu0 %v2235
      %v2305 = vpop.f32.mrf.mxu0
      %v2306 = vadd.f32 %v2227, %v2305
      %v2307 = vpop.f32.mrf.mxu0
      %2308 = vmatprep.mubr.f32.mxu0 0.0
      %2309 = vmatmul.mubr.f32.gmra.mxu0 %v2237
      %v2310 = vpop.f32.mrf.mxu0
      %v2311 = vadd.f32 %v2232, %v2310
      %v2312 = vpop.f32.mrf.mxu0
      %2313 = vdwg.mxu0
      %v2315 = vsel %vm338, %v2149, 0
      %v2318 = vsel %vm338, %v2150, 0
      %2320 = vmatprep.subr.mxu0 0.0
      %2321 = vmatpush1.msra.mxu0 0.0
      %2322 = vmatprep.subr.mxu0 0.0
      %2323 = vmatpush1.msra.mxu0 0.0
      %2324 = vmatprep.subr.mxu0 0.0
      %2325 = vmatpush1.msra.mxu0 0.0
      %2326 = vmatprep.subr.mxu0 0.0
      %2327 = vmatpush1.msra.mxu0 0.0
      %2328 = vmatprep.subr.mxu0 0.0
      %2329 = vmatpush1.msra.mxu0 0.0
      %2330 = vmatprep.subr.mxu0 0.0
      %2331 = vmatpush1.msra.mxu0 0.0
      %2332 = vmatprep.subr.mxu0 0.0
      %2333 = vmatpush1.msra.mxu0 0.0
      %2334 = vmatprep.subr.mxu0 0.0
      %2335 = vmatpush1.msra.mxu0 0.0
      %2336 = vmatprep.subr.mxu0 0.0
      %2337 = vmatpush1.msra.mxu0 0.0
      %2338 = vmatprep.subr.mxu0 0.0
      %2339 = vmatpush1.msra.mxu0 0.0
      %2340 = vmatprep.subr.mxu0 0.0
      %2341 = vmatpush1.msra.mxu0 0.0
      %2342 = vmatprep.subr.mxu0 0.0
      %2343 = vmatpush1.msra.mxu0 0.0
      %2344 = vmatprep.subr.mxu0 0.0
      %2345 = vmatpush1.msra.mxu0 0.0
      %2346 = vmatprep.subr.mxu0 0.0
      %2347 = vmatpush1.msra.mxu0 0.0
      %2348 = vmatprep.subr.mxu0 0.0
      %2349 = vmatpush1.msra.mxu0 %v322
      %2350 = vmatprep.subr.mxu0 0.0
      %2351 = vmatpush1.msra.mxu0 %v321
      %2352 = vmatprep.subr.mxu0 0.0
      %2353 = vmatpush2.msra.mxu0 0.0
      %2354 = vmatprep.subr.mxu0 0.0
      %2355 = vmatpush2.msra.mxu0 0.0
      %2356 = vmatprep.subr.mxu0 0.0
      %2357 = vmatpush2.msra.mxu0 0.0
      %2358 = vmatprep.subr.mxu0 0.0
      %2359 = vmatpush2.msra.mxu0 0.0
      %2360 = vmatprep.subr.mxu0 0.0
      %2361 = vmatpush2.msra.mxu0 0.0
      %2362 = vmatprep.subr.mxu0 0.0
      %2363 = vmatpush2.msra.mxu0 0.0
      %2364 = vmatprep.subr.mxu0 0.0
      %2365 = vmatpush2.msra.mxu0 0.0
      %2366 = vmatprep.subr.mxu0 0.0
      %2367 = vmatpush2.msra.mxu0 0.0
      %2368 = vmatprep.subr.mxu0 0.0
      %2369 = vmatpush2.msra.mxu0 0.0
      %2370 = vmatprep.subr.mxu0 0.0
      %2371 = vmatpush2.msra.mxu0 0.0
      %2372 = vmatprep.subr.mxu0 0.0
      %2373 = vmatpush2.msra.mxu0 0.0
      %2374 = vmatprep.subr.mxu0 0.0
      %2375 = vmatpush2.msra.mxu0 0.0
      %2376 = vmatprep.subr.mxu0 0.0
      %2377 = vmatpush2.msra.mxu0 0.0
      %2378 = vmatprep.subr.mxu0 0.0
      %2379 = vmatpush2.msra.mxu0 0.0
      %2380 = vmatprep.subr.mxu0 0.0
      %2381 = vmatpush2.msra.mxu0 0.0
      %2382 = vmatprep.subr.mxu0 0.0
      %2383 = vmatpush2.msra.mxu0 0.0
      %2384 = vmatprep.mubr.f32.mxu0 0.0
      %2385 = vmatmul.mubr.f32.gmra.mxu0 %v2315
      %v2386 = vpop.f32.mrf.mxu0
      %v2387 = vadd.f32 0.0, %v2386
      %v2388 = vpop.f32.mrf.mxu0
      %2389 = vmatprep.mubr.f32.mxu0 0.0
      %2390 = vmatmul.mubr.f32.gmra.mxu0 %v2318
      %v2391 = vpop.f32.mrf.mxu0
      %v2392 = vadd.f32 0.0, %v2391
      %v2393 = vpop.f32.mrf.mxu0
      %2394 = vdwg.mxu0
      %v2395 = vadd.f32 %v2306, %v2387
      %v2396 = vadd.f32 %v2311, %v2392
      %v2397 = vrot.slane %v2149, 1
      %v2398 = vrot.slane %v2150, 1
      %v2399 = vsel %vm334, %v2397, %v2398
      %v2400 = vsel %vm338, %v2399, 0
      %v2402 = vsel %vm338, %v2398, 0
      %2404 = vmatprep.subr.mxu0 0.0
      %2405 = vmatpush1.msra.mxu0 0.0
      %2406 = vmatprep.subr.mxu0 0.0
      %2407 = vmatpush1.msra.mxu0 0.0
      %2408 = vmatprep.subr.mxu0 0.0
      %2409 = vmatpush1.msra.mxu0 0.0
      %2410 = vmatprep.subr.mxu0 0.0
      %2411 = vmatpush1.msra.mxu0 0.0
      %2412 = vmatprep.subr.mxu0 0.0
      %2413 = vmatpush1.msra.mxu0 0.0
      %2414 = vmatprep.subr.mxu0 0.0
      %2415 = vmatpush1.msra.mxu0 0.0
      %2416 = vmatprep.subr.mxu0 0.0
      %2417 = vmatpush1.msra.mxu0 0.0
      %2418 = vmatprep.subr.mxu0 0.0
      %2419 = vmatpush1.msra.mxu0 0.0
      %2420 = vmatprep.subr.mxu0 0.0
      %2421 = vmatpush1.msra.mxu0 0.0
      %2422 = vmatprep.subr.mxu0 0.0
      %2423 = vmatpush1.msra.mxu0 0.0
      %2424 = vmatprep.subr.mxu0 0.0
      %2425 = vmatpush1.msra.mxu0 0.0
      %2426 = vmatprep.subr.mxu0 0.0
      %2427 = vmatpush1.msra.mxu0 0.0
      %2428 = vmatprep.subr.mxu0 0.0
      %2429 = vmatpush1.msra.mxu0 0.0
      %2430 = vmatprep.subr.mxu0 0.0
      %2431 = vmatpush1.msra.mxu0 0.0
      %2432 = vmatprep.subr.mxu0 0.0
      %2433 = vmatpush1.msra.mxu0 %v325
      %2434 = vmatprep.subr.mxu0 0.0
      %2435 = vmatpush1.msra.mxu0 %v324
      %2436 = vmatprep.subr.mxu0 0.0
      %2437 = vmatpush2.msra.mxu0 0.0
      %2438 = vmatprep.subr.mxu0 0.0
      %2439 = vmatpush2.msra.mxu0 0.0
      %2440 = vmatprep.subr.mxu0 0.0
      %2441 = vmatpush2.msra.mxu0 0.0
      %2442 = vmatprep.subr.mxu0 0.0
      %2443 = vmatpush2.msra.mxu0 0.0
      %2444 = vmatprep.subr.mxu0 0.0
      %2445 = vmatpush2.msra.mxu0 0.0
      %2446 = vmatprep.subr.mxu0 0.0
      %2447 = vmatpush2.msra.mxu0 0.0
      %2448 = vmatprep.subr.mxu0 0.0
      %2449 = vmatpush2.msra.mxu0 0.0
      %2450 = vmatprep.subr.mxu0 0.0
      %2451 = vmatpush2.msra.mxu0 0.0
      %2452 = vmatprep.subr.mxu0 0.0
      %2453 = vmatpush2.msra.mxu0 0.0
      %2454 = vmatprep.subr.mxu0 0.0
      %2455 = vmatpush2.msra.mxu0 0.0
      %2456 = vmatprep.subr.mxu0 0.0
      %2457 = vmatpush2.msra.mxu0 0.0
      %2458 = vmatprep.subr.mxu0 0.0
      %2459 = vmatpush2.msra.mxu0 0.0
      %2460 = vmatprep.subr.mxu0 0.0
      %2461 = vmatpush2.msra.mxu0 0.0
      %2462 = vmatprep.subr.mxu0 0.0
      %2463 = vmatpush2.msra.mxu0 0.0
      %2464 = vmatprep.subr.mxu0 0.0
      %2465 = vmatpush2.msra.mxu0 0.0
      %2466 = vmatprep.subr.mxu0 0.0
      %2467 = vmatpush2.msra.mxu0 0.0
      %2468 = vmatprep.mubr.f32.mxu0 0.0
      %2469 = vmatmul.mubr.f32.gmra.mxu0 %v2400
      %v2470 = vpop.f32.mrf.mxu0
      %v2471 = vadd.f32 0.0, %v2470
      %v2472 = vpop.f32.mrf.mxu0
      %2473 = vmatprep.mubr.f32.mxu0 0.0
      %2474 = vmatmul.mubr.f32.gmra.mxu0 %v2402
      %v2475 = vpop.f32.mrf.mxu0
      %v2476 = vadd.f32 0.0, %v2475
      %v2477 = vpop.f32.mrf.mxu0
      %2478 = vdwg.mxu0
      %v2479 = vadd.f32 %v2395, %v2471
      %v2480 = vadd.f32 %v2396, %v2476
      %v2481 = vadd.f32 %v2479, %v668
      %v2482 = vadd.f32 %v2480, %v668
      %v2483 = vmax.f32 %v2481, 0.0
      %v2484 = vmax.f32 %v2482, 0.0
      %2487 = vrot.lane.b32.xlu0 %v2483, 120
      %v2488 = vpop.permute.xlu0 %2487
      %2489 = vrot.lane.b32.xlu0 %v2484, 120
      %v2490 = vpop.permute.xlu0 %2489
      %v2493 = vmax.f32 %v2483, %v2488
      %v2494 = vmax.f32 %v2484, %v2490
      %2497 = vrot.lane.b32.xlu0 %v2493, 112
      %v2498 = vpop.permute.xlu0 %2497
      %2499 = vrot.lane.b32.xlu0 %v2494, 112
      %v2500 = vpop.permute.xlu0 %2499
      %v2503 = vmax.f32 %v2493, %v2498
      %v2504 = vmax.f32 %v2494, %v2500
      %s2505 = scalar_lea.vmem %s313, 80
      %2506 = vst.msk [vmem:[%s2505] sm:$0xff] %vm694, %v2503
      %2507 = vst.msk [vmem:[%s2505 + $0x8] sm:$0x7f] %vm696, %v2504
      %v2508 = vld [vmem:[%s2148] sm:$0xff]
      %v2509 = vld [vmem:[%s2148 + $0x8] sm:$0xff]
      %s2510 = scalar_lea.vmem %s284, 112
      %v2511 = vld [vmem:[%s2510] sm:$0xff]
      %v2512 = vld [vmem:[%s2510 + $0x8] sm:$0xff]
      %v2515 = vrot.slane %v2508, 1
      %v2516 = vrot.slane %v2509, 1
      %v2517 = vsel %vm334, %v2515, %v2516
      %v2518 = vsel %vm338, %v2517, 0
      %v2520 = vsel %vm338, %v2516, 0
      %2522 = vmatprep.subr.mxu0 0.0
      %2523 = vmatpush1.msra.mxu0 0.0
      %2524 = vmatprep.subr.mxu0 0.0
      %2525 = vmatpush1.msra.mxu0 0.0
      %2526 = vmatprep.subr.mxu0 0.0
      %2527 = vmatpush1.msra.mxu0 0.0
      %2528 = vmatprep.subr.mxu0 0.0
      %2529 = vmatpush1.msra.mxu0 0.0
      %2530 = vmatprep.subr.mxu0 0.0
      %2531 = vmatpush1.msra.mxu0 0.0
      %2532 = vmatprep.subr.mxu0 0.0
      %2533 = vmatpush1.msra.mxu0 0.0
      %2534 = vmatprep.subr.mxu0 0.0
      %2535 = vmatpush1.msra.mxu0 0.0
      %2536 = vmatprep.subr.mxu0 0.0
      %2537 = vmatpush1.msra.mxu0 0.0
      %2538 = vmatprep.subr.mxu0 0.0
      %2539 = vmatpush1.msra.mxu0 0.0
      %2540 = vmatprep.subr.mxu0 0.0
      %2541 = vmatpush1.msra.mxu0 0.0
      %2542 = vmatprep.subr.mxu0 0.0
      %2543 = vmatpush1.msra.mxu0 0.0
      %2544 = vmatprep.subr.mxu0 0.0
      %2545 = vmatpush1.msra.mxu0 0.0
      %2546 = vmatprep.subr.mxu0 0.0
      %2547 = vmatpush1.msra.mxu0 0.0
      %2548 = vmatprep.subr.mxu0 0.0
      %2549 = vmatpush1.msra.mxu0 0.0
      %2550 = vmatprep.subr.mxu0 0.0
      %2551 = vmatpush1.msra.mxu0 %v319
      %2552 = vmatprep.subr.mxu0 0.0
      %2553 = vmatpush1.msra.mxu0 %v318
      %2554 = vmatprep.subr.mxu0 0.0
      %2555 = vmatpush2.msra.mxu0 0.0
      %2556 = vmatprep.subr.mxu0 0.0
      %2557 = vmatpush2.msra.mxu0 0.0
      %2558 = vmatprep.subr.mxu0 0.0
      %2559 = vmatpush2.msra.mxu0 0.0
      %2560 = vmatprep.subr.mxu0 0.0
      %2561 = vmatpush2.msra.mxu0 0.0
      %2562 = vmatprep.subr.mxu0 0.0
      %2563 = vmatpush2.msra.mxu0 0.0
      %2564 = vmatprep.subr.mxu0 0.0
      %2565 = vmatpush2.msra.mxu0 0.0
      %2566 = vmatprep.subr.mxu0 0.0
      %2567 = vmatpush2.msra.mxu0 0.0
      %2568 = vmatprep.subr.mxu0 0.0
      %2569 = vmatpush2.msra.mxu0 0.0
      %2570 = vmatprep.subr.mxu0 0.0
      %2571 = vmatpush2.msra.mxu0 0.0
      %2572 = vmatprep.subr.mxu0 0.0
      %2573 = vmatpush2.msra.mxu0 0.0
      %2574 = vmatprep.subr.mxu0 0.0
      %2575 = vmatpush2.msra.mxu0 0.0
      %2576 = vmatprep.subr.mxu0 0.0
      %2577 = vmatpush2.msra.mxu0 0.0
      %2578 = vmatprep.subr.mxu0 0.0
      %2579 = vmatpush2.msra.mxu0 0.0
      %2580 = vmatprep.subr.mxu0 0.0
      %2581 = vmatpush2.msra.mxu0 0.0
      %2582 = vmatprep.subr.mxu0 0.0
      %2583 = vmatpush2.msra.mxu0 0.0
      %2584 = vmatprep.subr.mxu0 0.0
      %2585 = vmatpush2.msra.mxu0 0.0
      %2586 = vmatprep.mubr.f32.mxu0 0.0
      %2587 = vmatmul.mubr.f32.gmra.mxu0 %v2518
      %v2588 = vpop.f32.mrf.mxu0
      %v2589 = vadd.f32 0.0, %v2588
      %v2590 = vpop.f32.mrf.mxu0
      %2591 = vmatprep.mubr.f32.mxu0 0.0
      %2592 = vmatmul.mubr.f32.gmra.mxu0 %v2520
      %v2593 = vpop.f32.mrf.mxu0
      %v2594 = vadd.f32 0.0, %v2593
      %v2595 = vpop.f32.mrf.mxu0
      %2596 = vdwg.mxu0
      %v2597 = vsel %vm338, %v2508, 0
      %v2599 = vsel %vm338, %v2509, 0
      %2601 = vmatprep.subr.mxu0 0.0
      %2602 = vmatpush1.msra.mxu0 0.0
      %2603 = vmatprep.subr.mxu0 0.0
      %2604 = vmatpush1.msra.mxu0 0.0
      %2605 = vmatprep.subr.mxu0 0.0
      %2606 = vmatpush1.msra.mxu0 0.0
      %2607 = vmatprep.subr.mxu0 0.0
      %2608 = vmatpush1.msra.mxu0 0.0
      %2609 = vmatprep.subr.mxu0 0.0
      %2610 = vmatpush1.msra.mxu0 0.0
      %2611 = vmatprep.subr.mxu0 0.0
      %2612 = vmatpush1.msra.mxu0 0.0
      %2613 = vmatprep.subr.mxu0 0.0
      %2614 = vmatpush1.msra.mxu0 0.0
      %2615 = vmatprep.subr.mxu0 0.0
      %2616 = vmatpush1.msra.mxu0 0.0
      %2617 = vmatprep.subr.mxu0 0.0
      %2618 = vmatpush1.msra.mxu0 0.0
      %2619 = vmatprep.subr.mxu0 0.0
      %2620 = vmatpush1.msra.mxu0 0.0
      %2621 = vmatprep.subr.mxu0 0.0
      %2622 = vmatpush1.msra.mxu0 0.0
      %2623 = vmatprep.subr.mxu0 0.0
      %2624 = vmatpush1.msra.mxu0 0.0
      %2625 = vmatprep.subr.mxu0 0.0
      %2626 = vmatpush1.msra.mxu0 0.0
      %2627 = vmatprep.subr.mxu0 0.0
      %2628 = vmatpush1.msra.mxu0 0.0
      %2629 = vmatprep.subr.mxu0 0.0
      %2630 = vmatpush1.msra.mxu0 %v316
      %2631 = vmatprep.subr.mxu0 0.0
      %2632 = vmatpush1.msra.mxu0 %v315
      %2633 = vmatprep.subr.mxu0 0.0
      %2634 = vmatpush2.msra.mxu0 0.0
      %2635 = vmatprep.subr.mxu0 0.0
      %2636 = vmatpush2.msra.mxu0 0.0
      %2637 = vmatprep.subr.mxu0 0.0
      %2638 = vmatpush2.msra.mxu0 0.0
      %2639 = vmatprep.subr.mxu0 0.0
      %2640 = vmatpush2.msra.mxu0 0.0
      %2641 = vmatprep.subr.mxu0 0.0
      %2642 = vmatpush2.msra.mxu0 0.0
      %2643 = vmatprep.subr.mxu0 0.0
      %2644 = vmatpush2.msra.mxu0 0.0
      %2645 = vmatprep.subr.mxu0 0.0
      %2646 = vmatpush2.msra.mxu0 0.0
      %2647 = vmatprep.subr.mxu0 0.0
      %2648 = vmatpush2.msra.mxu0 0.0
      %2649 = vmatprep.subr.mxu0 0.0
      %2650 = vmatpush2.msra.mxu0 0.0
      %2651 = vmatprep.subr.mxu0 0.0
      %2652 = vmatpush2.msra.mxu0 0.0
      %2653 = vmatprep.subr.mxu0 0.0
      %2654 = vmatpush2.msra.mxu0 0.0
      %2655 = vmatprep.subr.mxu0 0.0
      %2656 = vmatpush2.msra.mxu0 0.0
      %2657 = vmatprep.subr.mxu0 0.0
      %2658 = vmatpush2.msra.mxu0 0.0
      %2659 = vmatprep.subr.mxu0 0.0
      %2660 = vmatpush2.msra.mxu0 0.0
      %2661 = vmatprep.subr.mxu0 0.0
      %2662 = vmatpush2.msra.mxu0 0.0
      %2663 = vmatprep.subr.mxu0 0.0
      %2664 = vmatpush2.msra.mxu0 0.0
      %2665 = vmatprep.mubr.f32.mxu0 0.0
      %2666 = vmatmul.mubr.f32.gmra.mxu0 %v2597
      %v2667 = vpop.f32.mrf.mxu0
      %v2668 = vadd.f32 %v2589, %v2667
      %v2669 = vpop.f32.mrf.mxu0
      %2670 = vmatprep.mubr.f32.mxu0 0.0
      %2671 = vmatmul.mubr.f32.gmra.mxu0 %v2599
      %v2672 = vpop.f32.mrf.mxu0
      %v2673 = vadd.f32 %v2594, %v2672
      %v2674 = vpop.f32.mrf.mxu0
      %2675 = vdwg.mxu0
      %v2677 = vsel %vm338, %v2511, 0
      %v2680 = vsel %vm338, %v2512, 0
      %2682 = vmatprep.subr.mxu0 0.0
      %2683 = vmatpush1.msra.mxu0 0.0
      %2684 = vmatprep.subr.mxu0 0.0
      %2685 = vmatpush1.msra.mxu0 0.0
      %2686 = vmatprep.subr.mxu0 0.0
      %2687 = vmatpush1.msra.mxu0 0.0
      %2688 = vmatprep.subr.mxu0 0.0
      %2689 = vmatpush1.msra.mxu0 0.0
      %2690 = vmatprep.subr.mxu0 0.0
      %2691 = vmatpush1.msra.mxu0 0.0
      %2692 = vmatprep.subr.mxu0 0.0
      %2693 = vmatpush1.msra.mxu0 0.0
      %2694 = vmatprep.subr.mxu0 0.0
      %2695 = vmatpush1.msra.mxu0 0.0
      %2696 = vmatprep.subr.mxu0 0.0
      %2697 = vmatpush1.msra.mxu0 0.0
      %2698 = vmatprep.subr.mxu0 0.0
      %2699 = vmatpush1.msra.mxu0 0.0
      %2700 = vmatprep.subr.mxu0 0.0
      %2701 = vmatpush1.msra.mxu0 0.0
      %2702 = vmatprep.subr.mxu0 0.0
      %2703 = vmatpush1.msra.mxu0 0.0
      %2704 = vmatprep.subr.mxu0 0.0
      %2705 = vmatpush1.msra.mxu0 0.0
      %2706 = vmatprep.subr.mxu0 0.0
      %2707 = vmatpush1.msra.mxu0 0.0
      %2708 = vmatprep.subr.mxu0 0.0
      %2709 = vmatpush1.msra.mxu0 0.0
      %2710 = vmatprep.subr.mxu0 0.0
      %2711 = vmatpush1.msra.mxu0 %v322
      %2712 = vmatprep.subr.mxu0 0.0
      %2713 = vmatpush1.msra.mxu0 %v321
      %2714 = vmatprep.subr.mxu0 0.0
      %2715 = vmatpush2.msra.mxu0 0.0
      %2716 = vmatprep.subr.mxu0 0.0
      %2717 = vmatpush2.msra.mxu0 0.0
      %2718 = vmatprep.subr.mxu0 0.0
      %2719 = vmatpush2.msra.mxu0 0.0
      %2720 = vmatprep.subr.mxu0 0.0
      %2721 = vmatpush2.msra.mxu0 0.0
      %2722 = vmatprep.subr.mxu0 0.0
      %2723 = vmatpush2.msra.mxu0 0.0
      %2724 = vmatprep.subr.mxu0 0.0
      %2725 = vmatpush2.msra.mxu0 0.0
      %2726 = vmatprep.subr.mxu0 0.0
      %2727 = vmatpush2.msra.mxu0 0.0
      %2728 = vmatprep.subr.mxu0 0.0
      %2729 = vmatpush2.msra.mxu0 0.0
      %2730 = vmatprep.subr.mxu0 0.0
      %2731 = vmatpush2.msra.mxu0 0.0
      %2732 = vmatprep.subr.mxu0 0.0
      %2733 = vmatpush2.msra.mxu0 0.0
      %2734 = vmatprep.subr.mxu0 0.0
      %2735 = vmatpush2.msra.mxu0 0.0
      %2736 = vmatprep.subr.mxu0 0.0
      %2737 = vmatpush2.msra.mxu0 0.0
      %2738 = vmatprep.subr.mxu0 0.0
      %2739 = vmatpush2.msra.mxu0 0.0
      %2740 = vmatprep.subr.mxu0 0.0
      %2741 = vmatpush2.msra.mxu0 0.0
      %2742 = vmatprep.subr.mxu0 0.0
      %2743 = vmatpush2.msra.mxu0 0.0
      %2744 = vmatprep.subr.mxu0 0.0
      %2745 = vmatpush2.msra.mxu0 0.0
      %2746 = vmatprep.mubr.f32.mxu0 0.0
      %2747 = vmatmul.mubr.f32.gmra.mxu0 %v2677
      %v2748 = vpop.f32.mrf.mxu0
      %v2749 = vadd.f32 0.0, %v2748
      %v2750 = vpop.f32.mrf.mxu0
      %2751 = vmatprep.mubr.f32.mxu0 0.0
      %2752 = vmatmul.mubr.f32.gmra.mxu0 %v2680
      %v2753 = vpop.f32.mrf.mxu0
      %v2754 = vadd.f32 0.0, %v2753
      %v2755 = vpop.f32.mrf.mxu0
      %2756 = vdwg.mxu0
      %v2757 = vadd.f32 %v2668, %v2749
      %v2758 = vadd.f32 %v2673, %v2754
      %v2759 = vrot.slane %v2511, 1
      %v2760 = vrot.slane %v2512, 1
      %v2761 = vsel %vm334, %v2759, %v2760
      %v2762 = vsel %vm338, %v2761, 0
      %v2764 = vsel %vm338, %v2760, 0
      %2766 = vmatprep.subr.mxu0 0.0
      %2767 = vmatpush1.msra.mxu0 0.0
      %2768 = vmatprep.subr.mxu0 0.0
      %2769 = vmatpush1.msra.mxu0 0.0
      %2770 = vmatprep.subr.mxu0 0.0
      %2771 = vmatpush1.msra.mxu0 0.0
      %2772 = vmatprep.subr.mxu0 0.0
      %2773 = vmatpush1.msra.mxu0 0.0
      %2774 = vmatprep.subr.mxu0 0.0
      %2775 = vmatpush1.msra.mxu0 0.0
      %2776 = vmatprep.subr.mxu0 0.0
      %2777 = vmatpush1.msra.mxu0 0.0
      %2778 = vmatprep.subr.mxu0 0.0
      %2779 = vmatpush1.msra.mxu0 0.0
      %2780 = vmatprep.subr.mxu0 0.0
      %2781 = vmatpush1.msra.mxu0 0.0
      %2782 = vmatprep.subr.mxu0 0.0
      %2783 = vmatpush1.msra.mxu0 0.0
      %2784 = vmatprep.subr.mxu0 0.0
      %2785 = vmatpush1.msra.mxu0 0.0
      %2786 = vmatprep.subr.mxu0 0.0
      %2787 = vmatpush1.msra.mxu0 0.0
      %2788 = vmatprep.subr.mxu0 0.0
      %2789 = vmatpush1.msra.mxu0 0.0
      %2790 = vmatprep.subr.mxu0 0.0
      %2791 = vmatpush1.msra.mxu0 0.0
      %2792 = vmatprep.subr.mxu0 0.0
      %2793 = vmatpush1.msra.mxu0 0.0
      %2794 = vmatprep.subr.mxu0 0.0
      %2795 = vmatpush1.msra.mxu0 %v325
      %2796 = vmatprep.subr.mxu0 0.0
      %2797 = vmatpush1.msra.mxu0 %v324
      %2798 = vmatprep.subr.mxu0 0.0
      %2799 = vmatpush2.msra.mxu0 0.0
      %2800 = vmatprep.subr.mxu0 0.0
      %2801 = vmatpush2.msra.mxu0 0.0
      %2802 = vmatprep.subr.mxu0 0.0
      %2803 = vmatpush2.msra.mxu0 0.0
      %2804 = vmatprep.subr.mxu0 0.0
      %2805 = vmatpush2.msra.mxu0 0.0
      %2806 = vmatprep.subr.mxu0 0.0
      %2807 = vmatpush2.msra.mxu0 0.0
      %2808 = vmatprep.subr.mxu0 0.0
      %2809 = vmatpush2.msra.mxu0 0.0
      %2810 = vmatprep.subr.mxu0 0.0
      %2811 = vmatpush2.msra.mxu0 0.0
      %2812 = vmatprep.subr.mxu0 0.0
      %2813 = vmatpush2.msra.mxu0 0.0
      %2814 = vmatprep.subr.mxu0 0.0
      %2815 = vmatpush2.msra.mxu0 0.0
      %2816 = vmatprep.subr.mxu0 0.0
      %2817 = vmatpush2.msra.mxu0 0.0
      %2818 = vmatprep.subr.mxu0 0.0
      %2819 = vmatpush2.msra.mxu0 0.0
      %2820 = vmatprep.subr.mxu0 0.0
      %2821 = vmatpush2.msra.mxu0 0.0
      %2822 = vmatprep.subr.mxu0 0.0
      %2823 = vmatpush2.msra.mxu0 0.0
      %2824 = vmatprep.subr.mxu0 0.0
      %2825 = vmatpush2.msra.mxu0 0.0
      %2826 = vmatprep.subr.mxu0 0.0
      %2827 = vmatpush2.msra.mxu0 0.0
      %2828 = vmatprep.subr.mxu0 0.0
      %2829 = vmatpush2.msra.mxu0 0.0
      %2830 = vmatprep.mubr.f32.mxu0 0.0
      %2831 = vmatmul.mubr.f32.gmra.mxu0 %v2762
      %v2832 = vpop.f32.mrf.mxu0
      %v2833 = vadd.f32 0.0, %v2832
      %v2834 = vpop.f32.mrf.mxu0
      %2835 = vmatprep.mubr.f32.mxu0 0.0
      %2836 = vmatmul.mubr.f32.gmra.mxu0 %v2764
      %v2837 = vpop.f32.mrf.mxu0
      %v2838 = vadd.f32 0.0, %v2837
      %v2839 = vpop.f32.mrf.mxu0
      %2840 = vdwg.mxu0
      %v2841 = vadd.f32 %v2757, %v2833
      %v2842 = vadd.f32 %v2758, %v2838
      %v2843 = vadd.f32 %v2841, %v668
      %v2844 = vadd.f32 %v2842, %v668
      %v2845 = vmax.f32 %v2843, 0.0
      %v2846 = vmax.f32 %v2844, 0.0
      %2849 = vrot.lane.b32.xlu0 %v2845, 120
      %v2850 = vpop.permute.xlu0 %2849
      %2851 = vrot.lane.b32.xlu0 %v2846, 120
      %v2852 = vpop.permute.xlu0 %2851
      %v2855 = vmax.f32 %v2845, %v2850
      %v2856 = vmax.f32 %v2846, %v2852
      %2859 = vrot.lane.b32.xlu0 %v2855, 112
      %v2860 = vpop.permute.xlu0 %2859
      %2861 = vrot.lane.b32.xlu0 %v2856, 112
      %v2862 = vpop.permute.xlu0 %2861
      %v2865 = vmax.f32 %v2855, %v2860
      %v2866 = vmax.f32 %v2856, %v2862
      %s2867 = scalar_lea.vmem %s313, 96
      %2868 = vst.msk [vmem:[%s2867] sm:$0xff] %vm694, %v2865
      %2869 = vst.msk [vmem:[%s2867 + $0x8] sm:$0x7f] %vm696, %v2866
      %v2870 = vld [vmem:[%s2510] sm:$0xff]
      %v2871 = vld [vmem:[%s2510 + $0x8] sm:$0xff]
      %v2872 = vld [vmem:[%s301] sm:$0xff]
      %v2873 = vld [vmem:[%s301 + $0x8] sm:$0xff]
      %v2876 = vrot.slane %v2870, 1
      %v2877 = vrot.slane %v2871, 1
      %v2878 = vsel %vm334, %v2876, %v2877
      %v2879 = vsel %vm338, %v2878, 0
      %v2881 = vsel %vm338, %v2877, 0
      %2883 = vmatprep.subr.mxu0 0.0
      %2884 = vmatpush1.msra.mxu0 0.0
      %2885 = vmatprep.subr.mxu0 0.0
      %2886 = vmatpush1.msra.mxu0 0.0
      %2887 = vmatprep.subr.mxu0 0.0
      %2888 = vmatpush1.msra.mxu0 0.0
      %2889 = vmatprep.subr.mxu0 0.0
      %2890 = vmatpush1.msra.mxu0 0.0
      %2891 = vmatprep.subr.mxu0 0.0
      %2892 = vmatpush1.msra.mxu0 0.0
      %2893 = vmatprep.subr.mxu0 0.0
      %2894 = vmatpush1.msra.mxu0 0.0
      %2895 = vmatprep.subr.mxu0 0.0
      %2896 = vmatpush1.msra.mxu0 0.0
      %2897 = vmatprep.subr.mxu0 0.0
      %2898 = vmatpush1.msra.mxu0 0.0
      %2899 = vmatprep.subr.mxu0 0.0
      %2900 = vmatpush1.msra.mxu0 0.0
      %2901 = vmatprep.subr.mxu0 0.0
      %2902 = vmatpush1.msra.mxu0 0.0
      %2903 = vmatprep.subr.mxu0 0.0
      %2904 = vmatpush1.msra.mxu0 0.0
      %2905 = vmatprep.subr.mxu0 0.0
      %2906 = vmatpush1.msra.mxu0 0.0
      %2907 = vmatprep.subr.mxu0 0.0
      %2908 = vmatpush1.msra.mxu0 0.0
      %2909 = vmatprep.subr.mxu0 0.0
      %2910 = vmatpush1.msra.mxu0 0.0
      %2911 = vmatprep.subr.mxu0 0.0
      %2912 = vmatpush1.msra.mxu0 %v319
      %2913 = vmatprep.subr.mxu0 0.0
      %2914 = vmatpush1.msra.mxu0 %v318
      %2915 = vmatprep.subr.mxu0 0.0
      %2916 = vmatpush2.msra.mxu0 0.0
      %2917 = vmatprep.subr.mxu0 0.0
      %2918 = vmatpush2.msra.mxu0 0.0
      %2919 = vmatprep.subr.mxu0 0.0
      %2920 = vmatpush2.msra.mxu0 0.0
      %2921 = vmatprep.subr.mxu0 0.0
      %2922 = vmatpush2.msra.mxu0 0.0
      %2923 = vmatprep.subr.mxu0 0.0
      %2924 = vmatpush2.msra.mxu0 0.0
      %2925 = vmatprep.subr.mxu0 0.0
      %2926 = vmatpush2.msra.mxu0 0.0
      %2927 = vmatprep.subr.mxu0 0.0
      %2928 = vmatpush2.msra.mxu0 0.0
      %2929 = vmatprep.subr.mxu0 0.0
      %2930 = vmatpush2.msra.mxu0 0.0
      %2931 = vmatprep.subr.mxu0 0.0
      %2932 = vmatpush2.msra.mxu0 0.0
      %2933 = vmatprep.subr.mxu0 0.0
      %2934 = vmatpush2.msra.mxu0 0.0
      %2935 = vmatprep.subr.mxu0 0.0
      %2936 = vmatpush2.msra.mxu0 0.0
      %2937 = vmatprep.subr.mxu0 0.0
      %2938 = vmatpush2.msra.mxu0 0.0
      %2939 = vmatprep.subr.mxu0 0.0
      %2940 = vmatpush2.msra.mxu0 0.0
      %2941 = vmatprep.subr.mxu0 0.0
      %2942 = vmatpush2.msra.mxu0 0.0
      %2943 = vmatprep.subr.mxu0 0.0
      %2944 = vmatpush2.msra.mxu0 0.0
      %2945 = vmatprep.subr.mxu0 0.0
      %2946 = vmatpush2.msra.mxu0 0.0
      %2947 = vmatprep.mubr.f32.mxu0 0.0
      %2948 = vmatmul.mubr.f32.gmra.mxu0 %v2879
      %v2949 = vpop.f32.mrf.mxu0
      %v2950 = vadd.f32 0.0, %v2949
      %v2951 = vpop.f32.mrf.mxu0
      %2952 = vmatprep.mubr.f32.mxu0 0.0
      %2953 = vmatmul.mubr.f32.gmra.mxu0 %v2881
      %v2954 = vpop.f32.mrf.mxu0
      %v2955 = vadd.f32 0.0, %v2954
      %v2956 = vpop.f32.mrf.mxu0
      %2957 = vdwg.mxu0
      %v2958 = vsel %vm338, %v2870, 0
      %v2960 = vsel %vm338, %v2871, 0
      %2962 = vmatprep.subr.mxu0 0.0
      %2963 = vmatpush1.msra.mxu0 0.0
      %2964 = vmatprep.subr.mxu0 0.0
      %2965 = vmatpush1.msra.mxu0 0.0
      %2966 = vmatprep.subr.mxu0 0.0
      %2967 = vmatpush1.msra.mxu0 0.0
      %2968 = vmatprep.subr.mxu0 0.0
      %2969 = vmatpush1.msra.mxu0 0.0
      %2970 = vmatprep.subr.mxu0 0.0
      %2971 = vmatpush1.msra.mxu0 0.0
      %2972 = vmatprep.subr.mxu0 0.0
      %2973 = vmatpush1.msra.mxu0 0.0
      %2974 = vmatprep.subr.mxu0 0.0
      %2975 = vmatpush1.msra.mxu0 0.0
      %2976 = vmatprep.subr.mxu0 0.0
      %2977 = vmatpush1.msra.mxu0 0.0
      %2978 = vmatprep.subr.mxu0 0.0
      %2979 = vmatpush1.msra.mxu0 0.0
      %2980 = vmatprep.subr.mxu0 0.0
      %2981 = vmatpush1.msra.mxu0 0.0
      %2982 = vmatprep.subr.mxu0 0.0
      %2983 = vmatpush1.msra.mxu0 0.0
      %2984 = vmatprep.subr.mxu0 0.0
      %2985 = vmatpush1.msra.mxu0 0.0
      %2986 = vmatprep.subr.mxu0 0.0
      %2987 = vmatpush1.msra.mxu0 0.0
      %2988 = vmatprep.subr.mxu0 0.0
      %2989 = vmatpush1.msra.mxu0 0.0
      %2990 = vmatprep.subr.mxu0 0.0
      %2991 = vmatpush1.msra.mxu0 %v316
      %2992 = vmatprep.subr.mxu0 0.0
      %2993 = vmatpush1.msra.mxu0 %v315
      %2994 = vmatprep.subr.mxu0 0.0
      %2995 = vmatpush2.msra.mxu0 0.0
      %2996 = vmatprep.subr.mxu0 0.0
      %2997 = vmatpush2.msra.mxu0 0.0
      %2998 = vmatprep.subr.mxu0 0.0
      %2999 = vmatpush2.msra.mxu0 0.0
      %3000 = vmatprep.subr.mxu0 0.0
      %3001 = vmatpush2.msra.mxu0 0.0
      %3002 = vmatprep.subr.mxu0 0.0
      %3003 = vmatpush2.msra.mxu0 0.0
      %3004 = vmatprep.subr.mxu0 0.0
      %3005 = vmatpush2.msra.mxu0 0.0
      %3006 = vmatprep.subr.mxu0 0.0
      %3007 = vmatpush2.msra.mxu0 0.0
      %3008 = vmatprep.subr.mxu0 0.0
      %3009 = vmatpush2.msra.mxu0 0.0
      %3010 = vmatprep.subr.mxu0 0.0
      %3011 = vmatpush2.msra.mxu0 0.0
      %3012 = vmatprep.subr.mxu0 0.0
      %3013 = vmatpush2.msra.mxu0 0.0
      %3014 = vmatprep.subr.mxu0 0.0
      %3015 = vmatpush2.msra.mxu0 0.0
      %3016 = vmatprep.subr.mxu0 0.0
      %3017 = vmatpush2.msra.mxu0 0.0
      %3018 = vmatprep.subr.mxu0 0.0
      %3019 = vmatpush2.msra.mxu0 0.0
      %3020 = vmatprep.subr.mxu0 0.0
      %3021 = vmatpush2.msra.mxu0 0.0
      %3022 = vmatprep.subr.mxu0 0.0
      %3023 = vmatpush2.msra.mxu0 0.0
      %3024 = vmatprep.subr.mxu0 0.0
      %3025 = vmatpush2.msra.mxu0 0.0
      %3026 = vmatprep.mubr.f32.mxu0 0.0
      %3027 = vmatmul.mubr.f32.gmra.mxu0 %v2958
      %v3028 = vpop.f32.mrf.mxu0
      %v3029 = vadd.f32 %v2950, %v3028
      %v3030 = vpop.f32.mrf.mxu0
      %3031 = vmatprep.mubr.f32.mxu0 0.0
      %3032 = vmatmul.mubr.f32.gmra.mxu0 %v2960
      %v3033 = vpop.f32.mrf.mxu0
      %v3034 = vadd.f32 %v2955, %v3033
      %v3035 = vpop.f32.mrf.mxu0
      %3036 = vdwg.mxu0
      %v3038 = vsel %vm338, %v2872, 0
      %v3041 = vsel %vm338, %v2873, 0
      %3043 = vmatprep.subr.mxu0 0.0
      %3044 = vmatpush1.msra.mxu0 0.0
      %3045 = vmatprep.subr.mxu0 0.0
      %3046 = vmatpush1.msra.mxu0 0.0
      %3047 = vmatprep.subr.mxu0 0.0
      %3048 = vmatpush1.msra.mxu0 0.0
      %3049 = vmatprep.subr.mxu0 0.0
      %3050 = vmatpush1.msra.mxu0 0.0
      %3051 = vmatprep.subr.mxu0 0.0
      %3052 = vmatpush1.msra.mxu0 0.0
      %3053 = vmatprep.subr.mxu0 0.0
      %3054 = vmatpush1.msra.mxu0 0.0
      %3055 = vmatprep.subr.mxu0 0.0
      %3056 = vmatpush1.msra.mxu0 0.0
      %3057 = vmatprep.subr.mxu0 0.0
      %3058 = vmatpush1.msra.mxu0 0.0
      %3059 = vmatprep.subr.mxu0 0.0
      %3060 = vmatpush1.msra.mxu0 0.0
      %3061 = vmatprep.subr.mxu0 0.0
      %3062 = vmatpush1.msra.mxu0 0.0
      %3063 = vmatprep.subr.mxu0 0.0
      %3064 = vmatpush1.msra.mxu0 0.0
      %3065 = vmatprep.subr.mxu0 0.0
      %3066 = vmatpush1.msra.mxu0 0.0
      %3067 = vmatprep.subr.mxu0 0.0
      %3068 = vmatpush1.msra.mxu0 0.0
      %3069 = vmatprep.subr.mxu0 0.0
      %3070 = vmatpush1.msra.mxu0 0.0
      %3071 = vmatprep.subr.mxu0 0.0
      %3072 = vmatpush1.msra.mxu0 %v322
      %3073 = vmatprep.subr.mxu0 0.0
      %3074 = vmatpush1.msra.mxu0 %v321
      %3075 = vmatprep.subr.mxu0 0.0
      %3076 = vmatpush2.msra.mxu0 0.0
      %3077 = vmatprep.subr.mxu0 0.0
      %3078 = vmatpush2.msra.mxu0 0.0
      %3079 = vmatprep.subr.mxu0 0.0
      %3080 = vmatpush2.msra.mxu0 0.0
      %3081 = vmatprep.subr.mxu0 0.0
      %3082 = vmatpush2.msra.mxu0 0.0
      %3083 = vmatprep.subr.mxu0 0.0
      %3084 = vmatpush2.msra.mxu0 0.0
      %3085 = vmatprep.subr.mxu0 0.0
      %3086 = vmatpush2.msra.mxu0 0.0
      %3087 = vmatprep.subr.mxu0 0.0
      %3088 = vmatpush2.msra.mxu0 0.0
      %3089 = vmatprep.subr.mxu0 0.0
      %3090 = vmatpush2.msra.mxu0 0.0
      %3091 = vmatprep.subr.mxu0 0.0
      %3092 = vmatpush2.msra.mxu0 0.0
      %3093 = vmatprep.subr.mxu0 0.0
      %3094 = vmatpush2.msra.mxu0 0.0
      %3095 = vmatprep.subr.mxu0 0.0
      %3096 = vmatpush2.msra.mxu0 0.0
      %3097 = vmatprep.subr.mxu0 0.0
      %3098 = vmatpush2.msra.mxu0 0.0
      %3099 = vmatprep.subr.mxu0 0.0
      %3100 = vmatpush2.msra.mxu0 0.0
      %3101 = vmatprep.subr.mxu0 0.0
      %3102 = vmatpush2.msra.mxu0 0.0
      %3103 = vmatprep.subr.mxu0 0.0
      %3104 = vmatpush2.msra.mxu0 0.0
      %3105 = vmatprep.subr.mxu0 0.0
      %3106 = vmatpush2.msra.mxu0 0.0
      %3107 = vmatprep.mubr.f32.mxu0 0.0
      %3108 = vmatmul.mubr.f32.gmra.mxu0 %v3038
      %v3109 = vpop.f32.mrf.mxu0
      %v3110 = vadd.f32 0.0, %v3109
      %v3111 = vpop.f32.mrf.mxu0
      %3112 = vmatprep.mubr.f32.mxu0 0.0
      %3113 = vmatmul.mubr.f32.gmra.mxu0 %v3041
      %v3114 = vpop.f32.mrf.mxu0
      %v3115 = vadd.f32 0.0, %v3114
      %v3116 = vpop.f32.mrf.mxu0
      %3117 = vdwg.mxu0
      %v3118 = vadd.f32 %v3029, %v3110
      %v3119 = vadd.f32 %v3034, %v3115
      %v3120 = vrot.slane %v2872, 1
      %v3121 = vrot.slane %v2873, 1
      %v3122 = vsel %vm334, %v3120, %v3121
      %v3123 = vsel %vm338, %v3122, 0
      %v3125 = vsel %vm338, %v3121, 0
      %3127 = vmatprep.subr.mxu0 0.0
      %3128 = vmatpush1.msra.mxu0 0.0
      %3129 = vmatprep.subr.mxu0 0.0
      %3130 = vmatpush1.msra.mxu0 0.0
      %3131 = vmatprep.subr.mxu0 0.0
      %3132 = vmatpush1.msra.mxu0 0.0
      %3133 = vmatprep.subr.mxu0 0.0
      %3134 = vmatpush1.msra.mxu0 0.0
      %3135 = vmatprep.subr.mxu0 0.0
      %3136 = vmatpush1.msra.mxu0 0.0
      %3137 = vmatprep.subr.mxu0 0.0
      %3138 = vmatpush1.msra.mxu0 0.0
      %3139 = vmatprep.subr.mxu0 0.0
      %3140 = vmatpush1.msra.mxu0 0.0
      %3141 = vmatprep.subr.mxu0 0.0
      %3142 = vmatpush1.msra.mxu0 0.0
      %3143 = vmatprep.subr.mxu0 0.0
      %3144 = vmatpush1.msra.mxu0 0.0
      %3145 = vmatprep.subr.mxu0 0.0
      %3146 = vmatpush1.msra.mxu0 0.0
      %3147 = vmatprep.subr.mxu0 0.0
      %3148 = vmatpush1.msra.mxu0 0.0
      %3149 = vmatprep.subr.mxu0 0.0
      %3150 = vmatpush1.msra.mxu0 0.0
      %3151 = vmatprep.subr.mxu0 0.0
      %3152 = vmatpush1.msra.mxu0 0.0
      %3153 = vmatprep.subr.mxu0 0.0
      %3154 = vmatpush1.msra.mxu0 0.0
      %3155 = vmatprep.subr.mxu0 0.0
      %3156 = vmatpush1.msra.mxu0 %v325
      %3157 = vmatprep.subr.mxu0 0.0
      %3158 = vmatpush1.msra.mxu0 %v324
      %3159 = vmatprep.subr.mxu0 0.0
      %3160 = vmatpush2.msra.mxu0 0.0
      %3161 = vmatprep.subr.mxu0 0.0
      %3162 = vmatpush2.msra.mxu0 0.0
      %3163 = vmatprep.subr.mxu0 0.0
      %3164 = vmatpush2.msra.mxu0 0.0
      %3165 = vmatprep.subr.mxu0 0.0
      %3166 = vmatpush2.msra.mxu0 0.0
      %3167 = vmatprep.subr.mxu0 0.0
      %3168 = vmatpush2.msra.mxu0 0.0
      %3169 = vmatprep.subr.mxu0 0.0
      %3170 = vmatpush2.msra.mxu0 0.0
      %3171 = vmatprep.subr.mxu0 0.0
      %3172 = vmatpush2.msra.mxu0 0.0
      %3173 = vmatprep.subr.mxu0 0.0
      %3174 = vmatpush2.msra.mxu0 0.0
      %3175 = vmatprep.subr.mxu0 0.0
      %3176 = vmatpush2.msra.mxu0 0.0
      %3177 = vmatprep.subr.mxu0 0.0
      %3178 = vmatpush2.msra.mxu0 0.0
      %3179 = vmatprep.subr.mxu0 0.0
      %3180 = vmatpush2.msra.mxu0 0.0
      %3181 = vmatprep.subr.mxu0 0.0
      %3182 = vmatpush2.msra.mxu0 0.0
      %3183 = vmatprep.subr.mxu0 0.0
      %3184 = vmatpush2.msra.mxu0 0.0
      %3185 = vmatprep.subr.mxu0 0.0
      %3186 = vmatpush2.msra.mxu0 0.0
      %3187 = vmatprep.subr.mxu0 0.0
      %3188 = vmatpush2.msra.mxu0 0.0
      %3189 = vmatprep.subr.mxu0 0.0
      %3190 = vmatpush2.msra.mxu0 0.0
      %3191 = vmatprep.mubr.f32.mxu0 0.0
      %3192 = vmatmul.mubr.f32.gmra.mxu0 %v3123
      %v3193 = vpop.f32.mrf.mxu0
      %v3194 = vadd.f32 0.0, %v3193
      %v3195 = vpop.f32.mrf.mxu0
      %3196 = vmatprep.mubr.f32.mxu0 0.0
      %3197 = vmatmul.mubr.f32.gmra.mxu0 %v3125
      %v3198 = vpop.f32.mrf.mxu0
      %v3199 = vadd.f32 0.0, %v3198
      %v3200 = vpop.f32.mrf.mxu0
      %3201 = vdwg.mxu0
      %v3202 = vadd.f32 %v3118, %v3194
      %v3203 = vadd.f32 %v3119, %v3199
      %v3204 = vadd.f32 %v3202, %v668
      %v3205 = vadd.f32 %v3203, %v668
      %v3206 = vmax.f32 %v3204, 0.0
      %v3207 = vmax.f32 %v3205, 0.0
      %3210 = vrot.lane.b32.xlu0 %v3206, 120
      %v3211 = vpop.permute.xlu0 %3210
      %3212 = vrot.lane.b32.xlu0 %v3207, 120
      %v3213 = vpop.permute.xlu0 %3212
      %v3216 = vmax.f32 %v3206, %v3211
      %v3217 = vmax.f32 %v3207, %v3213
      %3220 = vrot.lane.b32.xlu0 %v3216, 112
      %v3221 = vpop.permute.xlu0 %3220
      %3222 = vrot.lane.b32.xlu0 %v3217, 112
      %v3223 = vpop.permute.xlu0 %3222
      %v3226 = vmax.f32 %v3216, %v3221
      %v3227 = vmax.f32 %v3217, %v3223
      %s3228 = scalar_lea.vmem %s313, 112
      %3229 = vst.msk [vmem:[%s3228] sm:$0xff] %vm694, %v3226
      %3230 = vst.msk [vmem:[%s3228 + $0x8] sm:$0x7f] %vm696, %v3227
      %s3231 = smul.u32 8, %s20
      %p3232 = scmp.lt.s32.totalorder %s19, 1
      %s3233 = scalar_select %p3232, %s19, 1
      %p3234 = scmp.lt.s32.totalorder %s3231, 15
      %s3235 = scalar_select %p3234, %s3231, 15
      %s3236 = smul.addr %s3235, 2
      %s3237 = smul.addr %s3233, 32
      %s3238 = sadd.s32 %s3236, %s3237
      %s3239 = smul.addr %s3238, 8
      %s3240 = scalar_lea.vmem %s4, %s3239
      // Predicated region
      $region37: #{ic_model_forward.3} parent=35 // pred_check
        %p3241 = pneg %p149
      $region38: #{ic_model_forward.3} parent=35 // pred_check_branch
        %3243 = sbr.rel (%p3241) target = $region40
      $region39: #{ic_model_forward.3} parent=35 // pred_region
        %s3244 = smul.u32 8, %s20
      $region40: #{ic_model_forward.3} parent=35 // pred_fallthru
        _
    $region36: #{ic_model_forward.3} parent=5 // pred_fallthru
      _
    %p3245 = scmp.le.s32.totalorder 2, %s10
    // Predicated region
    $region41: #{ic_model_forward.3} parent=5 // pred_check
      %p3246 = pneg %p3245
    $region42: #{ic_model_forward.3} parent=5 // pred_check_branch
      %3248 = sbr.rel (%p3246) target = $region44
    $region43: #{ic_model_forward.3} parent=5 // pred_region
      %s3249 = ssub.s32 %s10, 2
      // Predicated region
      $region45: #{ic_model_forward.3} parent=43 // pred_check
        %p3250 = pneg %p155
      $region46: #{ic_model_forward.3} parent=43 // pred_check_branch
        %3252 = sbr.rel (%p3250) target = $region48
      $region47: #{ic_model_forward.3} parent=43 // pred_region
        %s3253 = smul.u32 8, %s22
        %p3254 = scmp.lt.s32.totalorder %s21, 1
        %s3255 = scalar_select %p3254, %s21, 1
        %p3256 = scmp.lt.s32.totalorder %s3253, 15
        %s3257 = scalar_select %p3256, %s3253, 15
        %s3258 = smul.addr %s3257, 2
        %s3259 = smul.addr %s3255, 32
        %s3260 = sadd.s32 %s3258, %s3259
        %s3261 = smul.addr %s3260, 8
        %s3262 = scalar_lea.vmem %s4, %s3261
      $region48: #{ic_model_forward.3} parent=43 // pred_fallthru
        _
    $region44: #{ic_model_forward.3} parent=5 // pred_fallthru
      _
  $region6: #{ic_model_forward.3} parent=0 // loop_footer
    %s14 = sadd.s32 1, %s10
  $region7: #{ic_model_forward.3} parent=0 // loop_footer_branch
    %9 = sbr.rel target = $region3
  $region8: #{ic_model_forward.3} parent=0 // loop_exit
    _

// kernel: ic_model_forward.4
$region0: #{ic_model_forward.4}
  #allocation0 [shape = 'u32[]', space=smem, size = 0x4, offset = 0x4, fixed_abs, tag = 'smem constant byte address 0x4 - core index']
  #allocation1 [shape = 'u32[144,128]{1,0:T(1,128)}', space=vmem, size = 0x12000, scoped, tag = 'internal scratch']
  %s0 = inlined_call_operand.vmem [shape: f32[2,4,4,128], index: 0, kind: input, shape index: {}, may-alias: {0,1}]
  %s1 = inlined_call_operand.vmem [shape: f32[2,4,4,128], index: 1, kind: input, shape index: {}, may-alias: {0,1}]
  %s2 = inlined_call_operand.vmem [shape: f32[2,2,128,96], index: 2, kind: input, shape index: {}]
  %s3 = inlined_call_operand.vmem [shape: f32[1,96], index: 3, kind: input, shape index: {}]
  %s4 = inlined_call_operand.vmem [shape: f32[2,3,3,24], index: 4, kind: output, shape index: {}]
  %s5 = sld [smem:[#allocation0]]
  $region49: #{ic_model_forward.4} parent=0
    _
  %s7 = ssub.s32 1, %s5
  %s8 = scalar_select 0, %s7, %s5
  loop: start=0, step=1, limit=4
  $region2: #{ic_model_forward.4} parent=0 // loop_pre_header
    _
  $region3: #{ic_model_forward.4} parent=0 // loop_header
    %s10 = sphi 0, %s14
    %p11 = scmp.ge.s32.totalorder %s10, 4
    %s17 = sphi 0, %s29
    %s18 = sphi 0, %s25
    %s19 = sphi 0, %s17
    %s20 = sphi 0, %s18
    %s21 = sphi 0, %s19
    %s22 = sphi 0, %s20
    %s34 = sphi 0, %s36
    %s37 = sphi 0, %s34
    %s38 = sphi 0, %s37
    %s54 = sphi 0, %s38
    %s66 = sphi 0, %s68
    %s69 = sphi 0, %s66
    %s70 = sphi 0, %s69
    %s86 = sphi 0, %s70
    %s90 = sphi 0, %s90
    %s92 = sphi 0, %s90
    %s93 = sphi 0, %s92
    %s107 = sphi 0, %s93
    %s111 = sphi 0, %s111
    %s113 = sphi 0, %s111
    %s114 = sphi 0, %s113
    %s128 = sphi 0, %s114
    %s136 = sphi 0, %s138
    %s139 = sphi 0, %s136
    %s140 = sphi 0, %s139
    %s156 = sphi 0, %s140
  $region4: #{ic_model_forward.4} parent=0 // loop_header_branch
    %13 = sbr.rel (%p11) target = $region8
  $region5: #{ic_model_forward.4} parent=0 // loop_body
    %s15 = ssub.s32 %s10, 1
    %s16 = ssub.s32 %s10, 2
    %s23 = sadd.s32 1, %s18
    %p24 = scmp.ge.s32.totalorder %s23, 1
    %s25 = scalar_select %p24, 0, %s23
    %s26 = sadd.s32 1, %s17
    %s27 = scalar_select %p24, %s26, %s17
    %p28 = scmp.ge.s32.totalorder %s27, 2
    %s29 = scalar_select %p28, 0, %s27
    %s30 = ssub.s32 %s17, %s29
    %s31 = ssub.s32 %s18, %s25
    %s32 = sor.u32 %s30, %s31
    %p33 = scmp.eq.s32.totalorder %s32, 0
    %s35 = sadd.s32 %s34, 1
    %s36 = scalar_select %p33, %s34, %s35
    %p39 = pneg %p33
    %p40 = scmp.eq.s32.totalorder %s10, 1
    %p41 = por %p39, %p40
    %p42 = scmp.ne.s32.totalorder %s34, %s37
    %p43 = scmp.eq.s32.totalorder %s10, 0
    %p44 = por %p42, %p43
    %p45 = scmp.ne.s32.totalorder %s34, %s37
    %p46 = scmp.eq.s32.totalorder %s15, 1
    %p47 = por %p45, %p46
    %p48 = scmp.ne.s32.totalorder %s37, %s38
    %p49 = scmp.eq.s32.totalorder %s15, 0
    %p50 = por %p48, %p49
    %p51 = scmp.ne.s32.totalorder %s37, %s38
    %p52 = scmp.eq.s32.totalorder %s16, 1
    %p53 = por %p51, %p52
    %p55 = scmp.ne.s32.totalorder %s38, %s54
    %p56 = scmp.eq.s32.totalorder %s16, 0
    %p57 = por %p55, %p56
    %s58 = sadd.s32 %s18, 1
    %s59 = smul.u32 %s58, 3
    %s60 = sadd.s32 %s25, 1
    %s61 = smul.u32 %s60, 3
    %s62 = ssub.s32 %s17, %s29
    %s63 = ssub.s32 %s59, %s61
    %s64 = sor.u32 %s62, %s63
    %p65 = scmp.eq.s32.totalorder %s64, 0
    %s67 = sadd.s32 %s66, 1
    %s68 = scalar_select %p65, %s66, %s67
    %p71 = pneg %p65
    %p72 = scmp.eq.s32.totalorder %s10, 1
    %p73 = por %p71, %p72
    %p74 = scmp.ne.s32.totalorder %s66, %s69
    %p75 = scmp.eq.s32.totalorder %s10, 0
    %p76 = por %p74, %p75
    %p77 = scmp.ne.s32.totalorder %s66, %s69
    %p78 = scmp.eq.s32.totalorder %s15, 1
    %p79 = por %p77, %p78
    %p80 = scmp.ne.s32.totalorder %s69, %s70
    %p81 = scmp.eq.s32.totalorder %s15, 0
    %p82 = por %p80, %p81
    %p83 = scmp.ne.s32.totalorder %s69, %s70
    %p84 = scmp.eq.s32.totalorder %s16, 1
    %p85 = por %p83, %p84
    %p87 = scmp.ne.s32.totalorder %s70, %s86
    %p88 = scmp.eq.s32.totalorder %s16, 0
    %p89 = por %p87, %p88
    %s91 = sadd.s32 %s90, 1
    %p94 = scmp.eq.s32.totalorder %s10, 1
    %p95 = scmp.ne.s32.totalorder %s90, %s92
    %p96 = scmp.eq.s32.totalorder %s10, 0
    %p97 = por %p95, %p96
    %p98 = scmp.ne.s32.totalorder %s90, %s92
    %p99 = scmp.eq.s32.totalorder %s15, 1
    %p100 = por %p98, %p99
    %p101 = scmp.ne.s32.totalorder %s92, %s93
    %p102 = scmp.eq.s32.totalorder %s15, 0
    %p103 = por %p101, %p102
    %p104 = scmp.ne.s32.totalorder %s92, %s93
    %p105 = scmp.eq.s32.totalorder %s16, 1
    %p106 = por %p104, %p105
    %p108 = scmp.ne.s32.totalorder %s93, %s107
    %p109 = scmp.eq.s32.totalorder %s16, 0
    %p110 = por %p108, %p109
    %s112 = sadd.s32 %s111, 1
    %p115 = scmp.eq.s32.totalorder %s10, 1
    %p116 = scmp.ne.s32.totalorder %s111, %s113
    %p117 = scmp.eq.s32.totalorder %s10, 0
    %p118 = por %p116, %p117
    %p119 = scmp.ne.s32.totalorder %s111, %s113
    %p120 = scmp.eq.s32.totalorder %s15, 1
    %p121 = por %p119, %p120
    %p122 = scmp.ne.s32.totalorder %s113, %s114
    %p123 = scmp.eq.s32.totalorder %s15, 0
    %p124 = por %p122, %p123
    %p125 = scmp.ne.s32.totalorder %s113, %s114
    %p126 = scmp.eq.s32.totalorder %s16, 1
    %p127 = por %p125, %p126
    %p129 = scmp.ne.s32.totalorder %s114, %s128
    %p130 = scmp.eq.s32.totalorder %s16, 0
    %p131 = por %p129, %p130
    %s132 = ssub.s32 %s17, %s29
    %s133 = ssub.s32 %s18, %s25
    %s134 = sor.u32 %s132, %s133
    %p135 = scmp.eq.s32.totalorder %s134, 0
    %s137 = sadd.s32 %s136, 1
    %s138 = scalar_select %p135, %s136, %s137
    %p141 = pneg %p135
    %p142 = scmp.eq.s32.totalorder %s10, 1
    %p143 = por %p141, %p142
    %p144 = scmp.ne.s32.totalorder %s136, %s139
    %p145 = scmp.eq.s32.totalorder %s10, 0
    %p146 = por %p144, %p145
    %p147 = scmp.ne.s32.totalorder %s136, %s139
    %p148 = scmp.eq.s32.totalorder %s15, 1
    %p149 = por %p147, %p148
    %p150 = scmp.ne.s32.totalorder %s139, %s140
    %p151 = scmp.eq.s32.totalorder %s15, 0
    %p152 = por %p150, %p151
    %p153 = scmp.ne.s32.totalorder %s139, %s140
    %p154 = scmp.eq.s32.totalorder %s16, 1
    %p155 = por %p153, %p154
    %p157 = scmp.ne.s32.totalorder %s140, %s156
    %p158 = scmp.eq.s32.totalorder %s16, 0
    %p159 = por %p157, %p158
    %p160 = scmp.le.s32.totalorder 1, %s10
    %p161 = scmp.lt.s32.totalorder %s10, 3
    %p162 = pnand %p160, %p161
    %p163 = pneg %p162
    // Predicated region
    $region9: #{ic_model_forward.4} parent=5 // pred_check
      _
    $region10: #{ic_model_forward.4} parent=5 // pred_check_branch
      %165 = sbr.rel (%p162) target = $region12
    $region11: #{ic_model_forward.4} parent=5 // pred_region
      %s166 = ssub.s32 %s10, 1
      // Predicated region
      $region13: #{ic_model_forward.4} parent=11 // pred_check
        %p167 = pneg %p103
      $region14: #{ic_model_forward.4} parent=11 // pred_check_branch
        %169 = sbr.rel (%p167) target = $region16
      $region15: #{ic_model_forward.4} parent=11 // pred_region
        _
      $region16: #{ic_model_forward.4} parent=11 // pred_fallthru
        _
      // Predicated region
      $region17: #{ic_model_forward.4} parent=11 // pred_check
        %p170 = pneg %p124
      $region18: #{ic_model_forward.4} parent=11 // pred_check_branch
        %172 = sbr.rel (%p170) target = $region20
      $region19: #{ic_model_forward.4} parent=11 // pred_region
        _
      $region20: #{ic_model_forward.4} parent=11 // pred_fallthru
        _
    $region12: #{ic_model_forward.4} parent=5 // pred_fallthru
      _
    %p173 = scmp.lt.s32.totalorder %s10, 2
    // Predicated region
    $region21: #{ic_model_forward.4} parent=5 // pred_check
      %p174 = pneg %p173
    $region22: #{ic_model_forward.4} parent=5 // pred_check_branch
      %176 = sbr.rel (%p174) target = $region24
    $region23: #{ic_model_forward.4} parent=5 // pred_region
      // Predicated region
      $region25: #{ic_model_forward.4} parent=23 // pred_check
        %p177 = pneg %p44
      $region26: #{ic_model_forward.4} parent=23 // pred_check_branch
        %179 = sbr.rel (%p177) target = $region28
      $region27: #{ic_model_forward.4} parent=23 // pred_region
        %s180 = smul.u32 3, %s18
        %s181 = ssub.s32 4, %s180
        %p182 = scmp.lt.s32.totalorder %s181, 3
        %s183 = scalar_select %p182, %s181, 3
        %s184 = smul.u32 64, %s183
        %p185 = scmp.lt.s32.totalorder %s17, 1
        %s186 = scalar_select %p185, %s17, 1
        %p187 = scmp.lt.s32.totalorder %s180, 3
        %s188 = scalar_select %p187, %s180, 3
        %s189 = smul.addr %s186, 4
        %s190 = sadd.s32 %s188, %s189
        %s191 = smul.addr %s190, 4
        %s192 = scalar_lea.vmem %s0, %s191
        %s193 = smul.u32 3, %s18
        %s194 = ssub.s32 4, %s193
        %p195 = scmp.lt.s32.totalorder %s194, 3
        %s196 = scalar_select %p195, %s194, 3
        %s197 = smul.u32 64, %s196
      $region28: #{ic_model_forward.4} parent=23 // pred_fallthru
        _
      // Predicated region
      $region29: #{ic_model_forward.4} parent=23 // pred_check
        %p198 = pneg %p76
      $region30: #{ic_model_forward.4} parent=23 // pred_check_branch
        %200 = sbr.rel (%p198) target = $region32
      $region31: #{ic_model_forward.4} parent=23 // pred_region
        %s201 = sadd.s32 %s18, 1
        %s202 = smul.u32 %s201, 3
        %p203 = scmp.lt.s32.totalorder %s17, 1
        %s204 = scalar_select %p203, %s17, 1
        %p205 = scmp.lt.s32.totalorder %s202, 3
        %s206 = scalar_select %p205, %s202, 3
        %s207 = smul.addr %s204, 4
        %s208 = sadd.s32 %s206, %s207
        %s209 = smul.addr %s208, 4
        %s210 = scalar_lea.vmem %s1, %s209
        %s211 = sadd.s32 %s18, 1
        %s212 = smul.u32 %s211, 3
      $region32: #{ic_model_forward.4} parent=23 // pred_fallthru
        _
    $region24: #{ic_model_forward.4} parent=5 // pred_fallthru
      _
    %p213 = scmp.le.s32.totalorder 1, %s10
    %p214 = scmp.lt.s32.totalorder %s10, 3
    %p215 = pnand %p213, %p214
    %p216 = pneg %p215
    // Predicated region
    $region33: #{ic_model_forward.4} parent=5 // pred_check
      _
    $region34: #{ic_model_forward.4} parent=5 // pred_check_branch
      %218 = sbr.rel (%p215) target = $region36
    $region35: #{ic_model_forward.4} parent=5 // pred_region
      %s219 = ssub.s32 %s10, 1
      %s220 = smul.u32 3, %s20
      %s221 = ssub.s32 4, %s220
      %p222 = scmp.lt.s32.totalorder %s221, 3
      %s223 = scalar_select %p222, %s221, 3
      %s224 = smul.u32 64, %s223
      %p225 = scmp.lt.s32.totalorder %s19, 1
      %s226 = scalar_select %p225, %s19, 1
      %p227 = scmp.lt.s32.totalorder %s220, 3
      %s228 = scalar_select %p227, %s220, 3
      %s229 = smul.addr %s226, 4
      %s230 = sadd.s32 %s228, %s229
      %s231 = smul.addr %s230, 4
      %s232 = scalar_lea.vmem %s0, %s231
      %p233 = pneg %p50
      %p234 = pneg %p47
      %s235 = sadd.s32 %s20, 1
      %s236 = smul.u32 %s235, 3
      %p237 = scmp.lt.s32.totalorder %s19, 1
      %s238 = scalar_select %p237, %s19, 1
      %p239 = scmp.lt.s32.totalorder %s236, 3
      %s240 = scalar_select %p239, %s236, 3
      %s241 = smul.addr %s238, 4
      %s242 = sadd.s32 %s240, %s241
      %s243 = smul.addr %s242, 4
      %s244 = scalar_lea.vmem %s1, %s243
      %p245 = pneg %p82
      %p246 = pneg %p79
      %p247 = pneg %p103
      %p248 = pneg %p100
      %p249 = pneg %p124
      %p250 = pneg %p121
      %p251 = pneg %p152
      %p252 = pneg %p149
      %s253 = smul.u32 3, %s20
      %p254 = scmp.lt.s32.totalorder %s19, 1
      %s255 = scalar_select %p254, %s19, 1
      %p256 = scmp.lt.s32.totalorder %s253, 2
      %s257 = scalar_select %p256, %s253, 2
      %s258 = smul.addr %s255, 3
      %s259 = sadd.s32 %s257, %s258
      %s260 = smul.addr %s259, 4
      %s261 = scalar_lea.vmem %s4, %s260
      %s262 = smul.u32 3, %s20
      %s263 = ssub.s32 4, %s262
      %p264 = scmp.lt.s32.totalorder %s263, 3
      %s265 = scalar_select %p264, %s263, 3
      %s266 = smul.u32 64, %s265
      %p267 = scmp.lt.s32.totalorder %s19, 1
      %s268 = scalar_select %p267, %s19, 1
      %p269 = scmp.lt.s32.totalorder %s262, 3
      %s270 = scalar_select %p269, %s262, 3
      %s271 = smul.addr %s268, 4
      %s272 = sadd.s32 %s270, %s271
      %s273 = smul.addr %s272, 4
      %s274 = scalar_lea.vmem %s0, %s273
      %s275 = smul.u32 3, %s20
      %s276 = ssub.s32 4, %s275
      %p277 = scmp.lt.s32.totalorder %s276, 3
      %s278 = scalar_select %p277, %s276, 3
      %s279 = smul.u32 64, %s278
      %s280 = sadd.s32 %s20, 1
      %s281 = smul.u32 %s280, 3
      %p282 = scmp.lt.s32.totalorder %s19, 1
      %s283 = scalar_select %p282, %s19, 1
      %p284 = scmp.lt.s32.totalorder %s281, 3
      %s285 = scalar_select %p284, %s281, 3
      %s286 = smul.addr %s283, 4
      %s287 = sadd.s32 %s285, %s286
      %s288 = smul.addr %s287, 4
      %s289 = scalar_lea.vmem %s1, %s288
      %s290 = sadd.s32 %s20, 1
      %s291 = smul.u32 %s290, 3
      %s292 = smul.u32 3, %s20
      %p293 = scmp.lt.s32.totalorder %s19, 1
      %s294 = scalar_select %p293, %s19, 1
      %p295 = scmp.lt.s32.totalorder %s292, 2
      %s296 = scalar_select %p295, %s292, 2
      %s297 = smul.addr %s294, 3
      %s298 = sadd.s32 %s296, %s297
      %s299 = smul.addr %s298, 4
      %s300 = scalar_lea.vmem %s4, %s299
      %s301 = smul.u32 3, %s20
      %v302 = vld [vmem:[%s2] sm:$0xff]
      %v303 = vld [vmem:[%s2 + $0x8] sm:$0xff]
      %v304 = vld [vmem:[%s2 + $0x10] sm:$0xff]
      %v305 = vld [vmem:[%s2 + $0x18] sm:$0xff]
      %v306 = vld [vmem:[%s2 + $0x20] sm:$0xff]
      %v307 = vld [vmem:[%s2 + $0x28] sm:$0xff]
      %v308 = vld [vmem:[%s2 + $0x30] sm:$0xff]
      %v309 = vld [vmem:[%s2 + $0x38] sm:$0xff]
      %v310 = vld [vmem:[%s2 + $0x40] sm:$0xff]
      %v311 = vld [vmem:[%s2 + $0x48] sm:$0xff]
      %v312 = vld [vmem:[%s2 + $0x50] sm:$0xff]
      %v313 = vld [vmem:[%s2 + $0x58] sm:$0xff]
      %v314 = vld [vmem:[%s2 + $0x60] sm:$0xff]
      %v315 = vld [vmem:[%s2 + $0x68] sm:$0xff]
      %v316 = vld [vmem:[%s2 + $0x70] sm:$0xff]
      %v317 = vld [vmem:[%s2 + $0x78] sm:$0xff]
      %s318 = scalar_lea.vmem %s2, 128
      %v319 = vld [vmem:[%s318] sm:$0xff]
      %v320 = vld [vmem:[%s318 + $0x8] sm:$0xff]
      %v321 = vld [vmem:[%s318 + $0x10] sm:$0xff]
      %v322 = vld [vmem:[%s318 + $0x18] sm:$0xff]
      %v323 = vld [vmem:[%s318 + $0x20] sm:$0xff]
      %v324 = vld [vmem:[%s318 + $0x28] sm:$0xff]
      %v325 = vld [vmem:[%s318 + $0x30] sm:$0xff]
      %v326 = vld [vmem:[%s318 + $0x38] sm:$0xff]
      %v327 = vld [vmem:[%s318 + $0x40] sm:$0xff]
      %v328 = vld [vmem:[%s318 + $0x48] sm:$0xff]
      %v329 = vld [vmem:[%s318 + $0x50] sm:$0xff]
      %v330 = vld [vmem:[%s318 + $0x58] sm:$0xff]
      %v331 = vld [vmem:[%s318 + $0x60] sm:$0xff]
      %v332 = vld [vmem:[%s318 + $0x68] sm:$0xff]
      %v333 = vld [vmem:[%s318 + $0x70] sm:$0xff]
      %v334 = vld [vmem:[%s318 + $0x78] sm:$0xff]
      %s335 = scalar_lea.vmem %s2, 256
      %v336 = vld [vmem:[%s335] sm:$0xff]
      %v337 = vld [vmem:[%s335 + $0x8] sm:$0xff]
      %v338 = vld [vmem:[%s335 + $0x10] sm:$0xff]
      %v339 = vld [vmem:[%s335 + $0x18] sm:$0xff]
      %v340 = vld [vmem:[%s335 + $0x20] sm:$0xff]
      %v341 = vld [vmem:[%s335 + $0x28] sm:$0xff]
      %v342 = vld [vmem:[%s335 + $0x30] sm:$0xff]
      %v343 = vld [vmem:[%s335 + $0x38] sm:$0xff]
      %v344 = vld [vmem:[%s335 + $0x40] sm:$0xff]
      %v345 = vld [vmem:[%s335 + $0x48] sm:$0xff]
      %v346 = vld [vmem:[%s335 + $0x50] sm:$0xff]
      %v347 = vld [vmem:[%s335 + $0x58] sm:$0xff]
      %v348 = vld [vmem:[%s335 + $0x60] sm:$0xff]
      %v349 = vld [vmem:[%s335 + $0x68] sm:$0xff]
      %v350 = vld [vmem:[%s335 + $0x70] sm:$0xff]
      %v351 = vld [vmem:[%s335 + $0x78] sm:$0xff]
      %s352 = scalar_lea.vmem %s2, 384
      %v353 = vld [vmem:[%s352] sm:$0xff]
      %v354 = vld [vmem:[%s352 + $0x8] sm:$0xff]
      %v355 = vld [vmem:[%s352 + $0x10] sm:$0xff]
      %v356 = vld [vmem:[%s352 + $0x18] sm:$0xff]
      %v357 = vld [vmem:[%s352 + $0x20] sm:$0xff]
      %v358 = vld [vmem:[%s352 + $0x28] sm:$0xff]
      %v359 = vld [vmem:[%s352 + $0x30] sm:$0xff]
      %v360 = vld [vmem:[%s352 + $0x38] sm:$0xff]
      %v361 = vld [vmem:[%s352 + $0x40] sm:$0xff]
      %v362 = vld [vmem:[%s352 + $0x48] sm:$0xff]
      %v363 = vld [vmem:[%s352 + $0x50] sm:$0xff]
      %v364 = vld [vmem:[%s352 + $0x58] sm:$0xff]
      %v365 = vld [vmem:[%s352 + $0x60] sm:$0xff]
      %v366 = vld [vmem:[%s352 + $0x68] sm:$0xff]
      %v367 = vld [vmem:[%s352 + $0x70] sm:$0xff]
      %v368 = vld [vmem:[%s352 + $0x78] sm:$0xff]
      %v369 = vld [vmem:[%s3] sm:$0x1]
      %v370 = vld [vmem:[%s274] sm:$0xf]
      %s371 = scalar_lea.vmem %s274, 4
      %v372 = vld [vmem:[%s371] sm:$0xf]
      %v374 = vrot.slane %v370, 1
      %376 = vmatprep.subr.mxu0 0.0
      %377 = vmatpush1.msra.mxu0 %v334
      %378 = vmatprep.subr.mxu0 0.0
      %379 = vmatpush1.msra.mxu0 %v333
      %380 = vmatprep.subr.mxu0 0.0
      %381 = vmatpush1.msra.mxu0 %v332
      %382 = vmatprep.subr.mxu0 0.0
      %383 = vmatpush1.msra.mxu0 %v331
      %384 = vmatprep.subr.mxu0 0.0
      %385 = vmatpush1.msra.mxu0 %v330
      %386 = vmatprep.subr.mxu0 0.0
      %387 = vmatpush1.msra.mxu0 %v329
      %388 = vmatprep.subr.mxu0 0.0
      %389 = vmatpush1.msra.mxu0 %v328
      %390 = vmatprep.subr.mxu0 0.0
      %391 = vmatpush1.msra.mxu0 %v327
      %392 = vmatprep.subr.mxu0 0.0
      %393 = vmatpush1.msra.mxu0 %v326
      %394 = vmatprep.subr.mxu0 0.0
      %395 = vmatpush1.msra.mxu0 %v325
      %396 = vmatprep.subr.mxu0 0.0
      %397 = vmatpush1.msra.mxu0 %v324
      %398 = vmatprep.subr.mxu0 0.0
      %399 = vmatpush1.msra.mxu0 %v323
      %400 = vmatprep.subr.mxu0 0.0
      %401 = vmatpush1.msra.mxu0 %v322
      %402 = vmatprep.subr.mxu0 0.0
      %403 = vmatpush1.msra.mxu0 %v321
      %404 = vmatprep.subr.mxu0 0.0
      %405 = vmatpush1.msra.mxu0 %v320
      %406 = vmatprep.subr.mxu0 0.0
      %407 = vmatpush1.msra.mxu0 %v319
      %408 = vmatprep.subr.mxu0 0.0
      %409 = vmatpush2.msra.mxu0 0.0
      %410 = vmatprep.subr.mxu0 0.0
      %411 = vmatpush2.msra.mxu0 0.0
      %412 = vmatprep.subr.mxu0 0.0
      %413 = vmatpush2.msra.mxu0 0.0
      %414 = vmatprep.subr.mxu0 0.0
      %415 = vmatpush2.msra.mxu0 0.0
      %416 = vmatprep.subr.mxu0 0.0
      %417 = vmatpush2.msra.mxu0 0.0
      %418 = vmatprep.subr.mxu0 0.0
      %419 = vmatpush2.msra.mxu0 0.0
      %420 = vmatprep.subr.mxu0 0.0
      %421 = vmatpush2.msra.mxu0 0.0
      %422 = vmatprep.subr.mxu0 0.0
      %423 = vmatpush2.msra.mxu0 0.0
      %424 = vmatprep.subr.mxu0 0.0
      %425 = vmatpush2.msra.mxu0 0.0
      %426 = vmatprep.subr.mxu0 0.0
      %427 = vmatpush2.msra.mxu0 0.0
      %428 = vmatprep.subr.mxu0 0.0
      %429 = vmatpush2.msra.mxu0 0.0
      %430 = vmatprep.subr.mxu0 0.0
      %431 = vmatpush2.msra.mxu0 0.0
      %432 = vmatprep.subr.mxu0 0.0
      %433 = vmatpush2.msra.mxu0 0.0
      %434 = vmatprep.subr.mxu0 0.0
      %435 = vmatpush2.msra.mxu0 0.0
      %436 = vmatprep.subr.mxu0 0.0
      %437 = vmatpush2.msra.mxu0 0.0
      %438 = vmatprep.subr.mxu0 0.0
      %439 = vmatpush2.msra.mxu0 0.0
      %440 = vmatprep.mubr.f32.mxu0 0.0
      %441 = vmatmul.mubr.f32.gmra.mxu0 %v374
      %v442 = vpop.f32.mrf.mxu0
      %v443 = vadd.f32 0.0, %v442
      %v444 = vpop.f32.mrf.mxu0
      %445 = vdwg.mxu0
      %446 = vmatprep.subr.mxu0 0.0
      %447 = vmatpush1.msra.mxu0 %v317
      %448 = vmatprep.subr.mxu0 0.0
      %449 = vmatpush1.msra.mxu0 %v316
      %450 = vmatprep.subr.mxu0 0.0
      %451 = vmatpush1.msra.mxu0 %v315
      %452 = vmatprep.subr.mxu0 0.0
      %453 = vmatpush1.msra.mxu0 %v314
      %454 = vmatprep.subr.mxu0 0.0
      %455 = vmatpush1.msra.mxu0 %v313
      %456 = vmatprep.subr.mxu0 0.0
      %457 = vmatpush1.msra.mxu0 %v312
      %458 = vmatprep.subr.mxu0 0.0
      %459 = vmatpush1.msra.mxu0 %v311
      %460 = vmatprep.subr.mxu0 0.0
      %461 = vmatpush1.msra.mxu0 %v310
      %462 = vmatprep.subr.mxu0 0.0
      %463 = vmatpush1.msra.mxu0 %v309
      %464 = vmatprep.subr.mxu0 0.0
      %465 = vmatpush1.msra.mxu0 %v308
      %466 = vmatprep.subr.mxu0 0.0
      %467 = vmatpush1.msra.mxu0 %v307
      %468 = vmatprep.subr.mxu0 0.0
      %469 = vmatpush1.msra.mxu0 %v306
      %470 = vmatprep.subr.mxu0 0.0
      %471 = vmatpush1.msra.mxu0 %v305
      %472 = vmatprep.subr.mxu0 0.0
      %473 = vmatpush1.msra.mxu0 %v304
      %474 = vmatprep.subr.mxu0 0.0
      %475 = vmatpush1.msra.mxu0 %v303
      %476 = vmatprep.subr.mxu0 0.0
      %477 = vmatpush1.msra.mxu0 %v302
      %478 = vmatprep.subr.mxu0 0.0
      %479 = vmatpush2.msra.mxu0 0.0
      %480 = vmatprep.subr.mxu0 0.0
      %481 = vmatpush2.msra.mxu0 0.0
      %482 = vmatprep.subr.mxu0 0.0
      %483 = vmatpush2.msra.mxu0 0.0
      %484 = vmatprep.subr.mxu0 0.0
      %485 = vmatpush2.msra.mxu0 0.0
      %486 = vmatprep.subr.mxu0 0.0
      %487 = vmatpush2.msra.mxu0 0.0
      %488 = vmatprep.subr.mxu0 0.0
      %489 = vmatpush2.msra.mxu0 0.0
      %490 = vmatprep.subr.mxu0 0.0
      %491 = vmatpush2.msra.mxu0 0.0
      %492 = vmatprep.subr.mxu0 0.0
      %493 = vmatpush2.msra.mxu0 0.0
      %494 = vmatprep.subr.mxu0 0.0
      %495 = vmatpush2.msra.mxu0 0.0
      %496 = vmatprep.subr.mxu0 0.0
      %497 = vmatpush2.msra.mxu0 0.0
      %498 = vmatprep.subr.mxu0 0.0
      %499 = vmatpush2.msra.mxu0 0.0
      %500 = vmatprep.subr.mxu0 0.0
      %501 = vmatpush2.msra.mxu0 0.0
      %502 = vmatprep.subr.mxu0 0.0
      %503 = vmatpush2.msra.mxu0 0.0
      %504 = vmatprep.subr.mxu0 0.0
      %505 = vmatpush2.msra.mxu0 0.0
      %506 = vmatprep.subr.mxu0 0.0
      %507 = vmatpush2.msra.mxu0 0.0
      %508 = vmatprep.subr.mxu0 0.0
      %509 = vmatpush2.msra.mxu0 0.0
      %510 = vmatprep.mubr.f32.mxu0 0.0
      %511 = vmatmul.mubr.f32.gmra.mxu0 %v370
      %v512 = vpop.f32.mrf.mxu0
      %v513 = vadd.f32 %v443, %v512
      %v514 = vpop.f32.mrf.mxu0
      %515 = vdwg.mxu0
      %516 = vmatprep.subr.mxu0 0.0
      %517 = vmatpush1.msra.mxu0 %v351
      %518 = vmatprep.subr.mxu0 0.0
      %519 = vmatpush1.msra.mxu0 %v350
      %520 = vmatprep.subr.mxu0 0.0
      %521 = vmatpush1.msra.mxu0 %v349
      %522 = vmatprep.subr.mxu0 0.0
      %523 = vmatpush1.msra.mxu0 %v348
      %524 = vmatprep.subr.mxu0 0.0
      %525 = vmatpush1.msra.mxu0 %v347
      %526 = vmatprep.subr.mxu0 0.0
      %527 = vmatpush1.msra.mxu0 %v346
      %528 = vmatprep.subr.mxu0 0.0
      %529 = vmatpush1.msra.mxu0 %v345
      %530 = vmatprep.subr.mxu0 0.0
      %531 = vmatpush1.msra.mxu0 %v344
      %532 = vmatprep.subr.mxu0 0.0
      %533 = vmatpush1.msra.mxu0 %v343
      %534 = vmatprep.subr.mxu0 0.0
      %535 = vmatpush1.msra.mxu0 %v342
      %536 = vmatprep.subr.mxu0 0.0
      %537 = vmatpush1.msra.mxu0 %v341
      %538 = vmatprep.subr.mxu0 0.0
      %539 = vmatpush1.msra.mxu0 %v340
      %540 = vmatprep.subr.mxu0 0.0
      %541 = vmatpush1.msra.mxu0 %v339
      %542 = vmatprep.subr.mxu0 0.0
      %543 = vmatpush1.msra.mxu0 %v338
      %544 = vmatprep.subr.mxu0 0.0
      %545 = vmatpush1.msra.mxu0 %v337
      %546 = vmatprep.subr.mxu0 0.0
      %547 = vmatpush1.msra.mxu0 %v336
      %548 = vmatprep.subr.mxu0 0.0
      %549 = vmatpush2.msra.mxu0 0.0
      %550 = vmatprep.subr.mxu0 0.0
      %551 = vmatpush2.msra.mxu0 0.0
      %552 = vmatprep.subr.mxu0 0.0
      %553 = vmatpush2.msra.mxu0 0.0
      %554 = vmatprep.subr.mxu0 0.0
      %555 = vmatpush2.msra.mxu0 0.0
      %556 = vmatprep.subr.mxu0 0.0
      %557 = vmatpush2.msra.mxu0 0.0
      %558 = vmatprep.subr.mxu0 0.0
      %559 = vmatpush2.msra.mxu0 0.0
      %560 = vmatprep.subr.mxu0 0.0
      %561 = vmatpush2.msra.mxu0 0.0
      %562 = vmatprep.subr.mxu0 0.0
      %563 = vmatpush2.msra.mxu0 0.0
      %564 = vmatprep.subr.mxu0 0.0
      %565 = vmatpush2.msra.mxu0 0.0
      %566 = vmatprep.subr.mxu0 0.0
      %567 = vmatpush2.msra.mxu0 0.0
      %568 = vmatprep.subr.mxu0 0.0
      %569 = vmatpush2.msra.mxu0 0.0
      %570 = vmatprep.subr.mxu0 0.0
      %571 = vmatpush2.msra.mxu0 0.0
      %572 = vmatprep.subr.mxu0 0.0
      %573 = vmatpush2.msra.mxu0 0.0
      %574 = vmatprep.subr.mxu0 0.0
      %575 = vmatpush2.msra.mxu0 0.0
      %576 = vmatprep.subr.mxu0 0.0
      %577 = vmatpush2.msra.mxu0 0.0
      %578 = vmatprep.subr.mxu0 0.0
      %579 = vmatpush2.msra.mxu0 0.0
      %580 = vmatprep.mubr.f32.mxu0 0.0
      %581 = vmatmul.mubr.f32.gmra.mxu0 %v372
      %v582 = vpop.f32.mrf.mxu0
      %v583 = vadd.f32 0.0, %v582
      %v584 = vpop.f32.mrf.mxu0
      %585 = vdwg.mxu0
      %v586 = vadd.f32 %v513, %v583
      %v588 = vrot.slane %v372, 1
      %590 = vmatprep.subr.mxu0 0.0
      %591 = vmatpush1.msra.mxu0 %v368
      %592 = vmatprep.subr.mxu0 0.0
      %593 = vmatpush1.msra.mxu0 %v367
      %594 = vmatprep.subr.mxu0 0.0
      %595 = vmatpush1.msra.mxu0 %v366
      %596 = vmatprep.subr.mxu0 0.0
      %597 = vmatpush1.msra.mxu0 %v365
      %598 = vmatprep.subr.mxu0 0.0
      %599 = vmatpush1.msra.mxu0 %v364
      %600 = vmatprep.subr.mxu0 0.0
      %601 = vmatpush1.msra.mxu0 %v363
      %602 = vmatprep.subr.mxu0 0.0
      %603 = vmatpush1.msra.mxu0 %v362
      %604 = vmatprep.subr.mxu0 0.0
      %605 = vmatpush1.msra.mxu0 %v361
      %606 = vmatprep.subr.mxu0 0.0
      %607 = vmatpush1.msra.mxu0 %v360
      %608 = vmatprep.subr.mxu0 0.0
      %609 = vmatpush1.msra.mxu0 %v359
      %610 = vmatprep.subr.mxu0 0.0
      %611 = vmatpush1.msra.mxu0 %v358
      %612 = vmatprep.subr.mxu0 0.0
      %613 = vmatpush1.msra.mxu0 %v357
      %614 = vmatprep.subr.mxu0 0.0
      %615 = vmatpush1.msra.mxu0 %v356
      %616 = vmatprep.subr.mxu0 0.0
      %617 = vmatpush1.msra.mxu0 %v355
      %618 = vmatprep.subr.mxu0 0.0
      %619 = vmatpush1.msra.mxu0 %v354
      %620 = vmatprep.subr.mxu0 0.0
      %621 = vmatpush1.msra.mxu0 %v353
      %622 = vmatprep.subr.mxu0 0.0
      %623 = vmatpush2.msra.mxu0 0.0
      %624 = vmatprep.subr.mxu0 0.0
      %625 = vmatpush2.msra.mxu0 0.0
      %626 = vmatprep.subr.mxu0 0.0
      %627 = vmatpush2.msra.mxu0 0.0
      %628 = vmatprep.subr.mxu0 0.0
      %629 = vmatpush2.msra.mxu0 0.0
      %630 = vmatprep.subr.mxu0 0.0
      %631 = vmatpush2.msra.mxu0 0.0
      %632 = vmatprep.subr.mxu0 0.0
      %633 = vmatpush2.msra.mxu0 0.0
      %634 = vmatprep.subr.mxu0 0.0
      %635 = vmatpush2.msra.mxu0 0.0
      %636 = vmatprep.subr.mxu0 0.0
      %637 = vmatpush2.msra.mxu0 0.0
      %638 = vmatprep.subr.mxu0 0.0
      %639 = vmatpush2.msra.mxu0 0.0
      %640 = vmatprep.subr.mxu0 0.0
      %641 = vmatpush2.msra.mxu0 0.0
      %642 = vmatprep.subr.mxu0 0.0
      %643 = vmatpush2.msra.mxu0 0.0
      %644 = vmatprep.subr.mxu0 0.0
      %645 = vmatpush2.msra.mxu0 0.0
      %646 = vmatprep.subr.mxu0 0.0
      %647 = vmatpush2.msra.mxu0 0.0
      %648 = vmatprep.subr.mxu0 0.0
      %649 = vmatpush2.msra.mxu0 0.0
      %650 = vmatprep.subr.mxu0 0.0
      %651 = vmatpush2.msra.mxu0 0.0
      %652 = vmatprep.subr.mxu0 0.0
      %653 = vmatpush2.msra.mxu0 0.0
      %654 = vmatprep.mubr.f32.mxu0 0.0
      %655 = vmatmul.mubr.f32.gmra.mxu0 %v588
      %v656 = vpop.f32.mrf.mxu0
      %v657 = vadd.f32 0.0, %v656
      %v658 = vpop.f32.mrf.mxu0
      %659 = vdwg.mxu0
      %v660 = vadd.f32 %v586, %v657
      %v662 = vlaneseq
      %v663 = vshrl.u32 %v662, 7
      %v664 = vsub.s32 0, %v663
      %v665 = vrot.slane %v369, %v664
      %v667 = vadd.f32 %v660, %v665
      %v668 = vmax.f32 %v667, 0.0
      %670 = vrot.lane.b32.xlu0 %v668, 104
      %v671 = vpop.permute.xlu0 %670
      %v673 = vmax.f32 %v668, %v671
      %675 = vrot.lane.b32.xlu0 %v673, 80
      %v676 = vpop.permute.xlu0 %675
      %v678 = vmax.f32 %v673, %v676
      %vm679 = vcmask 190464
      %680 = vst.msk [vmem:[%s300] sm:$0x7] %vm679, %v678
      %v681 = vld [vmem:[%s371] sm:$0xf]
      %s682 = scalar_lea.vmem %s274, 8
      %v683 = vld [vmem:[%s682] sm:$0xf]
      %v685 = vrot.slane %v681, 1
      %687 = vmatprep.subr.mxu0 0.0
      %688 = vmatpush1.msra.mxu0 %v334
      %689 = vmatprep.subr.mxu0 0.0
      %690 = vmatpush1.msra.mxu0 %v333
      %691 = vmatprep.subr.mxu0 0.0
      %692 = vmatpush1.msra.mxu0 %v332
      %693 = vmatprep.subr.mxu0 0.0
      %694 = vmatpush1.msra.mxu0 %v331
      %695 = vmatprep.subr.mxu0 0.0
      %696 = vmatpush1.msra.mxu0 %v330
      %697 = vmatprep.subr.mxu0 0.0
      %698 = vmatpush1.msra.mxu0 %v329
      %699 = vmatprep.subr.mxu0 0.0
      %700 = vmatpush1.msra.mxu0 %v328
      %701 = vmatprep.subr.mxu0 0.0
      %702 = vmatpush1.msra.mxu0 %v327
      %703 = vmatprep.subr.mxu0 0.0
      %704 = vmatpush1.msra.mxu0 %v326
      %705 = vmatprep.subr.mxu0 0.0
      %706 = vmatpush1.msra.mxu0 %v325
      %707 = vmatprep.subr.mxu0 0.0
      %708 = vmatpush1.msra.mxu0 %v324
      %709 = vmatprep.subr.mxu0 0.0
      %710 = vmatpush1.msra.mxu0 %v323
      %711 = vmatprep.subr.mxu0 0.0
      %712 = vmatpush1.msra.mxu0 %v322
      %713 = vmatprep.subr.mxu0 0.0
      %714 = vmatpush1.msra.mxu0 %v321
      %715 = vmatprep.subr.mxu0 0.0
      %716 = vmatpush1.msra.mxu0 %v320
      %717 = vmatprep.subr.mxu0 0.0
      %718 = vmatpush1.msra.mxu0 %v319
      %719 = vmatprep.subr.mxu0 0.0
      %720 = vmatpush2.msra.mxu0 0.0
      %721 = vmatprep.subr.mxu0 0.0
      %722 = vmatpush2.msra.mxu0 0.0
      %723 = vmatprep.subr.mxu0 0.0
      %724 = vmatpush2.msra.mxu0 0.0
      %725 = vmatprep.subr.mxu0 0.0
      %726 = vmatpush2.msra.mxu0 0.0
      %727 = vmatprep.subr.mxu0 0.0
      %728 = vmatpush2.msra.mxu0 0.0
      %729 = vmatprep.subr.mxu0 0.0
      %730 = vmatpush2.msra.mxu0 0.0
      %731 = vmatprep.subr.mxu0 0.0
      %732 = vmatpush2.msra.mxu0 0.0
      %733 = vmatprep.subr.mxu0 0.0
      %734 = vmatpush2.msra.mxu0 0.0
      %735 = vmatprep.subr.mxu0 0.0
      %736 = vmatpush2.msra.mxu0 0.0
      %737 = vmatprep.subr.mxu0 0.0
      %738 = vmatpush2.msra.mxu0 0.0
      %739 = vmatprep.subr.mxu0 0.0
      %740 = vmatpush2.msra.mxu0 0.0
      %741 = vmatprep.subr.mxu0 0.0
      %742 = vmatpush2.msra.mxu0 0.0
      %743 = vmatprep.subr.mxu0 0.0
      %744 = vmatpush2.msra.mxu0 0.0
      %745 = vmatprep.subr.mxu0 0.0
      %746 = vmatpush2.msra.mxu0 0.0
      %747 = vmatprep.subr.mxu0 0.0
      %748 = vmatpush2.msra.mxu0 0.0
      %749 = vmatprep.subr.mxu0 0.0
      %750 = vmatpush2.msra.mxu0 0.0
      %751 = vmatprep.mubr.f32.mxu0 0.0
      %752 = vmatmul.mubr.f32.gmra.mxu0 %v685
      %v753 = vpop.f32.mrf.mxu0
      %v754 = vadd.f32 0.0, %v753
      %v755 = vpop.f32.mrf.mxu0
      %756 = vdwg.mxu0
      %757 = vmatprep.subr.mxu0 0.0
      %758 = vmatpush1.msra.mxu0 %v317
      %759 = vmatprep.subr.mxu0 0.0
      %760 = vmatpush1.msra.mxu0 %v316
      %761 = vmatprep.subr.mxu0 0.0
      %762 = vmatpush1.msra.mxu0 %v315
      %763 = vmatprep.subr.mxu0 0.0
      %764 = vmatpush1.msra.mxu0 %v314
      %765 = vmatprep.subr.mxu0 0.0
      %766 = vmatpush1.msra.mxu0 %v313
      %767 = vmatprep.subr.mxu0 0.0
      %768 = vmatpush1.msra.mxu0 %v312
      %769 = vmatprep.subr.mxu0 0.0
      %770 = vmatpush1.msra.mxu0 %v311
      %771 = vmatprep.subr.mxu0 0.0
      %772 = vmatpush1.msra.mxu0 %v310
      %773 = vmatprep.subr.mxu0 0.0
      %774 = vmatpush1.msra.mxu0 %v309
      %775 = vmatprep.subr.mxu0 0.0
      %776 = vmatpush1.msra.mxu0 %v308
      %777 = vmatprep.subr.mxu0 0.0
      %778 = vmatpush1.msra.mxu0 %v307
      %779 = vmatprep.subr.mxu0 0.0
      %780 = vmatpush1.msra.mxu0 %v306
      %781 = vmatprep.subr.mxu0 0.0
      %782 = vmatpush1.msra.mxu0 %v305
      %783 = vmatprep.subr.mxu0 0.0
      %784 = vmatpush1.msra.mxu0 %v304
      %785 = vmatprep.subr.mxu0 0.0
      %786 = vmatpush1.msra.mxu0 %v303
      %787 = vmatprep.subr.mxu0 0.0
      %788 = vmatpush1.msra.mxu0 %v302
      %789 = vmatprep.subr.mxu0 0.0
      %790 = vmatpush2.msra.mxu0 0.0
      %791 = vmatprep.subr.mxu0 0.0
      %792 = vmatpush2.msra.mxu0 0.0
      %793 = vmatprep.subr.mxu0 0.0
      %794 = vmatpush2.msra.mxu0 0.0
      %795 = vmatprep.subr.mxu0 0.0
      %796 = vmatpush2.msra.mxu0 0.0
      %797 = vmatprep.subr.mxu0 0.0
      %798 = vmatpush2.msra.mxu0 0.0
      %799 = vmatprep.subr.mxu0 0.0
      %800 = vmatpush2.msra.mxu0 0.0
      %801 = vmatprep.subr.mxu0 0.0
      %802 = vmatpush2.msra.mxu0 0.0
      %803 = vmatprep.subr.mxu0 0.0
      %804 = vmatpush2.msra.mxu0 0.0
      %805 = vmatprep.subr.mxu0 0.0
      %806 = vmatpush2.msra.mxu0 0.0
      %807 = vmatprep.subr.mxu0 0.0
      %808 = vmatpush2.msra.mxu0 0.0
      %809 = vmatprep.subr.mxu0 0.0
      %810 = vmatpush2.msra.mxu0 0.0
      %811 = vmatprep.subr.mxu0 0.0
      %812 = vmatpush2.msra.mxu0 0.0
      %813 = vmatprep.subr.mxu0 0.0
      %814 = vmatpush2.msra.mxu0 0.0
      %815 = vmatprep.subr.mxu0 0.0
      %816 = vmatpush2.msra.mxu0 0.0
      %817 = vmatprep.subr.mxu0 0.0
      %818 = vmatpush2.msra.mxu0 0.0
      %819 = vmatprep.subr.mxu0 0.0
      %820 = vmatpush2.msra.mxu0 0.0
      %821 = vmatprep.mubr.f32.mxu0 0.0
      %822 = vmatmul.mubr.f32.gmra.mxu0 %v681
      %v823 = vpop.f32.mrf.mxu0
      %v824 = vadd.f32 %v754, %v823
      %v825 = vpop.f32.mrf.mxu0
      %826 = vdwg.mxu0
      %827 = vmatprep.subr.mxu0 0.0
      %828 = vmatpush1.msra.mxu0 %v351
      %829 = vmatprep.subr.mxu0 0.0
      %830 = vmatpush1.msra.mxu0 %v350
      %831 = vmatprep.subr.mxu0 0.0
      %832 = vmatpush1.msra.mxu0 %v349
      %833 = vmatprep.subr.mxu0 0.0
      %834 = vmatpush1.msra.mxu0 %v348
      %835 = vmatprep.subr.mxu0 0.0
      %836 = vmatpush1.msra.mxu0 %v347
      %837 = vmatprep.subr.mxu0 0.0
      %838 = vmatpush1.msra.mxu0 %v346
      %839 = vmatprep.subr.mxu0 0.0
      %840 = vmatpush1.msra.mxu0 %v345
      %841 = vmatprep.subr.mxu0 0.0
      %842 = vmatpush1.msra.mxu0 %v344
      %843 = vmatprep.subr.mxu0 0.0
      %844 = vmatpush1.msra.mxu0 %v343
      %845 = vmatprep.subr.mxu0 0.0
      %846 = vmatpush1.msra.mxu0 %v342
      %847 = vmatprep.subr.mxu0 0.0
      %848 = vmatpush1.msra.mxu0 %v341
      %849 = vmatprep.subr.mxu0 0.0
      %850 = vmatpush1.msra.mxu0 %v340
      %851 = vmatprep.subr.mxu0 0.0
      %852 = vmatpush1.msra.mxu0 %v339
      %853 = vmatprep.subr.mxu0 0.0
      %854 = vmatpush1.msra.mxu0 %v338
      %855 = vmatprep.subr.mxu0 0.0
      %856 = vmatpush1.msra.mxu0 %v337
      %857 = vmatprep.subr.mxu0 0.0
      %858 = vmatpush1.msra.mxu0 %v336
      %859 = vmatprep.subr.mxu0 0.0
      %860 = vmatpush2.msra.mxu0 0.0
      %861 = vmatprep.subr.mxu0 0.0
      %862 = vmatpush2.msra.mxu0 0.0
      %863 = vmatprep.subr.mxu0 0.0
      %864 = vmatpush2.msra.mxu0 0.0
      %865 = vmatprep.subr.mxu0 0.0
      %866 = vmatpush2.msra.mxu0 0.0
      %867 = vmatprep.subr.mxu0 0.0
      %868 = vmatpush2.msra.mxu0 0.0
      %869 = vmatprep.subr.mxu0 0.0
      %870 = vmatpush2.msra.mxu0 0.0
      %871 = vmatprep.subr.mxu0 0.0
      %872 = vmatpush2.msra.mxu0 0.0
      %873 = vmatprep.subr.mxu0 0.0
      %874 = vmatpush2.msra.mxu0 0.0
      %875 = vmatprep.subr.mxu0 0.0
      %876 = vmatpush2.msra.mxu0 0.0
      %877 = vmatprep.subr.mxu0 0.0
      %878 = vmatpush2.msra.mxu0 0.0
      %879 = vmatprep.subr.mxu0 0.0
      %880 = vmatpush2.msra.mxu0 0.0
      %881 = vmatprep.subr.mxu0 0.0
      %882 = vmatpush2.msra.mxu0 0.0
      %883 = vmatprep.subr.mxu0 0.0
      %884 = vmatpush2.msra.mxu0 0.0
      %885 = vmatprep.subr.mxu0 0.0
      %886 = vmatpush2.msra.mxu0 0.0
      %887 = vmatprep.subr.mxu0 0.0
      %888 = vmatpush2.msra.mxu0 0.0
      %889 = vmatprep.subr.mxu0 0.0
      %890 = vmatpush2.msra.mxu0 0.0
      %891 = vmatprep.mubr.f32.mxu0 0.0
      %892 = vmatmul.mubr.f32.gmra.mxu0 %v683
      %v893 = vpop.f32.mrf.mxu0
      %v894 = vadd.f32 0.0, %v893
      %v895 = vpop.f32.mrf.mxu0
      %896 = vdwg.mxu0
      %v897 = vadd.f32 %v824, %v894
      %v899 = vrot.slane %v683, 1
      %901 = vmatprep.subr.mxu0 0.0
      %902 = vmatpush1.msra.mxu0 %v368
      %903 = vmatprep.subr.mxu0 0.0
      %904 = vmatpush1.msra.mxu0 %v367
      %905 = vmatprep.subr.mxu0 0.0
      %906 = vmatpush1.msra.mxu0 %v366
      %907 = vmatprep.subr.mxu0 0.0
      %908 = vmatpush1.msra.mxu0 %v365
      %909 = vmatprep.subr.mxu0 0.0
      %910 = vmatpush1.msra.mxu0 %v364
      %911 = vmatprep.subr.mxu0 0.0
      %912 = vmatpush1.msra.mxu0 %v363
      %913 = vmatprep.subr.mxu0 0.0
      %914 = vmatpush1.msra.mxu0 %v362
      %915 = vmatprep.subr.mxu0 0.0
      %916 = vmatpush1.msra.mxu0 %v361
      %917 = vmatprep.subr.mxu0 0.0
      %918 = vmatpush1.msra.mxu0 %v360
      %919 = vmatprep.subr.mxu0 0.0
      %920 = vmatpush1.msra.mxu0 %v359
      %921 = vmatprep.subr.mxu0 0.0
      %922 = vmatpush1.msra.mxu0 %v358
      %923 = vmatprep.subr.mxu0 0.0
      %924 = vmatpush1.msra.mxu0 %v357
      %925 = vmatprep.subr.mxu0 0.0
      %926 = vmatpush1.msra.mxu0 %v356
      %927 = vmatprep.subr.mxu0 0.0
      %928 = vmatpush1.msra.mxu0 %v355
      %929 = vmatprep.subr.mxu0 0.0
      %930 = vmatpush1.msra.mxu0 %v354
      %931 = vmatprep.subr.mxu0 0.0
      %932 = vmatpush1.msra.mxu0 %v353
      %933 = vmatprep.subr.mxu0 0.0
      %934 = vmatpush2.msra.mxu0 0.0
      %935 = vmatprep.subr.mxu0 0.0
      %936 = vmatpush2.msra.mxu0 0.0
      %937 = vmatprep.subr.mxu0 0.0
      %938 = vmatpush2.msra.mxu0 0.0
      %939 = vmatprep.subr.mxu0 0.0
      %940 = vmatpush2.msra.mxu0 0.0
      %941 = vmatprep.subr.mxu0 0.0
      %942 = vmatpush2.msra.mxu0 0.0
      %943 = vmatprep.subr.mxu0 0.0
      %944 = vmatpush2.msra.mxu0 0.0
      %945 = vmatprep.subr.mxu0 0.0
      %946 = vmatpush2.msra.mxu0 0.0
      %947 = vmatprep.subr.mxu0 0.0
      %948 = vmatpush2.msra.mxu0 0.0
      %949 = vmatprep.subr.mxu0 0.0
      %950 = vmatpush2.msra.mxu0 0.0
      %951 = vmatprep.subr.mxu0 0.0
      %952 = vmatpush2.msra.mxu0 0.0
      %953 = vmatprep.subr.mxu0 0.0
      %954 = vmatpush2.msra.mxu0 0.0
      %955 = vmatprep.subr.mxu0 0.0
      %956 = vmatpush2.msra.mxu0 0.0
      %957 = vmatprep.subr.mxu0 0.0
      %958 = vmatpush2.msra.mxu0 0.0
      %959 = vmatprep.subr.mxu0 0.0
      %960 = vmatpush2.msra.mxu0 0.0
      %961 = vmatprep.subr.mxu0 0.0
      %962 = vmatpush2.msra.mxu0 0.0
      %963 = vmatprep.subr.mxu0 0.0
      %964 = vmatpush2.msra.mxu0 0.0
      %965 = vmatprep.mubr.f32.mxu0 0.0
      %966 = vmatmul.mubr.f32.gmra.mxu0 %v899
      %v967 = vpop.f32.mrf.mxu0
      %v968 = vadd.f32 0.0, %v967
      %v969 = vpop.f32.mrf.mxu0
      %970 = vdwg.mxu0
      %v971 = vadd.f32 %v897, %v968
      %v972 = vadd.f32 %v971, %v665
      %v973 = vmax.f32 %v972, 0.0
      %975 = vrot.lane.b32.xlu0 %v973, 104
      %v976 = vpop.permute.xlu0 %975
      %v978 = vmax.f32 %v973, %v976
      %980 = vrot.lane.b32.xlu0 %v978, 80
      %v981 = vpop.permute.xlu0 %980
      %v983 = vmax.f32 %v978, %v981
      %s984 = scalar_lea.vmem %s300, 4
      %985 = vst.msk [vmem:[%s984] sm:$0x7] %vm679, %v983
      %v986 = vld [vmem:[%s682] sm:$0xf]
      %v987 = vld [vmem:[%s289] sm:$0xf]
      %v989 = vrot.slane %v986, 1
      %991 = vmatprep.subr.mxu0 0.0
      %992 = vmatpush1.msra.mxu0 %v334
      %993 = vmatprep.subr.mxu0 0.0
      %994 = vmatpush1.msra.mxu0 %v333
      %995 = vmatprep.subr.mxu0 0.0
      %996 = vmatpush1.msra.mxu0 %v332
      %997 = vmatprep.subr.mxu0 0.0
      %998 = vmatpush1.msra.mxu0 %v331
      %999 = vmatprep.subr.mxu0 0.0
      %1000 = vmatpush1.msra.mxu0 %v330
      %1001 = vmatprep.subr.mxu0 0.0
      %1002 = vmatpush1.msra.mxu0 %v329
      %1003 = vmatprep.subr.mxu0 0.0
      %1004 = vmatpush1.msra.mxu0 %v328
      %1005 = vmatprep.subr.mxu0 0.0
      %1006 = vmatpush1.msra.mxu0 %v327
      %1007 = vmatprep.subr.mxu0 0.0
      %1008 = vmatpush1.msra.mxu0 %v326
      %1009 = vmatprep.subr.mxu0 0.0
      %1010 = vmatpush1.msra.mxu0 %v325
      %1011 = vmatprep.subr.mxu0 0.0
      %1012 = vmatpush1.msra.mxu0 %v324
      %1013 = vmatprep.subr.mxu0 0.0
      %1014 = vmatpush1.msra.mxu0 %v323
      %1015 = vmatprep.subr.mxu0 0.0
      %1016 = vmatpush1.msra.mxu0 %v322
      %1017 = vmatprep.subr.mxu0 0.0
      %1018 = vmatpush1.msra.mxu0 %v321
      %1019 = vmatprep.subr.mxu0 0.0
      %1020 = vmatpush1.msra.mxu0 %v320
      %1021 = vmatprep.subr.mxu0 0.0
      %1022 = vmatpush1.msra.mxu0 %v319
      %1023 = vmatprep.subr.mxu0 0.0
      %1024 = vmatpush2.msra.mxu0 0.0
      %1025 = vmatprep.subr.mxu0 0.0
      %1026 = vmatpush2.msra.mxu0 0.0
      %1027 = vmatprep.subr.mxu0 0.0
      %1028 = vmatpush2.msra.mxu0 0.0
      %1029 = vmatprep.subr.mxu0 0.0
      %1030 = vmatpush2.msra.mxu0 0.0
      %1031 = vmatprep.subr.mxu0 0.0
      %1032 = vmatpush2.msra.mxu0 0.0
      %1033 = vmatprep.subr.mxu0 0.0
      %1034 = vmatpush2.msra.mxu0 0.0
      %1035 = vmatprep.subr.mxu0 0.0
      %1036 = vmatpush2.msra.mxu0 0.0
      %1037 = vmatprep.subr.mxu0 0.0
      %1038 = vmatpush2.msra.mxu0 0.0
      %1039 = vmatprep.subr.mxu0 0.0
      %1040 = vmatpush2.msra.mxu0 0.0
      %1041 = vmatprep.subr.mxu0 0.0
      %1042 = vmatpush2.msra.mxu0 0.0
      %1043 = vmatprep.subr.mxu0 0.0
      %1044 = vmatpush2.msra.mxu0 0.0
      %1045 = vmatprep.subr.mxu0 0.0
      %1046 = vmatpush2.msra.mxu0 0.0
      %1047 = vmatprep.subr.mxu0 0.0
      %1048 = vmatpush2.msra.mxu0 0.0
      %1049 = vmatprep.subr.mxu0 0.0
      %1050 = vmatpush2.msra.mxu0 0.0
      %1051 = vmatprep.subr.mxu0 0.0
      %1052 = vmatpush2.msra.mxu0 0.0
      %1053 = vmatprep.subr.mxu0 0.0
      %1054 = vmatpush2.msra.mxu0 0.0
      %1055 = vmatprep.mubr.f32.mxu0 0.0
      %1056 = vmatmul.mubr.f32.gmra.mxu0 %v989
      %v1057 = vpop.f32.mrf.mxu0
      %v1058 = vadd.f32 0.0, %v1057
      %v1059 = vpop.f32.mrf.mxu0
      %1060 = vdwg.mxu0
      %1061 = vmatprep.subr.mxu0 0.0
      %1062 = vmatpush1.msra.mxu0 %v317
      %1063 = vmatprep.subr.mxu0 0.0
      %1064 = vmatpush1.msra.mxu0 %v316
      %1065 = vmatprep.subr.mxu0 0.0
      %1066 = vmatpush1.msra.mxu0 %v315
      %1067 = vmatprep.subr.mxu0 0.0
      %1068 = vmatpush1.msra.mxu0 %v314
      %1069 = vmatprep.subr.mxu0 0.0
      %1070 = vmatpush1.msra.mxu0 %v313
      %1071 = vmatprep.subr.mxu0 0.0
      %1072 = vmatpush1.msra.mxu0 %v312
      %1073 = vmatprep.subr.mxu0 0.0
      %1074 = vmatpush1.msra.mxu0 %v311
      %1075 = vmatprep.subr.mxu0 0.0
      %1076 = vmatpush1.msra.mxu0 %v310
      %1077 = vmatprep.subr.mxu0 0.0
      %1078 = vmatpush1.msra.mxu0 %v309
      %1079 = vmatprep.subr.mxu0 0.0
      %1080 = vmatpush1.msra.mxu0 %v308
      %1081 = vmatprep.subr.mxu0 0.0
      %1082 = vmatpush1.msra.mxu0 %v307
      %1083 = vmatprep.subr.mxu0 0.0
      %1084 = vmatpush1.msra.mxu0 %v306
      %1085 = vmatprep.subr.mxu0 0.0
      %1086 = vmatpush1.msra.mxu0 %v305
      %1087 = vmatprep.subr.mxu0 0.0
      %1088 = vmatpush1.msra.mxu0 %v304
      %1089 = vmatprep.subr.mxu0 0.0
      %1090 = vmatpush1.msra.mxu0 %v303
      %1091 = vmatprep.subr.mxu0 0.0
      %1092 = vmatpush1.msra.mxu0 %v302
      %1093 = vmatprep.subr.mxu0 0.0
      %1094 = vmatpush2.msra.mxu0 0.0
      %1095 = vmatprep.subr.mxu0 0.0
      %1096 = vmatpush2.msra.mxu0 0.0
      %1097 = vmatprep.subr.mxu0 0.0
      %1098 = vmatpush2.msra.mxu0 0.0
      %1099 = vmatprep.subr.mxu0 0.0
      %1100 = vmatpush2.msra.mxu0 0.0
      %1101 = vmatprep.subr.mxu0 0.0
      %1102 = vmatpush2.msra.mxu0 0.0
      %1103 = vmatprep.subr.mxu0 0.0
      %1104 = vmatpush2.msra.mxu0 0.0
      %1105 = vmatprep.subr.mxu0 0.0
      %1106 = vmatpush2.msra.mxu0 0.0
      %1107 = vmatprep.subr.mxu0 0.0
      %1108 = vmatpush2.msra.mxu0 0.0
      %1109 = vmatprep.subr.mxu0 0.0
      %1110 = vmatpush2.msra.mxu0 0.0
      %1111 = vmatprep.subr.mxu0 0.0
      %1112 = vmatpush2.msra.mxu0 0.0
      %1113 = vmatprep.subr.mxu0 0.0
      %1114 = vmatpush2.msra.mxu0 0.0
      %1115 = vmatprep.subr.mxu0 0.0
      %1116 = vmatpush2.msra.mxu0 0.0
      %1117 = vmatprep.subr.mxu0 0.0
      %1118 = vmatpush2.msra.mxu0 0.0
      %1119 = vmatprep.subr.mxu0 0.0
      %1120 = vmatpush2.msra.mxu0 0.0
      %1121 = vmatprep.subr.mxu0 0.0
      %1122 = vmatpush2.msra.mxu0 0.0
      %1123 = vmatprep.subr.mxu0 0.0
      %1124 = vmatpush2.msra.mxu0 0.0
      %1125 = vmatprep.mubr.f32.mxu0 0.0
      %1126 = vmatmul.mubr.f32.gmra.mxu0 %v986
      %v1127 = vpop.f32.mrf.mxu0
      %v1128 = vadd.f32 %v1058, %v1127
      %v1129 = vpop.f32.mrf.mxu0
      %1130 = vdwg.mxu0
      %1131 = vmatprep.subr.mxu0 0.0
      %1132 = vmatpush1.msra.mxu0 %v351
      %1133 = vmatprep.subr.mxu0 0.0
      %1134 = vmatpush1.msra.mxu0 %v350
      %1135 = vmatprep.subr.mxu0 0.0
      %1136 = vmatpush1.msra.mxu0 %v349
      %1137 = vmatprep.subr.mxu0 0.0
      %1138 = vmatpush1.msra.mxu0 %v348
      %1139 = vmatprep.subr.mxu0 0.0
      %1140 = vmatpush1.msra.mxu0 %v347
      %1141 = vmatprep.subr.mxu0 0.0
      %1142 = vmatpush1.msra.mxu0 %v346
      %1143 = vmatprep.subr.mxu0 0.0
      %1144 = vmatpush1.msra.mxu0 %v345
      %1145 = vmatprep.subr.mxu0 0.0
      %1146 = vmatpush1.msra.mxu0 %v344
      %1147 = vmatprep.subr.mxu0 0.0
      %1148 = vmatpush1.msra.mxu0 %v343
      %1149 = vmatprep.subr.mxu0 0.0
      %1150 = vmatpush1.msra.mxu0 %v342
      %1151 = vmatprep.subr.mxu0 0.0
      %1152 = vmatpush1.msra.mxu0 %v341
      %1153 = vmatprep.subr.mxu0 0.0
      %1154 = vmatpush1.msra.mxu0 %v340
      %1155 = vmatprep.subr.mxu0 0.0
      %1156 = vmatpush1.msra.mxu0 %v339
      %1157 = vmatprep.subr.mxu0 0.0
      %1158 = vmatpush1.msra.mxu0 %v338
      %1159 = vmatprep.subr.mxu0 0.0
      %1160 = vmatpush1.msra.mxu0 %v337
      %1161 = vmatprep.subr.mxu0 0.0
      %1162 = vmatpush1.msra.mxu0 %v336
      %1163 = vmatprep.subr.mxu0 0.0
      %1164 = vmatpush2.msra.mxu0 0.0
      %1165 = vmatprep.subr.mxu0 0.0
      %1166 = vmatpush2.msra.mxu0 0.0
      %1167 = vmatprep.subr.mxu0 0.0
      %1168 = vmatpush2.msra.mxu0 0.0
      %1169 = vmatprep.subr.mxu0 0.0
      %1170 = vmatpush2.msra.mxu0 0.0
      %1171 = vmatprep.subr.mxu0 0.0
      %1172 = vmatpush2.msra.mxu0 0.0
      %1173 = vmatprep.subr.mxu0 0.0
      %1174 = vmatpush2.msra.mxu0 0.0
      %1175 = vmatprep.subr.mxu0 0.0
      %1176 = vmatpush2.msra.mxu0 0.0
      %1177 = vmatprep.subr.mxu0 0.0
      %1178 = vmatpush2.msra.mxu0 0.0
      %1179 = vmatprep.subr.mxu0 0.0
      %1180 = vmatpush2.msra.mxu0 0.0
      %1181 = vmatprep.subr.mxu0 0.0
      %1182 = vmatpush2.msra.mxu0 0.0
      %1183 = vmatprep.subr.mxu0 0.0
      %1184 = vmatpush2.msra.mxu0 0.0
      %1185 = vmatprep.subr.mxu0 0.0
      %1186 = vmatpush2.msra.mxu0 0.0
      %1187 = vmatprep.subr.mxu0 0.0
      %1188 = vmatpush2.msra.mxu0 0.0
      %1189 = vmatprep.subr.mxu0 0.0
      %1190 = vmatpush2.msra.mxu0 0.0
      %1191 = vmatprep.subr.mxu0 0.0
      %1192 = vmatpush2.msra.mxu0 0.0
      %1193 = vmatprep.subr.mxu0 0.0
      %1194 = vmatpush2.msra.mxu0 0.0
      %1195 = vmatprep.mubr.f32.mxu0 0.0
      %1196 = vmatmul.mubr.f32.gmra.mxu0 %v987
      %v1197 = vpop.f32.mrf.mxu0
      %v1198 = vadd.f32 0.0, %v1197
      %v1199 = vpop.f32.mrf.mxu0
      %1200 = vdwg.mxu0
      %v1201 = vadd.f32 %v1128, %v1198
      %v1203 = vrot.slane %v987, 1
      %1205 = vmatprep.subr.mxu0 0.0
      %1206 = vmatpush1.msra.mxu0 %v368
      %1207 = vmatprep.subr.mxu0 0.0
      %1208 = vmatpush1.msra.mxu0 %v367
      %1209 = vmatprep.subr.mxu0 0.0
      %1210 = vmatpush1.msra.mxu0 %v366
      %1211 = vmatprep.subr.mxu0 0.0
      %1212 = vmatpush1.msra.mxu0 %v365
      %1213 = vmatprep.subr.mxu0 0.0
      %1214 = vmatpush1.msra.mxu0 %v364
      %1215 = vmatprep.subr.mxu0 0.0
      %1216 = vmatpush1.msra.mxu0 %v363
      %1217 = vmatprep.subr.mxu0 0.0
      %1218 = vmatpush1.msra.mxu0 %v362
      %1219 = vmatprep.subr.mxu0 0.0
      %1220 = vmatpush1.msra.mxu0 %v361
      %1221 = vmatprep.subr.mxu0 0.0
      %1222 = vmatpush1.msra.mxu0 %v360
      %1223 = vmatprep.subr.mxu0 0.0
      %1224 = vmatpush1.msra.mxu0 %v359
      %1225 = vmatprep.subr.mxu0 0.0
      %1226 = vmatpush1.msra.mxu0 %v358
      %1227 = vmatprep.subr.mxu0 0.0
      %1228 = vmatpush1.msra.mxu0 %v357
      %1229 = vmatprep.subr.mxu0 0.0
      %1230 = vmatpush1.msra.mxu0 %v356
      %1231 = vmatprep.subr.mxu0 0.0
      %1232 = vmatpush1.msra.mxu0 %v355
      %1233 = vmatprep.subr.mxu0 0.0
      %1234 = vmatpush1.msra.mxu0 %v354
      %1235 = vmatprep.subr.mxu0 0.0
      %1236 = vmatpush1.msra.mxu0 %v353
      %1237 = vmatprep.subr.mxu0 0.0
      %1238 = vmatpush2.msra.mxu0 0.0
      %1239 = vmatprep.subr.mxu0 0.0
      %1240 = vmatpush2.msra.mxu0 0.0
      %1241 = vmatprep.subr.mxu0 0.0
      %1242 = vmatpush2.msra.mxu0 0.0
      %1243 = vmatprep.subr.mxu0 0.0
      %1244 = vmatpush2.msra.mxu0 0.0
      %1245 = vmatprep.subr.mxu0 0.0
      %1246 = vmatpush2.msra.mxu0 0.0
      %1247 = vmatprep.subr.mxu0 0.0
      %1248 = vmatpush2.msra.mxu0 0.0
      %1249 = vmatprep.subr.mxu0 0.0
      %1250 = vmatpush2.msra.mxu0 0.0
      %1251 = vmatprep.subr.mxu0 0.0
      %1252 = vmatpush2.msra.mxu0 0.0
      %1253 = vmatprep.subr.mxu0 0.0
      %1254 = vmatpush2.msra.mxu0 0.0
      %1255 = vmatprep.subr.mxu0 0.0
      %1256 = vmatpush2.msra.mxu0 0.0
      %1257 = vmatprep.subr.mxu0 0.0
      %1258 = vmatpush2.msra.mxu0 0.0
      %1259 = vmatprep.subr.mxu0 0.0
      %1260 = vmatpush2.msra.mxu0 0.0
      %1261 = vmatprep.subr.mxu0 0.0
      %1262 = vmatpush2.msra.mxu0 0.0
      %1263 = vmatprep.subr.mxu0 0.0
      %1264 = vmatpush2.msra.mxu0 0.0
      %1265 = vmatprep.subr.mxu0 0.0
      %1266 = vmatpush2.msra.mxu0 0.0
      %1267 = vmatprep.subr.mxu0 0.0
      %1268 = vmatpush2.msra.mxu0 0.0
      %1269 = vmatprep.mubr.f32.mxu0 0.0
      %1270 = vmatmul.mubr.f32.gmra.mxu0 %v1203
      %v1271 = vpop.f32.mrf.mxu0
      %v1272 = vadd.f32 0.0, %v1271
      %v1273 = vpop.f32.mrf.mxu0
      %1274 = vdwg.mxu0
      %v1275 = vadd.f32 %v1201, %v1272
      %v1276 = vadd.f32 %v1275, %v665
      %v1277 = vmax.f32 %v1276, 0.0
      %1279 = vrot.lane.b32.xlu0 %v1277, 104
      %v1280 = vpop.permute.xlu0 %1279
      %v1282 = vmax.f32 %v1277, %v1280
      %1284 = vrot.lane.b32.xlu0 %v1282, 80
      %v1285 = vpop.permute.xlu0 %1284
      %v1287 = vmax.f32 %v1282, %v1285
      %s1288 = scalar_lea.vmem %s300, 8
      %1289 = vst.msk [vmem:[%s1288] sm:$0x7] %vm679, %v1287
      %s1290 = smul.u32 3, %s20
      %p1291 = scmp.lt.s32.totalorder %s19, 1
      %s1292 = scalar_select %p1291, %s19, 1
      %p1293 = scmp.lt.s32.totalorder %s1290, 2
      %s1294 = scalar_select %p1293, %s1290, 2
      %s1295 = smul.addr %s1292, 3
      %s1296 = sadd.s32 %s1294, %s1295
      %s1297 = smul.addr %s1296, 4
      %s1298 = scalar_lea.vmem %s4, %s1297
      // Predicated region
      $region37: #{ic_model_forward.4} parent=35 // pred_check
        %p1299 = pneg %p149
      $region38: #{ic_model_forward.4} parent=35 // pred_check_branch
        %1301 = sbr.rel (%p1299) target = $region40
      $region39: #{ic_model_forward.4} parent=35 // pred_region
        %s1302 = smul.u32 3, %s20
      $region40: #{ic_model_forward.4} parent=35 // pred_fallthru
        _
    $region36: #{ic_model_forward.4} parent=5 // pred_fallthru
      _
    %p1303 = scmp.le.s32.totalorder 2, %s10
    // Predicated region
    $region41: #{ic_model_forward.4} parent=5 // pred_check
      %p1304 = pneg %p1303
    $region42: #{ic_model_forward.4} parent=5 // pred_check_branch
      %1306 = sbr.rel (%p1304) target = $region44
    $region43: #{ic_model_forward.4} parent=5 // pred_region
      %s1307 = ssub.s32 %s10, 2
      // Predicated region
      $region45: #{ic_model_forward.4} parent=43 // pred_check
        %p1308 = pneg %p155
      $region46: #{ic_model_forward.4} parent=43 // pred_check_branch
        %1310 = sbr.rel (%p1308) target = $region48
      $region47: #{ic_model_forward.4} parent=43 // pred_region
        %s1311 = smul.u32 3, %s22
        %p1312 = scmp.lt.s32.totalorder %s21, 1
        %s1313 = scalar_select %p1312, %s21, 1
        %p1314 = scmp.lt.s32.totalorder %s1311, 2
        %s1315 = scalar_select %p1314, %s1311, 2
        %s1316 = smul.addr %s1313, 3
        %s1317 = sadd.s32 %s1315, %s1316
        %s1318 = smul.addr %s1317, 4
        %s1319 = scalar_lea.vmem %s4, %s1318
      $region48: #{ic_model_forward.4} parent=43 // pred_fallthru
        _
    $region44: #{ic_model_forward.4} parent=5 // pred_fallthru
      _
  $region6: #{ic_model_forward.4} parent=0 // loop_footer
    %s14 = sadd.s32 1, %s10
  $region7: #{ic_model_forward.4} parent=0 // loop_footer_branch
    %9 = sbr.rel target = $region3
  $region8: #{ic_model_forward.4} parent=0 // loop_exit
    _

// kernel: ic_model_forward.5
$region0: #{ic_model_forward.5}
  #allocation0 [shape = 'u32[]', space=smem, size = 0x4, offset = 0x4, fixed_abs, tag = 'smem constant byte address 0x4 - core index']
  #allocation1 [shape = 'u32[144,128]{1,0:T(1,128)}', space=vmem, size = 0x12000, scoped, tag = 'internal scratch']
  #allocation2 [shape = 'f32[1,256]{1,0:T(1,128)}', space=vmem, size = 0x400, scoped, tag = 'scratch operand']
  %s0 = inlined_call_operand.vmem [shape: f32[1,512], index: 0, kind: input, shape index: {}]
  %s1 = inlined_call_operand.vmem [shape: bf16[512,256], index: 1, kind: input, shape index: {}]
  %s2 = inlined_call_operand.vmem [shape: f32[1,256], index: 2, kind: input, shape index: {}]
  %s3 = inlined_call_operand.vmem [shape: f32[256,128], index: 3, kind: input, shape index: {}]
  %s4 = inlined_call_operand.vmem [shape: f32[1,128], index: 4, kind: input, shape index: {}]
  %s5 = inlined_call_operand.vmem [shape: f32[128,3], index: 5, kind: input, shape index: {}]
  %s6 = inlined_call_operand.vmem [shape: f32[1,3], index: 6, kind: input, shape index: {}]
  %s7 = inlined_call_operand.hbm [shape: f32[1,3], index: 7, kind: output, shape index: {}]
  %s8 = sld [smem:[#allocation0]]
  $region46: #{ic_model_forward.5} parent=0
    _
  %s10 = ssub.s32 1, %s8
  %s11 = scalar_select 0, %s10, %s8
  $region1: #{ic_model_forward.5} parent=0
    #allocation3 [shape = 'u8[512]{0}', space=vmem, size = 0x400, scoped, tag = 'output window, operand 0, single buffered']
    #allocation4 [shape = 's32[1]{0}', space=sflag, size = 0x4, scoped, tag = 'scoped memory for ic_model_forward.5']
    %12 = vsyncpa [#allocation4], 0
    // Predicated region
    $region2: #{ic_model_forward.5} parent=1 // pred_check
      _
    $region3: #{ic_model_forward.5} parent=1 // pred_check_branch
      %14 = sbr.rel (0) target = $region5
    $region4: #{ic_model_forward.5} parent=1 // pred_region
      _
    $region5: #{ic_model_forward.5} parent=1 // pred_fallthru
      _
    // Predicated region
    $region6: #{ic_model_forward.5} parent=1 // pred_check
      _
    $region7: #{ic_model_forward.5} parent=1 // pred_check_branch
      %16 = sbr.rel (0) target = $region9
    $region8: #{ic_model_forward.5} parent=1 // pred_region
      _
    $region9: #{ic_model_forward.5} parent=1 // pred_fallthru
      _
    // Predicated region
    $region10: #{ic_model_forward.5} parent=1 // pred_check
      _
    $region11: #{ic_model_forward.5} parent=1 // pred_check_branch
      %18 = sbr.rel (0) target = $region13
    $region12: #{ic_model_forward.5} parent=1 // pred_region
      _
    $region13: #{ic_model_forward.5} parent=1 // pred_fallthru
      _
    // Predicated region
    $region14: #{ic_model_forward.5} parent=1 // pred_check
      _
    $region15: #{ic_model_forward.5} parent=1 // pred_check_branch
      %20 = sbr.rel (0) target = $region17
    $region16: #{ic_model_forward.5} parent=1 // pred_region
      _
    $region17: #{ic_model_forward.5} parent=1 // pred_fallthru
      _
    // Predicated region
    $region18: #{ic_model_forward.5} parent=1 // pred_check
      _
    $region19: #{ic_model_forward.5} parent=1 // pred_check_branch
      %22 = sbr.rel (0) target = $region21
    $region20: #{ic_model_forward.5} parent=1 // pred_region
      _
    $region21: #{ic_model_forward.5} parent=1 // pred_fallthru
      _
    // Predicated region
    $region22: #{ic_model_forward.5} parent=1 // pred_check
      _
    $region23: #{ic_model_forward.5} parent=1 // pred_check_branch
      %24 = sbr.rel (0) target = $region25
    $region24: #{ic_model_forward.5} parent=1 // pred_region
      _
    $region25: #{ic_model_forward.5} parent=1 // pred_fallthru
      _
    // Predicated region
    $region26: #{ic_model_forward.5} parent=1 // pred_check
      _
    $region27: #{ic_model_forward.5} parent=1 // pred_check_branch
      %26 = sbr.rel (0) target = $region29
    $region28: #{ic_model_forward.5} parent=1 // pred_region
      _
    $region29: #{ic_model_forward.5} parent=1 // pred_fallthru
      _
    %p27 = scmp.eq.s32.totalorder 0, 0
    // Predicated region
    $region30: #{ic_model_forward.5} parent=1 // pred_check
      %p28 = pneg %p27
    $region31: #{ic_model_forward.5} parent=1 // pred_check_branch
      %30 = sbr.rel (%p28) target = $region33
    $region32: #{ic_model_forward.5} parent=1 // pred_region
      %v31 = vlaneseq
      %vm32 = vcmp.ge.s32.totalorder %v31, 0
      %vm33 = vcmp.lt.s32.totalorder %v31, 256
      %vm34 = vmand %vm32, %vm33
      %35 = vst.msk [vmem:[#allocation2] sm:$0x3] %vm34, 0.0
    $region33: #{ic_model_forward.5} parent=1 // pred_fallthru
      _
    %v36 = vld [vmem:[%s0] sm:$0xf]
    %v38 = vlaneseq
    %v39 = vshrl.u32 %v38, 7
    %v40 = vsub.s32 0, %v39
    %v41 = vrot.slane %v36, %v40
    %v42 = vlaneseq
    %v43 = vshrl.u32 %v42, 7
    %v44 = vsub.s32 1, %v43
    %v45 = vrot.slane %v36, %v44
    %v46 = vlaneseq
    %v47 = vshrl.u32 %v46, 7
    %v48 = vsub.s32 2, %v47
    %v49 = vrot.slane %v36, %v48
    %v50 = vlaneseq
    %v51 = vshrl.u32 %v50, 7
    %v52 = vsub.s32 3, %v51
    %v53 = vrot.slane %v36, %v52
    %v58 = vpack.c.bf16 %v41, %v41
    %v59 = vpack.c.bf16 %v45, %v45
    %v60 = vpack.c.bf16 %v49, %v49
    %v61 = vpack.c.bf16 %v53, %v53
    %v62 = vld [vmem:[#allocation2] sm:$0x3]
    %v63 = vld [vmem:[%s1] sm:$0xff]
    %v64 = vld [vmem:[%s1 + $0x8] sm:$0xff]
    %v65 = vld [vmem:[%s1 + $0x10] sm:$0xff]
    %v66 = vld [vmem:[%s1 + $0x18] sm:$0xff]
    %v67 = vld [vmem:[%s1 + $0x20] sm:$0xff]
    %v68 = vld [vmem:[%s1 + $0x28] sm:$0xff]
    %v69 = vld [vmem:[%s1 + $0x30] sm:$0xff]
    %v70 = vld [vmem:[%s1 + $0x38] sm:$0xff]
    %v71 = vld [vmem:[%s1 + $0x40] sm:$0xff]
    %v72 = vld [vmem:[%s1 + $0x48] sm:$0xff]
    %v73 = vld [vmem:[%s1 + $0x50] sm:$0xff]
    %v74 = vld [vmem:[%s1 + $0x58] sm:$0xff]
    %v75 = vld [vmem:[%s1 + $0x60] sm:$0xff]
    %v76 = vld [vmem:[%s1 + $0x68] sm:$0xff]
    %v77 = vld [vmem:[%s1 + $0x70] sm:$0xff]
    %v78 = vld [vmem:[%s1 + $0x78] sm:$0xff]
    %v79 = vld [vmem:[%s1 + $0x80] sm:$0xff]
    %v80 = vld [vmem:[%s1 + $0x88] sm:$0xff]
    %v81 = vld [vmem:[%s1 + $0x90] sm:$0xff]
    %v82 = vld [vmem:[%s1 + $0x98] sm:$0xff]
    %v83 = vld [vmem:[%s1 + $0xa0] sm:$0xff]
    %v84 = vld [vmem:[%s1 + $0xa8] sm:$0xff]
    %v85 = vld [vmem:[%s1 + $0xb0] sm:$0xff]
    %v86 = vld [vmem:[%s1 + $0xb8] sm:$0xff]
    %v87 = vld [vmem:[%s1 + $0xc0] sm:$0xff]
    %v88 = vld [vmem:[%s1 + $0xc8] sm:$0xff]
    %v89 = vld [vmem:[%s1 + $0xd0] sm:$0xff]
    %v90 = vld [vmem:[%s1 + $0xd8] sm:$0xff]
    %v91 = vld [vmem:[%s1 + $0xe0] sm:$0xff]
    %v92 = vld [vmem:[%s1 + $0xe8] sm:$0xff]
    %v93 = vld [vmem:[%s1 + $0xf0] sm:$0xff]
    %v94 = vld [vmem:[%s1 + $0xf8] sm:$0xff]
    %v95 = vld [vmem:[%s1 + $0x100] sm:$0xff]
    %v96 = vld [vmem:[%s1 + $0x108] sm:$0xff]
    %v97 = vld [vmem:[%s1 + $0x110] sm:$0xff]
    %v98 = vld [vmem:[%s1 + $0x118] sm:$0xff]
    %v99 = vld [vmem:[%s1 + $0x120] sm:$0xff]
    %v100 = vld [vmem:[%s1 + $0x128] sm:$0xff]
    %v101 = vld [vmem:[%s1 + $0x130] sm:$0xff]
    %v102 = vld [vmem:[%s1 + $0x138] sm:$0xff]
    %v103 = vld [vmem:[%s1 + $0x140] sm:$0xff]
    %v104 = vld [vmem:[%s1 + $0x148] sm:$0xff]
    %v105 = vld [vmem:[%s1 + $0x150] sm:$0xff]
    %v106 = vld [vmem:[%s1 + $0x158] sm:$0xff]
    %v107 = vld [vmem:[%s1 + $0x160] sm:$0xff]
    %v108 = vld [vmem:[%s1 + $0x168] sm:$0xff]
    %v109 = vld [vmem:[%s1 + $0x170] sm:$0xff]
    %v110 = vld [vmem:[%s1 + $0x178] sm:$0xff]
    %v111 = vld [vmem:[%s1 + $0x180] sm:$0xff]
    %v112 = vld [vmem:[%s1 + $0x188] sm:$0xff]
    %v113 = vld [vmem:[%s1 + $0x190] sm:$0xff]
    %v114 = vld [vmem:[%s1 + $0x198] sm:$0xff]
    %v115 = vld [vmem:[%s1 + $0x1a0] sm:$0xff]
    %v116 = vld [vmem:[%s1 + $0x1a8] sm:$0xff]
    %v117 = vld [vmem:[%s1 + $0x1b0] sm:$0xff]
    %v118 = vld [vmem:[%s1 + $0x1b8] sm:$0xff]
    %v119 = vld [vmem:[%s1 + $0x1c0] sm:$0xff]
    %v120 = vld [vmem:[%s1 + $0x1c8] sm:$0xff]
    %v121 = vld [vmem:[%s1 + $0x1d0] sm:$0xff]
    %v122 = vld [vmem:[%s1 + $0x1d8] sm:$0xff]
    %v123 = vld [vmem:[%s1 + $0x1e0] sm:$0xff]
    %v124 = vld [vmem:[%s1 + $0x1e8] sm:$0xff]
    %v125 = vld [vmem:[%s1 + $0x1f0] sm:$0xff]
    %v126 = vld [vmem:[%s1 + $0x1f8] sm:$0xff]
    %v191 = vunpack.c.l.b16 %v63
    %v192 = vunpack.c.h.b16 %v63
    %v193 = vunpack.c.l.b16 %v64
    %v194 = vunpack.c.h.b16 %v64
    %v195 = vunpack.c.l.b16 %v65
    %v196 = vunpack.c.h.b16 %v65
    %v197 = vunpack.c.l.b16 %v66
    %v198 = vunpack.c.h.b16 %v66
    %v199 = vunpack.c.l.b16 %v67
    %v200 = vunpack.c.h.b16 %v67
    %v201 = vunpack.c.l.b16 %v68
    %v202 = vunpack.c.h.b16 %v68
    %v203 = vunpack.c.l.b16 %v69
    %v204 = vunpack.c.h.b16 %v69
    %v205 = vunpack.c.l.b16 %v70
    %v206 = vunpack.c.h.b16 %v70
    %v207 = vunpack.c.l.b16 %v71
    %v208 = vunpack.c.h.b16 %v71
    %v209 = vunpack.c.l.b16 %v72
    %v210 = vunpack.c.h.b16 %v72
    %v211 = vunpack.c.l.b16 %v73
    %v212 = vunpack.c.h.b16 %v73
    %v213 = vunpack.c.l.b16 %v74
    %v214 = vunpack.c.h.b16 %v74
    %v215 = vunpack.c.l.b16 %v75
    %v216 = vunpack.c.h.b16 %v75
    %v217 = vunpack.c.l.b16 %v76
    %v218 = vunpack.c.h.b16 %v76
    %v219 = vunpack.c.l.b16 %v77
    %v220 = vunpack.c.h.b16 %v77
    %v221 = vunpack.c.l.b16 %v78
    %v222 = vunpack.c.h.b16 %v78
    %v223 = vunpack.c.l.b16 %v79
    %v224 = vunpack.c.h.b16 %v79
    %v225 = vunpack.c.l.b16 %v80
    %v226 = vunpack.c.h.b16 %v80
    %v227 = vunpack.c.l.b16 %v81
    %v228 = vunpack.c.h.b16 %v81
    %v229 = vunpack.c.l.b16 %v82
    %v230 = vunpack.c.h.b16 %v82
    %v231 = vunpack.c.l.b16 %v83
    %v232 = vunpack.c.h.b16 %v83
    %v233 = vunpack.c.l.b16 %v84
    %v234 = vunpack.c.h.b16 %v84
    %v235 = vunpack.c.l.b16 %v85
    %v236 = vunpack.c.h.b16 %v85
    %v237 = vunpack.c.l.b16 %v86
    %v238 = vunpack.c.h.b16 %v86
    %v239 = vunpack.c.l.b16 %v87
    %v240 = vunpack.c.h.b16 %v87
    %v241 = vunpack.c.l.b16 %v88
    %v242 = vunpack.c.h.b16 %v88
    %v243 = vunpack.c.l.b16 %v89
    %v244 = vunpack.c.h.b16 %v89
    %v245 = vunpack.c.l.b16 %v90
    %v246 = vunpack.c.h.b16 %v90
    %v247 = vunpack.c.l.b16 %v91
    %v248 = vunpack.c.h.b16 %v91
    %v249 = vunpack.c.l.b16 %v92
    %v250 = vunpack.c.h.b16 %v92
    %v251 = vunpack.c.l.b16 %v93
    %v252 = vunpack.c.h.b16 %v93
    %v253 = vunpack.c.l.b16 %v94
    %v254 = vunpack.c.h.b16 %v94
    %v255 = vunpack.c.l.b16 %v95
    %v256 = vunpack.c.h.b16 %v95
    %v257 = vunpack.c.l.b16 %v96
    %v258 = vunpack.c.h.b16 %v96
    %v259 = vunpack.c.l.b16 %v97
    %v260 = vunpack.c.h.b16 %v97
    %v261 = vunpack.c.l.b16 %v98
    %v262 = vunpack.c.h.b16 %v98
    %v263 = vunpack.c.l.b16 %v99
    %v264 = vunpack.c.h.b16 %v99
    %v265 = vunpack.c.l.b16 %v100
    %v266 = vunpack.c.h.b16 %v100
    %v267 = vunpack.c.l.b16 %v101
    %v268 = vunpack.c.h.b16 %v101
    %v269 = vunpack.c.l.b16 %v102
    %v270 = vunpack.c.h.b16 %v102
    %v271 = vunpack.c.l.b16 %v103
    %v272 = vunpack.c.h.b16 %v103
    %v273 = vunpack.c.l.b16 %v104
    %v274 = vunpack.c.h.b16 %v104
    %v275 = vunpack.c.l.b16 %v105
    %v276 = vunpack.c.h.b16 %v105
    %v277 = vunpack.c.l.b16 %v106
    %v278 = vunpack.c.h.b16 %v106
    %v279 = vunpack.c.l.b16 %v107
    %v280 = vunpack.c.h.b16 %v107
    %v281 = vunpack.c.l.b16 %v108
    %v282 = vunpack.c.h.b16 %v108
    %v283 = vunpack.c.l.b16 %v109
    %v284 = vunpack.c.h.b16 %v109
    %v285 = vunpack.c.l.b16 %v110
    %v286 = vunpack.c.h.b16 %v110
    %v287 = vunpack.c.l.b16 %v111
    %v288 = vunpack.c.h.b16 %v111
    %v289 = vunpack.c.l.b16 %v112
    %v290 = vunpack.c.h.b16 %v112
    %v291 = vunpack.c.l.b16 %v113
    %v292 = vunpack.c.h.b16 %v113
    %v293 = vunpack.c.l.b16 %v114
    %v294 = vunpack.c.h.b16 %v114
    %v295 = vunpack.c.l.b16 %v115
    %v296 = vunpack.c.h.b16 %v115
    %v297 = vunpack.c.l.b16 %v116
    %v298 = vunpack.c.h.b16 %v116
    %v299 = vunpack.c.l.b16 %v117
    %v300 = vunpack.c.h.b16 %v117
    %v301 = vunpack.c.l.b16 %v118
    %v302 = vunpack.c.h.b16 %v118
    %v303 = vunpack.c.l.b16 %v119
    %v304 = vunpack.c.h.b16 %v119
    %v305 = vunpack.c.l.b16 %v120
    %v306 = vunpack.c.h.b16 %v120
    %v307 = vunpack.c.l.b16 %v121
    %v308 = vunpack.c.h.b16 %v121
    %v309 = vunpack.c.l.b16 %v122
    %v310 = vunpack.c.h.b16 %v122
    %v311 = vunpack.c.l.b16 %v123
    %v312 = vunpack.c.h.b16 %v123
    %v313 = vunpack.c.l.b16 %v124
    %v314 = vunpack.c.h.b16 %v124
    %v315 = vunpack.c.l.b16 %v125
    %v316 = vunpack.c.h.b16 %v125
    %v317 = vunpack.c.l.b16 %v126
    %v318 = vunpack.c.h.b16 %v126
    %v319 = vpack.c.b16 %v193, %v191
    %v320 = vpack.c.b16 %v194, %v192
    %v321 = vpack.c.b16 %v197, %v195
    %v322 = vpack.c.b16 %v198, %v196
    %v323 = vpack.c.b16 %v201, %v199
    %v324 = vpack.c.b16 %v202, %v200
    %v325 = vpack.c.b16 %v205, %v203
    %v326 = vpack.c.b16 %v206, %v204
    %v327 = vpack.c.b16 %v209, %v207
    %v328 = vpack.c.b16 %v210, %v208
    %v329 = vpack.c.b16 %v213, %v211
    %v330 = vpack.c.b16 %v214, %v212
    %v331 = vpack.c.b16 %v217, %v215
    %v332 = vpack.c.b16 %v218, %v216
    %v333 = vpack.c.b16 %v221, %v219
    %v334 = vpack.c.b16 %v222, %v220
    %v335 = vpack.c.b16 %v225, %v223
    %v336 = vpack.c.b16 %v226, %v224
    %v337 = vpack.c.b16 %v229, %v227
    %v338 = vpack.c.b16 %v230, %v228
    %v339 = vpack.c.b16 %v233, %v231
    %v340 = vpack.c.b16 %v234, %v232
    %v341 = vpack.c.b16 %v237, %v235
    %v342 = vpack.c.b16 %v238, %v236
    %v343 = vpack.c.b16 %v241, %v239
    %v344 = vpack.c.b16 %v242, %v240
    %v345 = vpack.c.b16 %v245, %v243
    %v346 = vpack.c.b16 %v246, %v244
    %v347 = vpack.c.b16 %v249, %v247
    %v348 = vpack.c.b16 %v250, %v248
    %v349 = vpack.c.b16 %v253, %v251
    %v350 = vpack.c.b16 %v254, %v252
    %v351 = vpack.c.b16 %v257, %v255
    %v352 = vpack.c.b16 %v258, %v256
    %v353 = vpack.c.b16 %v261, %v259
    %v354 = vpack.c.b16 %v262, %v260
    %v355 = vpack.c.b16 %v265, %v263
    %v356 = vpack.c.b16 %v266, %v264
    %v357 = vpack.c.b16 %v269, %v267
    %v358 = vpack.c.b16 %v270, %v268
    %v359 = vpack.c.b16 %v273, %v271
    %v360 = vpack.c.b16 %v274, %v272
    %v361 = vpack.c.b16 %v277, %v275
    %v362 = vpack.c.b16 %v278, %v276
    %v363 = vpack.c.b16 %v281, %v279
    %v364 = vpack.c.b16 %v282, %v280
    %v365 = vpack.c.b16 %v285, %v283
    %v366 = vpack.c.b16 %v286, %v284
    %v367 = vpack.c.b16 %v289, %v287
    %v368 = vpack.c.b16 %v290, %v288
    %v369 = vpack.c.b16 %v293, %v291
    %v370 = vpack.c.b16 %v294, %v292
    %v371 = vpack.c.b16 %v297, %v295
    %v372 = vpack.c.b16 %v298, %v296
    %v373 = vpack.c.b16 %v301, %v299
    %v374 = vpack.c.b16 %v302, %v300
    %v375 = vpack.c.b16 %v305, %v303
    %v376 = vpack.c.b16 %v306, %v304
    %v377 = vpack.c.b16 %v309, %v307
    %v378 = vpack.c.b16 %v310, %v308
    %v379 = vpack.c.b16 %v313, %v311
    %v380 = vpack.c.b16 %v314, %v312
    %v381 = vpack.c.b16 %v317, %v315
    %v382 = vpack.c.b16 %v318, %v316
    %447 = vmatprep.subr.bf16.mxu0 %v334
    %448 = vmatpush1.bf16.msra.mxu0 %v333
    %449 = vmatprep.subr.bf16.mxu0 %v332
    %450 = vmatpush1.bf16.msra.mxu0 %v331
    %451 = vmatprep.subr.bf16.mxu0 %v330
    %452 = vmatpush1.bf16.msra.mxu0 %v329
    %453 = vmatprep.subr.bf16.mxu0 %v328
    %454 = vmatpush1.bf16.msra.mxu0 %v327
    %455 = vmatprep.subr.bf16.mxu0 %v326
    %456 = vmatpush1.bf16.msra.mxu0 %v325
    %457 = vmatprep.subr.bf16.mxu0 %v324
    %458 = vmatpush1.bf16.msra.mxu0 %v323
    %459 = vmatprep.subr.bf16.mxu0 %v322
    %460 = vmatpush1.bf16.msra.mxu0 %v321
    %461 = vmatprep.subr.bf16.mxu0 %v320
    %462 = vmatpush1.bf16.msra.mxu0 %v319
    %463 = vmatprep.subr.bf16.mxu0 %v350
    %464 = vmatpush2.bf16.msra.mxu0 %v349
    %465 = vmatprep.subr.bf16.mxu0 %v348
    %466 = vmatpush2.bf16.msra.mxu0 %v347
    %467 = vmatprep.subr.bf16.mxu0 %v346
    %468 = vmatpush2.bf16.msra.mxu0 %v345
    %469 = vmatprep.subr.bf16.mxu0 %v344
    %470 = vmatpush2.bf16.msra.mxu0 %v343
    %471 = vmatprep.subr.bf16.mxu0 %v342
    %472 = vmatpush2.bf16.msra.mxu0 %v341
    %473 = vmatprep.subr.bf16.mxu0 %v340
    %474 = vmatpush2.bf16.msra.mxu0 %v339
    %475 = vmatprep.subr.bf16.mxu0 %v338
    %476 = vmatpush2.bf16.msra.mxu0 %v337
    %477 = vmatprep.subr.bf16.mxu0 %v336
    %478 = vmatpush2.bf16.msra.mxu0 %v335
    %479 = vmatprep.mubr.bf16.mxu0 %v59
    %480 = vmatmul.mubr.bf16.gmra.mxu0 %v58
    %v481 = vpop.f32.mrf.mxu0
    %v482 = vadd.f32 0.0, %v481
    %v483 = vpop.f32.mrf.mxu0
    %v484 = vadd.f32 0.0, %v483
    %v485 = vpop.f32.mrf.mxu0
    %v486 = vpop.f32.mrf.mxu0
    %487 = vdwg.mxu0
    %488 = vmatprep.subr.bf16.mxu0 %v366
    %489 = vmatpush1.bf16.msra.mxu0 %v365
    %490 = vmatprep.subr.bf16.mxu0 %v364
    %491 = vmatpush1.bf16.msra.mxu0 %v363
    %492 = vmatprep.subr.bf16.mxu0 %v362
    %493 = vmatpush1.bf16.msra.mxu0 %v361
    %494 = vmatprep.subr.bf16.mxu0 %v360
    %495 = vmatpush1.bf16.msra.mxu0 %v359
    %496 = vmatprep.subr.bf16.mxu0 %v358
    %497 = vmatpush1.bf16.msra.mxu0 %v357
    %498 = vmatprep.subr.bf16.mxu0 %v356
    %499 = vmatpush1.bf16.msra.mxu0 %v355
    %500 = vmatprep.subr.bf16.mxu0 %v354
    %501 = vmatpush1.bf16.msra.mxu0 %v353
    %502 = vmatprep.subr.bf16.mxu0 %v352
    %503 = vmatpush1.bf16.msra.mxu0 %v351
    %504 = vmatprep.subr.bf16.mxu0 %v382
    %505 = vmatpush2.bf16.msra.mxu0 %v381
    %506 = vmatprep.subr.bf16.mxu0 %v380
    %507 = vmatpush2.bf16.msra.mxu0 %v379
    %508 = vmatprep.subr.bf16.mxu0 %v378
    %509 = vmatpush2.bf16.msra.mxu0 %v377
    %510 = vmatprep.subr.bf16.mxu0 %v376
    %511 = vmatpush2.bf16.msra.mxu0 %v375
    %512 = vmatprep.subr.bf16.mxu0 %v374
    %513 = vmatpush2.bf16.msra.mxu0 %v373
    %514 = vmatprep.subr.bf16.mxu0 %v372
    %515 = vmatpush2.bf16.msra.mxu0 %v371
    %516 = vmatprep.subr.bf16.mxu0 %v370
    %517 = vmatpush2.bf16.msra.mxu0 %v369
    %518 = vmatprep.subr.bf16.mxu0 %v368
    %519 = vmatpush2.bf16.msra.mxu0 %v367
    %520 = vmatprep.mubr.bf16.mxu0 %v61
    %521 = vmatmul.mubr.bf16.gmra.mxu0 %v60
    %v522 = vpop.f32.mrf.mxu0
    %v523 = vadd.f32 %v482, %v522
    %v524 = vpop.f32.mrf.mxu0
    %v525 = vadd.f32 %v484, %v524
    %v526 = vpop.f32.mrf.mxu0
    %v527 = vpop.f32.mrf.mxu0
    %528 = vdwg.mxu0
    %v531 = vcombine.low %v523, %v525
    %v533 = vunpack.c.l.s4 1966171168
    %v534 = vunpack.c.0.s8 %v533
    %v535 = vlaneseq
    %v536 = vshrl.u32 %v535, 7
    %v537 = vsub.s32 %v534, %v536
    %v538 = vrot.slane %v531, %v537
    %v540 = vunpack.c.l.s4 1966171168
    %v541 = vunpack.c.0.s8 %v540
    %v542 = vlaneseq
    %v543 = vshrl.u32 %v542, 7
    %v544 = vsub.s32 %v541, %v543
    %v545 = vrot.slane %v538, %v544
    %v547 = vadd.f32 %v62, %v545
    %v548 = vlaneseq
    %vm549 = vcmp.ge.s32.totalorder %v548, 0
    %vm550 = vcmp.lt.s32.totalorder %v548, 256
    %vm551 = vmand %vm549, %vm550
    %552 = vst.msk [vmem:[#allocation2] sm:$0x3] %vm551, %v547
    // Predicated region
    $region34: #{ic_model_forward.5} parent=1 // pred_check
      %p553 = pneg %p27
    $region35: #{ic_model_forward.5} parent=1 // pred_check_branch
      %555 = sbr.rel (%p553) target = $region37
    $region36: #{ic_model_forward.5} parent=1 // pred_region
      %v556 = vld [vmem:[#allocation2] sm:$0x3]
      %v557 = vld [vmem:[%s2] sm:$0x3]
      %v558 = vadd.f32 %v556, %v557
      %v559 = vmax.f32 %v558, 0.0
      %v560 = vld [vmem:[%s3] sm:$0xff]
      %v561 = vld [vmem:[%s3 + $0x8] sm:$0xff]
      %v562 = vld [vmem:[%s3 + $0x10] sm:$0xff]
      %v563 = vld [vmem:[%s3 + $0x18] sm:$0xff]
      %v564 = vld [vmem:[%s3 + $0x20] sm:$0xff]
      %v565 = vld [vmem:[%s3 + $0x28] sm:$0xff]
      %v566 = vld [vmem:[%s3 + $0x30] sm:$0xff]
      %v567 = vld [vmem:[%s3 + $0x38] sm:$0xff]
      %v568 = vld [vmem:[%s3 + $0x40] sm:$0xff]
      %v569 = vld [vmem:[%s3 + $0x48] sm:$0xff]
      %v570 = vld [vmem:[%s3 + $0x50] sm:$0xff]
      %v571 = vld [vmem:[%s3 + $0x58] sm:$0xff]
      %v572 = vld [vmem:[%s3 + $0x60] sm:$0xff]
      %v573 = vld [vmem:[%s3 + $0x68] sm:$0xff]
      %v574 = vld [vmem:[%s3 + $0x70] sm:$0xff]
      %v575 = vld [vmem:[%s3 + $0x78] sm:$0xff]
      %v576 = vld [vmem:[%s3 + $0x80] sm:$0xff]
      %v577 = vld [vmem:[%s3 + $0x88] sm:$0xff]
      %v578 = vld [vmem:[%s3 + $0x90] sm:$0xff]
      %v579 = vld [vmem:[%s3 + $0x98] sm:$0xff]
      %v580 = vld [vmem:[%s3 + $0xa0] sm:$0xff]
      %v581 = vld [vmem:[%s3 + $0xa8] sm:$0xff]
      %v582 = vld [vmem:[%s3 + $0xb0] sm:$0xff]
      %v583 = vld [vmem:[%s3 + $0xb8] sm:$0xff]
      %v584 = vld [vmem:[%s3 + $0xc0] sm:$0xff]
      %v585 = vld [vmem:[%s3 + $0xc8] sm:$0xff]
      %v586 = vld [vmem:[%s3 + $0xd0] sm:$0xff]
      %v587 = vld [vmem:[%s3 + $0xd8] sm:$0xff]
      %v588 = vld [vmem:[%s3 + $0xe0] sm:$0xff]
      %v589 = vld [vmem:[%s3 + $0xe8] sm:$0xff]
      %v590 = vld [vmem:[%s3 + $0xf0] sm:$0xff]
      %v591 = vld [vmem:[%s3 + $0xf8] sm:$0xff]
      %v592 = vld [vmem:[%s4] sm:$0x1]
      %v594 = vlaneseq
      %v595 = vshrl.u32 %v594, 7
      %v596 = vsub.s32 0, %v595
      %v597 = vrot.slane %v559, %v596
      %v598 = vlaneseq
      %v599 = vshrl.u32 %v598, 7
      %v600 = vsub.s32 1, %v599
      %v601 = vrot.slane %v559, %v600
      %604 = vmatprep.subr.mxu0 0.0
      %605 = vmatpush1.msra.mxu0 %v575
      %606 = vmatprep.subr.mxu0 0.0
      %607 = vmatpush1.msra.mxu0 %v574
      %608 = vmatprep.subr.mxu0 0.0
      %609 = vmatpush1.msra.mxu0 %v573
      %610 = vmatprep.subr.mxu0 0.0
      %611 = vmatpush1.msra.mxu0 %v572
      %612 = vmatprep.subr.mxu0 0.0
      %613 = vmatpush1.msra.mxu0 %v571
      %614 = vmatprep.subr.mxu0 0.0
      %615 = vmatpush1.msra.mxu0 %v570
      %616 = vmatprep.subr.mxu0 0.0
      %617 = vmatpush1.msra.mxu0 %v569
      %618 = vmatprep.subr.mxu0 0.0
      %619 = vmatpush1.msra.mxu0 %v568
      %620 = vmatprep.subr.mxu0 0.0
      %621 = vmatpush1.msra.mxu0 %v567
      %622 = vmatprep.subr.mxu0 0.0
      %623 = vmatpush1.msra.mxu0 %v566
      %624 = vmatprep.subr.mxu0 0.0
      %625 = vmatpush1.msra.mxu0 %v565
      %626 = vmatprep.subr.mxu0 0.0
      %627 = vmatpush1.msra.mxu0 %v564
      %628 = vmatprep.subr.mxu0 0.0
      %629 = vmatpush1.msra.mxu0 %v563
      %630 = vmatprep.subr.mxu0 0.0
      %631 = vmatpush1.msra.mxu0 %v562
      %632 = vmatprep.subr.mxu0 0.0
      %633 = vmatpush1.msra.mxu0 %v561
      %634 = vmatprep.subr.mxu0 0.0
      %635 = vmatpush1.msra.mxu0 %v560
      %636 = vmatprep.subr.mxu0 0.0
      %637 = vmatpush2.msra.mxu0 %v591
      %638 = vmatprep.subr.mxu0 0.0
      %639 = vmatpush2.msra.mxu0 %v590
      %640 = vmatprep.subr.mxu0 0.0
      %641 = vmatpush2.msra.mxu0 %v589
      %642 = vmatprep.subr.mxu0 0.0
      %643 = vmatpush2.msra.mxu0 %v588
      %644 = vmatprep.subr.mxu0 0.0
      %645 = vmatpush2.msra.mxu0 %v587
      %646 = vmatprep.subr.mxu0 0.0
      %647 = vmatpush2.msra.mxu0 %v586
      %648 = vmatprep.subr.mxu0 0.0
      %649 = vmatpush2.msra.mxu0 %v585
      %650 = vmatprep.subr.mxu0 0.0
      %651 = vmatpush2.msra.mxu0 %v584
      %652 = vmatprep.subr.mxu0 0.0
      %653 = vmatpush2.msra.mxu0 %v583
      %654 = vmatprep.subr.mxu0 0.0
      %655 = vmatpush2.msra.mxu0 %v582
      %656 = vmatprep.subr.mxu0 0.0
      %657 = vmatpush2.msra.mxu0 %v581
      %658 = vmatprep.subr.mxu0 0.0
      %659 = vmatpush2.msra.mxu0 %v580
      %660 = vmatprep.subr.mxu0 0.0
      %661 = vmatpush2.msra.mxu0 %v579
      %662 = vmatprep.subr.mxu0 0.0
      %663 = vmatpush2.msra.mxu0 %v578
      %664 = vmatprep.subr.mxu0 0.0
      %665 = vmatpush2.msra.mxu0 %v577
      %666 = vmatprep.subr.mxu0 0.0
      %667 = vmatpush2.msra.mxu0 %v576
      %668 = vmatprep.mubr.f32.mxu0 %v601
      %669 = vmatmul.mubr.f32.gmra.mxu0 %v597
      %v670 = vpop.f32.mrf.mxu0
      %v671 = vadd.f32 %v592, %v670
      %v672 = vpop.f32.mrf.mxu0
      %673 = vdwg.mxu0
      %v674 = vmax.f32 %v671, 0.0
      %v675 = vld [vmem:[%s5] sm:$0xff]
      %v676 = vld [vmem:[%s5 + $0x8] sm:$0xff]
      %v677 = vld [vmem:[%s5 + $0x10] sm:$0xff]
      %v678 = vld [vmem:[%s5 + $0x18] sm:$0xff]
      %v679 = vld [vmem:[%s5 + $0x20] sm:$0xff]
      %v680 = vld [vmem:[%s5 + $0x28] sm:$0xff]
      %v681 = vld [vmem:[%s5 + $0x30] sm:$0xff]
      %v682 = vld [vmem:[%s5 + $0x38] sm:$0xff]
      %v683 = vld [vmem:[%s5 + $0x40] sm:$0xff]
      %v684 = vld [vmem:[%s5 + $0x48] sm:$0xff]
      %v685 = vld [vmem:[%s5 + $0x50] sm:$0xff]
      %v686 = vld [vmem:[%s5 + $0x58] sm:$0xff]
      %v687 = vld [vmem:[%s5 + $0x60] sm:$0xff]
      %v688 = vld [vmem:[%s5 + $0x68] sm:$0xff]
      %v689 = vld [vmem:[%s5 + $0x70] sm:$0xff]
      %v690 = vld [vmem:[%s5 + $0x78] sm:$0xff]
      %v691 = vld [vmem:[%s6] sm:$0x1]
      %692 = vmatprep.subr.mxu0 0.0
      %693 = vmatpush1.msra.mxu0 %v690
      %694 = vmatprep.subr.mxu0 0.0
      %695 = vmatpush1.msra.mxu0 %v689
      %696 = vmatprep.subr.mxu0 0.0
      %697 = vmatpush1.msra.mxu0 %v688
      %698 = vmatprep.subr.mxu0 0.0
      %699 = vmatpush1.msra.mxu0 %v687
      %700 = vmatprep.subr.mxu0 0.0
      %701 = vmatpush1.msra.mxu0 %v686
      %702 = vmatprep.subr.mxu0 0.0
      %703 = vmatpush1.msra.mxu0 %v685
      %704 = vmatprep.subr.mxu0 0.0
      %705 = vmatpush1.msra.mxu0 %v684
      %706 = vmatprep.subr.mxu0 0.0
      %707 = vmatpush1.msra.mxu0 %v683
      %708 = vmatprep.subr.mxu0 0.0
      %709 = vmatpush1.msra.mxu0 %v682
      %710 = vmatprep.subr.mxu0 0.0
      %711 = vmatpush1.msra.mxu0 %v681
      %712 = vmatprep.subr.mxu0 0.0
      %713 = vmatpush1.msra.mxu0 %v680
      %714 = vmatprep.subr.mxu0 0.0
      %715 = vmatpush1.msra.mxu0 %v679
      %716 = vmatprep.subr.mxu0 0.0
      %717 = vmatpush1.msra.mxu0 %v678
      %718 = vmatprep.subr.mxu0 0.0
      %719 = vmatpush1.msra.mxu0 %v677
      %720 = vmatprep.subr.mxu0 0.0
      %721 = vmatpush1.msra.mxu0 %v676
      %722 = vmatprep.subr.mxu0 0.0
      %723 = vmatpush1.msra.mxu0 %v675
      %724 = vmatprep.subr.mxu0 0.0
      %725 = vmatpush2.msra.mxu0 0.0
      %726 = vmatprep.subr.mxu0 0.0
      %727 = vmatpush2.msra.mxu0 0.0
      %728 = vmatprep.subr.mxu0 0.0
      %729 = vmatpush2.msra.mxu0 0.0
      %730 = vmatprep.subr.mxu0 0.0
      %731 = vmatpush2.msra.mxu0 0.0
      %732 = vmatprep.subr.mxu0 0.0
      %733 = vmatpush2.msra.mxu0 0.0
      %734 = vmatprep.subr.mxu0 0.0
      %735 = vmatpush2.msra.mxu0 0.0
      %736 = vmatprep.subr.mxu0 0.0
      %737 = vmatpush2.msra.mxu0 0.0
      %738 = vmatprep.subr.mxu0 0.0
      %739 = vmatpush2.msra.mxu0 0.0
      %740 = vmatprep.subr.mxu0 0.0
      %741 = vmatpush2.msra.mxu0 0.0
      %742 = vmatprep.subr.mxu0 0.0
      %743 = vmatpush2.msra.mxu0 0.0
      %744 = vmatprep.subr.mxu0 0.0
      %745 = vmatpush2.msra.mxu0 0.0
      %746 = vmatprep.subr.mxu0 0.0
      %747 = vmatpush2.msra.mxu0 0.0
      %748 = vmatprep.subr.mxu0 0.0
      %749 = vmatpush2.msra.mxu0 0.0
      %750 = vmatprep.subr.mxu0 0.0
      %751 = vmatpush2.msra.mxu0 0.0
      %752 = vmatprep.subr.mxu0 0.0
      %753 = vmatpush2.msra.mxu0 0.0
      %754 = vmatprep.subr.mxu0 0.0
      %755 = vmatpush2.msra.mxu0 0.0
      %756 = vmatprep.mubr.f32.mxu0 0.0
      %757 = vmatmul.mubr.f32.gmra.mxu0 %v674
      %v758 = vpop.f32.mrf.mxu0
      %v759 = vadd.f32 %v691, %v758
      %v760 = vpop.f32.mrf.mxu0
      %761 = vdwg.mxu0
      %vm762 = vcmask 16384
      %v763 = vsel %vm762, %v759, -inf
      %764 = vmax.xlane.f32.xlu0 %v763
      %v765 = vpop.xlane.xlu0 %764
      %v766 = vsub.f32 %v759, %v765
      %v767 = vmul.f32 %v766, 1.442695
      %v768 = vpow.pop %v767
      %v769 = vsel %vm762, %v768, 0.0
      %770 = vadd.xlane.f32.xlu0 %v769
      %v771 = vpop.xlane.xlu0 %770
      %v772 = vlog2.pop %v771
      %v773 = vmul.f32 %v772, 0.6931472
      %v774 = vsub.f32 %v766, %v773
      %775 = vst.msk [vmem:[#allocation3] sm:$0x1] %vm762, %v774
    $region37: #{ic_model_forward.5} parent=1 // pred_fallthru
      _
    // Predicated region
    $region38: #{ic_model_forward.5} parent=1 // pred_check
      _
    $region39: #{ic_model_forward.5} parent=1 // pred_check_branch
      %777 = sbr.rel (0) target = $region41
    $region40: #{ic_model_forward.5} parent=1 // pred_region
      %s779 = ssub.s32 16, 16
      %780 = vsyncadd [#allocation4], %s779
      %s782 = sshll.u32 [#allocation3], 4
      %s783 = int_to_ptr.vmem [resolvable:$true] %s782
      %785 = dma.vmem_to_hbm [thread:$0]  %s783, 16, %s7, [#allocation4]
    $region41: #{ic_model_forward.5} parent=1 // pred_fallthru
      _
    // Predicated region
    $region42: #{ic_model_forward.5} parent=1 // pred_check
      _
    $region43: #{ic_model_forward.5} parent=1 // pred_check_branch
      %787 = sbr.rel (0) target = $region45
    $region44: #{ic_model_forward.5} parent=1 // pred_region
      %788 = dma.done [#allocation4], 16
    $region45: #{ic_model_forward.5} parent=1 // pred_fallthru
      _
    %789 = vsyncpa [#allocation4], 1

</llo_original>
